<compile_context>
chip_gen: v7x
topology: tpu7x:2x2x1
jax: 0.10.0
libtpu: 0.0.40
codegen_flags: <defaults>
</compile_context>

<pallas_src>
import functools
import math

import jax
import jax.numpy as jnp
from jax.experimental import pallas as pl
from jax.experimental.pallas import tpu as pltpu


# ----------------------------------------------------------------------------
# In-kernel helpers (operate on f32 values already loaded from refs)
# ----------------------------------------------------------------------------

def _ln_rows(x, g, b, eps):
    """Affine LayerNorm over the last (lane) axis. x: (M, H), g/b: (1, H)."""
    mean = jnp.mean(x, axis=-1, keepdims=True)
    xc = x - mean
    var = jnp.mean(xc * xc, axis=-1, keepdims=True)
    return xc * jax.lax.rsqrt(var + eps) * g + b


def _gelu_new(x):
    c = math.sqrt(2.0 / math.pi)
    return 0.5 * x * (1.0 + jnp.tanh(c * (x + 0.044715 * x * x * x)))


# ----------------------------------------------------------------------------
# Pallas kernels
# ----------------------------------------------------------------------------

def _linear_bias_kernel(x_ref, w_ref, b_ref, o_ref):
    acc = jnp.dot(x_ref[...], w_ref[...], preferred_element_type=jnp.float32)
    o_ref[...] = (acc + b_ref[...]).astype(o_ref.dtype)


def _linear_nobias_kernel(x_ref, w_ref, o_ref):
    acc = jnp.dot(x_ref[...], w_ref[...], preferred_element_type=jnp.float32)
    o_ref[...] = acc.astype(o_ref.dtype)


def _gpt2_block_kernel(h_ref, ln1g_ref, ln1b_ref, wqkv_ref, bqkv_ref,
                       wo_ref, bo_ref, ln2g_ref, ln2b_ref,
                       wfc_ref, bfc_ref, wproj_ref, bproj_ref,
                       o_ref, *, num_heads, ln_eps):
    """One full GPT-2 block for one batch element, entirely in VMEM.

    LN1 -> QKV matmul -> causal MHA -> out-proj (+residual) ->
    LN2 -> FC matmul (+GELU) -> proj (+residual)
    """
    h = h_ref[0].astype(jnp.float32)                         # (S, H)
    S, H = h.shape
    Dh = H // num_heads
    scale = 1.0 / math.sqrt(Dh)

    # ---- attention sub-block: LN1 fused into QKV prologue -------------------
    x = _ln_rows(h, ln1g_ref[...], ln1b_ref[...], ln_eps)
    qkv = jnp.dot(x, wqkv_ref[...], preferred_element_type=jnp.float32)
    qkv = qkv + bqkv_ref[...]                                # (S, 3H)
    q, k, v = qkv[:, :H], qkv[:, H:2 * H], qkv[:, 2 * H:]

    row = jax.lax.broadcasted_iota(jnp.int32, (S, S), 0)
    col = jax.lax.broadcasted_iota(jnp.int32, (S, S), 1)
    causal = row >= col

    heads = []
    for hd in range(num_heads):                              # static unroll (nH small)
        lo, hi = hd * Dh, (hd + 1) * Dh
        qh, kh, vh = q[:, lo:hi], k[:, lo:hi], v[:, lo:hi]   # (S, Dh) VMEM values
        s = jax.lax.dot_general(qh, kh, (((1,), (1,)), ((), ())),
                                preferred_element_type=jnp.float32) * scale
        s = jnp.where(causal, s, -1e30)                      # causal mask (f32)
        m = jnp.max(s, axis=-1, keepdims=True)
        p = jnp.exp(s - m)
        p = p * pl.reciprocal(jnp.sum(p, axis=-1, keepdims=True), approx=True)
        heads.append(jnp.dot(p, vh, preferred_element_type=jnp.float32))
    attn = jnp.concatenate(heads, axis=-1)                   # (S, H), lane-dense

    # out-projection with the residual add fused into the epilogue
    attn_out = jnp.dot(attn, wo_ref[...], preferred_element_type=jnp.float32)
    h1 = h + attn_out + bo_ref[...]

    # ---- MLP sub-block: LN2 fused into FC prologue, GELU in the epilogue ----
    x2 = _ln_rows(h1, ln2g_ref[...], ln2b_ref[...], ln_eps)
    fc = jnp.dot(x2, wfc_ref[...], preferred_element_type=jnp.float32)
    fc = _gelu_new(fc + bfc_ref[...])
    mlp = jnp.dot(fc, wproj_ref[...], preferred_element_type=jnp.float32)
    o_ref[0] = (h1 + mlp + bproj_ref[...]).astype(o_ref.dtype)


def _head_kernel(h_ref, lnfg_ref, lnfb_ref, whead_ref, o_ref, *, ln_eps):
    """final LayerNorm -> folded (lm_head @ alphabet) matmul -> global LayerNorm."""
    h = h_ref[0].astype(jnp.float32)                         # (S, H)
    x = _ln_rows(h, lnfg_ref[...], lnfb_ref[...], ln_eps)
    xa = jnp.dot(x, whead_ref[...], preferred_element_type=jnp.float32)   # (S, A)
    # F.layer_norm(x, x.size()[1:]): normalize jointly over (seq, alphabet)
    mean = jnp.mean(xa, axis=(0, 1), keepdims=True)
    xc = xa - mean
    var = jnp.mean(xc * xc, axis=(0, 1), keepdims=True)
    o_ref[0] = (xc * jax.lax.rsqrt(var + 1e-5)).astype(o_ref.dtype)


# ----------------------------------------------------------------------------
# Pallas wrappers
# ----------------------------------------------------------------------------

def _round_up(x, m):
    return -(-x // m) * m


def pallas_linear(x, w, b=None):
    """x: (M, K) @ w: (K, N) [+ b] -> (M, N). Lane-dense output tiles."""
    M, K = x.shape
    Kw, N = w.shape
    assert K == Kw
    tn = 256 if N % 256 == 0 else (128 if N % 128 == 0 else N)
    tm = min(_round_up(M, 8), 256)
    Mp = _round_up(M, tm)
    if Mp != M:
        x = jnp.pad(x, ((0, Mp - M), (0, 0)))

    in_specs = [pl.BlockSpec((tm, K), lambda i, j: (i, 0)),
                pl.BlockSpec((K, tn), lambda i, j: (0, j))]
    args = [x, w]
    if b is not None:
        in_specs.append(pl.BlockSpec((1, tn), lambda i, j: (0, j)))
        args.append(b.reshape(1, N).astype(jnp.float32))
        kernel = _linear_bias_kernel
    else:
        kernel = _linear_nobias_kernel

    out = pl.pallas_call(
        kernel,
        out_shape=jax.ShapeDtypeStruct((Mp, N), x.dtype),
        grid=(Mp // tm, N // tn),
        in_specs=in_specs,
        out_specs=pl.BlockSpec((tm, tn), lambda i, j: (i, j)),
        compiler_params=pltpu.CompilerParams(
            dimension_semantics=("parallel", "parallel")),
    )(*args)
    return out[:M]


def pallas_gpt2_block(h, p, num_heads, ln_eps=1e-5):
    """One fused GPT-2 block. h: (B, S, H) -> (B, S, H). Grid over batch."""
    B, S, H = h.shape

    def row(v):
        return v.reshape(1, -1).astype(jnp.float32)

    def wspec(shape):
        return pl.BlockSpec(shape, lambda b: (0, 0))

    hspec = pl.BlockSpec((1, S, H), lambda b: (b, 0, 0))

    return pl.pallas_call(
        functools.partial(_gpt2_block_kernel, num_heads=num_heads, ln_eps=ln_eps),
        out_shape=jax.ShapeDtypeStruct((B, S, H), h.dtype),
        grid=(B,),
        in_specs=[
            hspec,
            wspec((1, H)), wspec((1, H)),             # ln1 gamma/beta
            wspec((H, 3 * H)), wspec((1, 3 * H)),     # qkv
            wspec((H, H)), wspec((1, H)),             # out proj
            wspec((1, H)), wspec((1, H)),             # ln2 gamma/beta
            wspec((H, 4 * H)), wspec((1, 4 * H)),     # fc
            wspec((4 * H, H)), wspec((1, H)),         # proj
        ],
        out_specs=hspec,
        compiler_params=pltpu.CompilerParams(dimension_semantics=("parallel",)),
    )(h,
      row(p["ln1_g"]), row(p["ln1_b"]),
      p["w_qkv"], row(p["b_qkv"]),
      p["w_o"], row(p["b_o"]),
      row(p["ln2_g"]), row(p["ln2_b"]),
      p["w_fc"], row(p["b_fc"]),
      p["w_proj"], row(p["b_proj"]))


def pallas_head(h, lnf_g, lnf_b, w_head, ln_eps=1e-5):
    """Fused tail: final LN -> folded head matmul -> global LN. Grid over batch."""
    B, S, H = h.shape
    A = w_head.shape[1]
    return pl.pallas_call(
        functools.partial(_head_kernel, ln_eps=ln_eps),
        out_shape=jax.ShapeDtypeStruct((B, S, A), h.dtype),
        grid=(B,),
        in_specs=[
            pl.BlockSpec((1, S, H), lambda b: (b, 0, 0)),
            pl.BlockSpec((1, H), lambda b: (0, 0)),
            pl.BlockSpec((1, H), lambda b: (0, 0)),
            pl.BlockSpec((H, A), lambda b: (0, 0)),
        ],
        out_specs=pl.BlockSpec((1, S, A), lambda b: (b, 0, 0)),
        compiler_params=pltpu.CompilerParams(dimension_semantics=("parallel",)),
    )(h, lnf_g.reshape(1, H).astype(jnp.float32),
      lnf_b.reshape(1, H).astype(jnp.float32), w_head)


# ----------------------------------------------------------------------------
# Model forward (Pallas-backed)
# ----------------------------------------------------------------------------

def _patchify(pixel_values, ph, pw):
    """(B, C, H, W) -> (B, num_patches, C*ph*pw) — equivalent to the ViT patch conv."""
    B, C, Hh, Ww = pixel_values.shape
    nh, nw = Hh // ph, Ww // pw
    x = pixel_values.reshape(B, C, nh, ph, nw, pw)
    x = jnp.transpose(x, (0, 2, 4, 1, 3, 5))          # (B, nh, nw, C, ph, pw)
    return x.reshape(B, nh * nw, C * ph * pw)


def dtrocr_forward(pixel_values, input_ids, params, config):
    B = pixel_values.shape[0]
    H = config["hidden_size"]
    ph, pw = config["patch_size"]

    # ViT patch embedding: patchify + Pallas linear projection (bias fused).
    patches = _patchify(pixel_values, ph, pw)                    # (B, nP, C*ph*pw)
    nP = patches.shape[1]
    patch_emb = pallas_linear(patches.reshape(B * nP, -1),
                              params["w_patch"], params["b_patch"]).reshape(B, nP, H)

    # Token / positional embedding gathers stay in the wrapper (tiny).
    tok_emb = jnp.take(params["wte"], input_ids, axis=0)         # (B, T, H)
    h = jnp.concatenate([patch_emb, tok_emb], axis=1)            # (B, S, H)
    S = h.shape[1]
    h = h + params["wpe"][:S][None]                              # position_ids = arange(S)
    # attn_pdrop dropout: identity in eval mode.

    for p in params["layers"]:
        h = pallas_gpt2_block(h, p, config["num_heads"])

    # Head fold: both head linears are bias-free, so
    # (h @ w_lm) @ w_alpha == h @ (w_lm @ w_alpha).  Avoids the (B*S, V) logits.
    w_head = jnp.dot(params["w_lm"], params["w_alpha"],
                     precision=jax.lax.Precision.HIGHEST)        # (H, A)
    return pallas_head(h, params["lnf_g"], params["lnf_b"], w_head)


# ----------------------------------------------------------------------------
# Pure-JAX reference (same math, no Pallas, unfolded head)
# ----------------------------------------------------------------------------

def _reference_forward(pixel_values, input_ids, params, config):
    hp = jax.lax.Precision.HIGHEST

    def linear(x, w, b=None):
        y = jnp.dot(x, w, precision=hp)
        return y if b is None else y + b

    def ln(x, g, b, eps=1e-5):
        mean = jnp.mean(x, axis=-1, keepdims=True)
        var = jnp.var(x, axis=-1, keepdims=True)
        return (x - mean) / jnp.sqrt(var + eps) * g + b

    def gelu_new(x):
        c = math.sqrt(2.0 / math.pi)
        return 0.5 * x * (1.0 + jnp.tanh(c * (x + 0.044715 * x ** 3)))

    B = pixel_values.shape[0]
    H = config["hidden_size"]
    nH = config["num_heads"]
    ph, pw = config["patch_size"]
    Dh = H // nH

    patches = _patchify(pixel_values, ph, pw)
    patch_emb = linear(patches, params["w_patch"], params["b_patch"])
    tok_emb = params["wte"][input_ids]
    h = jnp.concatenate([patch_emb, tok_emb], axis=1)
    S = h.shape[1]
    h = h + params["wpe"][:S][None]

    for p in params["layers"]:
        x = ln(h, p["ln1_g"], p["ln1_b"])
        qkv = linear(x, p["w_qkv"], p["b_qkv"]).reshape(B, S, 3, nH, Dh)
        q = jnp.transpose(qkv[:, :, 0], (0, 2, 1, 3))
        k = jnp.transpose(qkv[:, :, 1], (0, 2, 1, 3))
        v = jnp.transpose(qkv[:, :, 2], (0, 2, 1, 3))
        s = jnp.einsum("bhqd,bhkd->bhqk", q, k, precision=hp) / math.sqrt(Dh)
        mask = jnp.tril(jnp.ones((S, S), bool))
        s = jnp.where(mask, s, -1e30)
        pattn = jax.nn.softmax(s, axis=-1)
        a = jnp.einsum("bhqk,bhkd->bhqd", pattn, v, precision=hp)
        a = jnp.transpose(a, (0, 2, 1, 3)).reshape(B, S, H)
        h = h + linear(a, p["w_o"], p["b_o"])
        x2 = ln(h, p["ln2_g"], p["ln2_b"])
        h = h + linear(gelu_new(linear(x2, p["w_fc"], p["b_fc"])),
                       p["w_proj"], p["b_proj"])

    h = ln(h, params["lnf_g"], params["lnf_b"])
    logits = linear(h, params["w_lm"])
    xa = linear(logits, params["w_alpha"])
    mean = jnp.mean(xa, axis=(1, 2), keepdims=True)
    var = jnp.var(xa, axis=(1, 2), keepdims=True)
    return (xa - mean) / jnp.sqrt(var + 1e-5)


# ----------------------------------------------------------------------------
# Driver
# ----------------------------------------------------------------------------

if __name__ == "__main__":
    config = {
        "hidden_size": 128,          # lane-dense hidden
        "num_heads": 4,
        "num_layers": 2,
        "vocab_size": 256,
        "alphabet_size": 128,
        "image_size": (32, 32),
        "patch_size": (8, 8),
        "num_channels": 3,
        "max_position_embeddings": 64,
    }
    B, T = 2, 16
    H = config["hidden_size"]
    V = config["vocab_size"]
    A = config["alphabet_size"]
    C = config["num_channels"]
    ph, pw = config["patch_size"]
    ih, iw = config["image_size"]

    key = jax.random.PRNGKey(0)
    keys = iter(jax.random.split(key, 64))

    def nrm(shape, scale=0.02):
        return scale * jax.random.normal(next(keys), shape, jnp.float32)

    pixel_values = jax.random.normal(next(keys), (B, C, ih, iw), jnp.float32)
    input_ids = jax.random.randint(next(keys), (B, T), 0, V)

    layers = []
    for _ in range(config["num_layers"]):
        layers.append({
            "ln1_g": 1.0 + nrm((H,), 0.1), "ln1_b": nrm((H,), 0.1),
            "w_qkv": nrm((H, 3 * H)), "b_qkv": nrm((3 * H,)),
            "w_o": nrm((H, H)), "b_o": nrm((H,)),
            "ln2_g": 1.0 + nrm((H,), 0.1), "ln2_b": nrm((H,), 0.1),
            "w_fc": nrm((H, 4 * H)), "b_fc": nrm((4 * H,)),
            "w_proj": nrm((4 * H, H)), "b_proj": nrm((H,)),
        })

    params = {
        "w_patch": nrm((C * ph * pw, H)), "b_patch": nrm((H,)),
        "wte": nrm((V, H)),
        "wpe": nrm((config["max_position_embeddings"], H)),
        "layers": layers,
        "lnf_g": 1.0 + nrm((H,), 0.1), "lnf_b": nrm((H,), 0.1),
        "w_lm": nrm((H, V)),        # language_model_head, no bias
        "w_alpha": nrm((V, A)),     # alphabet_linear, no bias
    }

    fwd = jax.jit(lambda pv, ids, prm: dtrocr_forward(pv, ids, prm, config))
    out = jax.block_until_ready(fwd(pixel_values, input_ids, params))

    nP = (ih // ph) * (iw // pw)
    assert out.shape == (B, nP + T, A), out.shape

    ref = _reference_forward(pixel_values, input_ids, params, config)
    max_err = float(jnp.max(jnp.abs(out - ref)))
    assert jnp.allclose(out, ref, atol=2e-2, rtol=2e-2), f"mismatch vs reference: {max_err}"

    print("KERNEL_OK")
</pallas_src>

<mosaic_0001>
module attributes {stable_mosaic.version = 11 : i64} {
  func.func @_linear_bias_kernel(%arg0: i32, %arg1: i32, %arg2: memref<32x192xf32, #tpu.memory_space<vmem>>, %arg3: memref<192x128xf32, #tpu.memory_space<vmem>>, %arg4: memref<1x128xf32, #tpu.memory_space<vmem>>, %arg5: memref<32x128xf32, #tpu.memory_space<vmem>>) attributes {dimension_semantics = [#tpu.dimension_semantics<parallel>, #tpu.dimension_semantics<parallel>], iteration_bounds = array<i64: 1, 1>, scalar_prefetch = 0 : i64, scratch_operands = 0 : i64, tpu.core_type = #tpu.core_type<tc>, window_params = [{transform_indices = @transform_0, window_bounds = array<i64: 32, 192>}, {transform_indices = @transform_1, window_bounds = array<i64: 192, 128>}, {transform_indices = @transform_2, window_bounds = array<i64: 1, 128>}, {transform_indices = @transform_3, window_bounds = array<i64: 32, 128>}]} {
    %c0 = arith.constant 0 : index
    %c0_0 = arith.constant 0 : index
    %0 = vector.load %arg2[%c0, %c0_0] : memref<32x192xf32, #tpu.memory_space<vmem>>, vector<32x192xf32>
    %c0_1 = arith.constant 0 : index
    %c0_2 = arith.constant 0 : index
    %1 = vector.load %arg3[%c0_1, %c0_2] : memref<192x128xf32, #tpu.memory_space<vmem>>, vector<192x128xf32>
    %cst = arith.constant dense<0.000000e+00> : vector<32x128xf32>
    %2 = tpu.matmul %0, %1, %cst {dimension_numbers = #tpu.dot_dimension_numbers<[1], [0], [0], [1], [0, 0, 1, 1], [], []>} : vector<32x192xf32>, vector<192x128xf32>, vector<32x128xf32> -> vector<32x128xf32>
    %c0_3 = arith.constant 0 : index
    %c0_4 = arith.constant 0 : index
    %3 = vector.load %arg4[%c0_3, %c0_4] : memref<1x128xf32, #tpu.memory_space<vmem>>, vector<1x128xf32>
    %4 = vector.broadcast %3 : vector<1x128xf32> to vector<32x128xf32>
    %5 = arith.addf %2, %4 : vector<32x128xf32>
    %c0_5 = arith.constant 0 : index
    %c0_6 = arith.constant 0 : index
    %6 = vector.load %arg5[%c0_5, %c0_6] : memref<32x128xf32, #tpu.memory_space<vmem>>, vector<32x128xf32>
    tpu.vector_store %arg5[%c0_5, %c0_6], %5 {strides = array<i32>} : memref<32x128xf32, #tpu.memory_space<vmem>>, vector<32x128xf32>,
    return
  }
  func.func @transform_0(%arg0: i32, %arg1: i32) -> (i32, i32) {
    %c0_i32 = arith.constant 0 : i32
    %c0_i32_0 = arith.constant 0 : i32
    return %arg0, %c0_i32 : i32, i32
  }
  func.func @transform_1(%arg0: i32, %arg1: i32) -> (i32, i32) {
    %c0_i32 = arith.constant 0 : i32
    %c0_i32_0 = arith.constant 0 : i32
    return %c0_i32, %arg1 : i32, i32
  }
  func.func @transform_2(%arg0: i32, %arg1: i32) -> (i32, i32) {
    %c0_i32 = arith.constant 0 : i32
    %c0_i32_0 = arith.constant 0 : i32
    return %c0_i32, %arg1 : i32, i32
  }
  func.func @transform_3(%arg0: i32, %arg1: i32) -> (i32, i32) {
    %c0_i32 = arith.constant 0 : i32
    return %arg0, %arg1 : i32, i32
  }
}

module attributes {stable_mosaic.version = 11 : i64} {
  func.func @_head_kernel(%arg0: i32, %arg1: memref<1x32x128xf32, #tpu.memory_space<vmem>>, %arg2: memref<1x128xf32, #tpu.memory_space<vmem>>, %arg3: memref<1x128xf32, #tpu.memory_space<vmem>>, %arg4: memref<128x128xf32, #tpu.memory_space<vmem>>, %arg5: memref<1x32x128xf32, #tpu.memory_space<vmem>>) attributes {dimension_semantics = [#tpu.dimension_semantics<parallel>], iteration_bounds = array<i64: 2>, scalar_prefetch = 0 : i64, scratch_operands = 0 : i64, tpu.core_type = #tpu.core_type<tc>, window_params = [{transform_indices = @transform_0, window_bounds = array<i64: 1, 32, 128>}, {pipeline_mode = #tpu.pipeline_mode<synchronous>, transform_indices = @transform_1, window_bounds = array<i64: 1, 128>}, {pipeline_mode = #tpu.pipeline_mode<synchronous>, transform_indices = @transform_2, window_bounds = array<i64: 1, 128>}, {pipeline_mode = #tpu.pipeline_mode<synchronous>, transform_indices = @transform_3, window_bounds = array<i64: 128, 128>}, {transform_indices = @transform_4, window_bounds = array<i64: 1, 32, 128>}]} {
    %c0 = arith.constant 0 : index
    %c0_0 = arith.constant 0 : index
    %c0_1 = arith.constant 0 : index
    %0 = vector.load %arg1[%c0, %c0_0, %c0_1] : memref<1x32x128xf32, #tpu.memory_space<vmem>>, vector<1x32x128xf32>
    %1 = vector.shape_cast %0 : vector<1x32x128xf32> to vector<32x128xf32>
    %c0_2 = arith.constant 0 : index
    %c0_3 = arith.constant 0 : index
    %2 = vector.load %arg2[%c0_2, %c0_3] : memref<1x128xf32, #tpu.memory_space<vmem>>, vector<1x128xf32>
    %c0_4 = arith.constant 0 : index
    %c0_5 = arith.constant 0 : index
    %3 = vector.load %arg3[%c0_4, %c0_5] : memref<1x128xf32, #tpu.memory_space<vmem>>, vector<1x128xf32>
    %cst = arith.constant dense<0.000000e+00> : vector<32xf32>
    %4 = vector.multi_reduction <add>, %1, %cst [1] : vector<32x128xf32> to vector<32xf32>
    %5 = vector.shape_cast %4 : vector<32xf32> to vector<32x1xf32>
    %cst_6 = arith.constant 1.280000e+02 : f32
    %6 = vector.broadcast %cst_6 : f32 to vector<32x1xf32>
    %7 = arith.divf %5, %6 : vector<32x1xf32>
    %8 = vector.broadcast %7 : vector<32x1xf32> to vector<32x128xf32>
    %9 = arith.subf %1, %8 : vector<32x128xf32>
    %10 = arith.mulf %9, %9 : vector<32x128xf32>
    %cst_7 = arith.constant dense<0.000000e+00> : vector<32xf32>
    %11 = vector.multi_reduction <add>, %10, %cst_7 [1] : vector<32x128xf32> to vector<32xf32>
    %12 = vector.shape_cast %11 : vector<32xf32> to vector<32x1xf32>
    %cst_8 = arith.constant 1.280000e+02 : f32
    %13 = vector.broadcast %cst_8 : f32 to vector<32x1xf32>
    %14 = arith.divf %12, %13 : vector<32x1xf32>
    %cst_9 = arith.constant 9.99999974E-6 : f32
    %15 = vector.broadcast %cst_9 : f32 to vector<32x1xf32>
    %16 = arith.addf %14, %15 : vector<32x1xf32>
    %17 = math.rsqrt %16 : vector<32x1xf32>
    %18 = vector.broadcast %17 : vector<32x1xf32> to vector<32x128xf32>
    %19 = arith.mulf %9, %18 : vector<32x128xf32>
    %20 = vector.broadcast %2 : vector<1x128xf32> to vector<32x128xf32>
    %21 = arith.mulf %19, %20 : vector<32x128xf32>
    %22 = vector.broadcast %3 : vector<1x128xf32> to vector<32x128xf32>
    %23 = arith.addf %21, %22 : vector<32x128xf32>
    %c0_10 = arith.constant 0 : index
    %c0_11 = arith.constant 0 : index
    %24 = vector.load %arg4[%c0_10, %c0_11] : memref<128x128xf32, #tpu.memory_space<vmem>>, vector<128x128xf32>
    %cst_12 = arith.constant dense<0.000000e+00> : vector<32x128xf32>
    %25 = tpu.matmul %23, %24, %cst_12 {dimension_numbers = #tpu.dot_dimension_numbers<[1], [0], [0], [1], [0, 0, 1, 1], [], []>} : vector<32x128xf32>, vector<128x128xf32>, vector<32x128xf32> -> vector<32x128xf32>
    %26 = vector.shape_cast %25 : vector<32x128xf32> to vector<1x32x128xf32>
    %cst_13 = arith.constant dense<0.000000e+00> : vector<1xf32>
    %27 = vector.multi_reduction <add>, %26, %cst_13 [1, 2] : vector<1x32x128xf32> to vector<1xf32>
    %28 = vector.shape_cast %27 : vector<1xf32> to vector<1x1x1xf32>
    %29 = vector.extract %28[0, 0, 0] : f32 from vector<1x1x1xf32>
    %30 = vector.broadcast %29 : f32 to vector<1x1xf32>
    %cst_14 = arith.constant 4.096000e+03 : f32
    %31 = vector.broadcast %cst_14 : f32 to vector<1x1xf32>
    %32 = arith.divf %30, %31 : vector<1x1xf32>
    %33 = vector.broadcast %32 : vector<1x1xf32> to vector<32x128xf32>
    %34 = arith.subf %25, %33 : vector<32x128xf32>
    %35 = arith.mulf %34, %34 : vector<32x128xf32>
    %36 = vector.shape_cast %35 : vector<32x128xf32> to vector<1x32x128xf32>
    %cst_15 = arith.constant dense<0.000000e+00> : vector<1xf32>
    %37 = vector.multi_reduction <add>, %36, %cst_15 [1, 2] : vector<1x32x128xf32> to vector<1xf32>
    %38 = vector.shape_cast %37 : vector<1xf32> to vector<1x1x1xf32>
    %39 = vector.extract %38[0, 0, 0] : f32 from vector<1x1x1xf32>
    %40 = vector.broadcast %39 : f32 to vector<1x1xf32>
    %cst_16 = arith.constant 4.096000e+03 : f32
    %41 = vector.broadcast %cst_16 : f32 to vector<1x1xf32>
    %42 = arith.divf %40, %41 : vector<1x1xf32>
    %cst_17 = arith.constant 9.99999974E-6 : f32
    %43 = vector.broadcast %cst_17 : f32 to vector<1x1xf32>
    %44 = arith.addf %42, %43 : vector<1x1xf32>
    %45 = math.rsqrt %44 : vector<1x1xf32>
    %46 = vector.broadcast %45 : vector<1x1xf32> to vector<32x128xf32>
    %47 = arith.mulf %34, %46 : vector<32x128xf32>
    %c0_18 = arith.constant 0 : index
    %c0_19 = arith.constant 0 : index
    %c0_20 = arith.constant 0 : index
    %48 = vector.load %arg5[%c0_18, %c0_19, %c0_20] : memref<1x32x128xf32, #tpu.memory_space<vmem>>, vector<1x32x128xf32>
    %49 = vector.shape_cast %48 : vector<1x32x128xf32> to vector<32x128xf32>
    %50 = vector.shape_cast %47 : vector<32x128xf32> to vector<1x32x128xf32>
    tpu.vector_store %arg5[%c0_18, %c0_19, %c0_20], %50 {strides = array<i32>} : memref<1x32x128xf32, #tpu.memory_space<vmem>>, vector<1x32x128xf32>,
    return
  }
  func.func @transform_0(%arg0: i32) -> (i32, i32, i32) {
    %c0_i32 = arith.constant 0 : i32
    %c0_i32_0 = arith.constant 0 : i32
    %c0_i32_1 = arith.constant 0 : i32
    return %arg0, %c0_i32, %c0_i32_0 : i32, i32, i32
  }
  func.func @transform_1(%arg0: i32) -> (i32, i32) {
    %c0_i32 = arith.constant 0 : i32
    %c0_i32_0 = arith.constant 0 : i32
    %c0_i32_1 = arith.constant 0 : i32
    return %c0_i32, %c0_i32_0 : i32, i32
  }
  func.func @transform_2(%arg0: i32) -> (i32, i32) {
    %c0_i32 = arith.constant 0 : i32
    %c0_i32_0 = arith.constant 0 : i32
    %c0_i32_1 = arith.constant 0 : i32
    return %c0_i32, %c0_i32_0 : i32, i32
  }
  func.func @transform_3(%arg0: i32) -> (i32, i32) {
    %c0_i32 = arith.constant 0 : i32
    %c0_i32_0 = arith.constant 0 : i32
    %c0_i32_1 = arith.constant 0 : i32
    return %c0_i32, %c0_i32_0 : i32, i32
  }
  func.func @transform_4(%arg0: i32) -> (i32, i32, i32) {
    %c0_i32 = arith.constant 0 : i32
    %c0_i32_0 = arith.constant 0 : i32
    %c0_i32_1 = arith.constant 0 : i32
    return %arg0, %c0_i32, %c0_i32_0 : i32, i32, i32
  }
}

module attributes {stable_mosaic.version = 11 : i64} {
  func.func @_gpt2_block_kernel(%arg0: i32, %arg1: memref<1x32x128xf32, #tpu.memory_space<vmem>>, %arg2: memref<1x128xf32, #tpu.memory_space<vmem>>, %arg3: memref<1x128xf32, #tpu.memory_space<vmem>>, %arg4: memref<128x384xf32, #tpu.memory_space<vmem>>, %arg5: memref<1x384xf32, #tpu.memory_space<vmem>>, %arg6: memref<128x128xf32, #tpu.memory_space<vmem>>, %arg7: memref<1x128xf32, #tpu.memory_space<vmem>>, %arg8: memref<1x128xf32, #tpu.memory_space<vmem>>, %arg9: memref<1x128xf32, #tpu.memory_space<vmem>>, %arg10: memref<128x512xf32, #tpu.memory_space<vmem>>, %arg11: memref<1x512xf32, #tpu.memory_space<vmem>>, %arg12: memref<512x128xf32, #tpu.memory_space<vmem>>, %arg13: memref<1x128xf32, #tpu.memory_space<vmem>>, %arg14: memref<1x32x128xf32, #tpu.memory_space<vmem>>) attributes {dimension_semantics = [#tpu.dimension_semantics<parallel>], iteration_bounds = array<i64: 2>, scalar_prefetch = 0 : i64, scratch_operands = 0 : i64, tpu.core_type = #tpu.core_type<tc>, window_params = [{transform_indices = @transform_0, window_bounds = array<i64: 1, 32, 128>}, {pipeline_mode = #tpu.pipeline_mode<synchronous>, transform_indices = @transform_1, window_bounds = array<i64: 1, 128>}, {pipeline_mode = #tpu.pipeline_mode<synchronous>, transform_indices = @transform_2, window_bounds = array<i64: 1, 128>}, {pipeline_mode = #tpu.pipeline_mode<synchronous>, transform_indices = @transform_3, window_bounds = array<i64: 128, 384>}, {pipeline_mode = #tpu.pipeline_mode<synchronous>, transform_indices = @transform_4, window_bounds = array<i64: 1, 384>}, {pipeline_mode = #tpu.pipeline_mode<synchronous>, transform_indices = @transform_5, window_bounds = array<i64: 128, 128>}, {pipeline_mode = #tpu.pipeline_mode<synchronous>, transform_indices = @transform_6, window_bounds = array<i64: 1, 128>}, {pipeline_mode = #tpu.pipeline_mode<synchronous>, transform_indices = @transform_7, window_bounds = array<i64: 1, 128>}, {pipeline_mode = #tpu.pipeline_mode<synchronous>, transform_indices = @transform_8, window_bounds = array<i64: 1, 128>}, {pipeline_mode = #tpu.pipeline_mode<synchronous>, transform_indices = @transform_9, window_bounds = array<i64: 128, 512>}, {pipeline_mode = #tpu.pipeline_mode<synchronous>, transform_indices = @transform_10, window_bounds = array<i64: 1, 512>}, {pipeline_mode = #tpu.pipeline_mode<synchronous>, transform_indices = @transform_11, window_bounds = array<i64: 512, 128>}, {pipeline_mode = #tpu.pipeline_mode<synchronous>, transform_indices = @transform_12, window_bounds = array<i64: 1, 128>}, {transform_indices = @transform_13, window_bounds = array<i64: 1, 32, 128>}]} {
    %c0 = arith.constant 0 : index
    %c0_0 = arith.constant 0 : index
    %c0_1 = arith.constant 0 : index
    %0 = vector.load %arg1[%c0, %c0_0, %c0_1] : memref<1x32x128xf32, #tpu.memory_space<vmem>>, vector<1x32x128xf32>
    %1 = vector.shape_cast %0 : vector<1x32x128xf32> to vector<32x128xf32>
    %c0_2 = arith.constant 0 : index
    %c0_3 = arith.constant 0 : index
    %2 = vector.load %arg2[%c0_2, %c0_3] : memref<1x128xf32, #tpu.memory_space<vmem>>, vector<1x128xf32>
    %c0_4 = arith.constant 0 : index
    %c0_5 = arith.constant 0 : index
    %3 = vector.load %arg3[%c0_4, %c0_5] : memref<1x128xf32, #tpu.memory_space<vmem>>, vector<1x128xf32>
    %cst = arith.constant dense<0.000000e+00> : vector<32xf32>
    %4 = vector.multi_reduction <add>, %1, %cst [1] : vector<32x128xf32> to vector<32xf32>
    %5 = vector.shape_cast %4 : vector<32xf32> to vector<32x1xf32>
    %cst_6 = arith.constant 1.280000e+02 : f32
    %6 = vector.broadcast %cst_6 : f32 to vector<32x1xf32>
    %7 = arith.divf %5, %6 : vector<32x1xf32>
    %8 = vector.broadcast %7 : vector<32x1xf32> to vector<32x128xf32>
    %9 = arith.subf %1, %8 : vector<32x128xf32>
    %10 = arith.mulf %9, %9 : vector<32x128xf32>
    %cst_7 = arith.constant dense<0.000000e+00> : vector<32xf32>
    %11 = vector.multi_reduction <add>, %10, %cst_7 [1] : vector<32x128xf32> to vector<32xf32>
    %12 = vector.shape_cast %11 : vector<32xf32> to vector<32x1xf32>
    %cst_8 = arith.constant 1.280000e+02 : f32
    %13 = vector.broadcast %cst_8 : f32 to vector<32x1xf32>
    %14 = arith.divf %12, %13 : vector<32x1xf32>
    %cst_9 = arith.constant 9.99999974E-6 : f32
    %15 = vector.broadcast %cst_9 : f32 to vector<32x1xf32>
    %16 = arith.addf %14, %15 : vector<32x1xf32>
    %17 = math.rsqrt %16 : vector<32x1xf32>
    %18 = vector.broadcast %17 : vector<32x1xf32> to vector<32x128xf32>
    %19 = arith.mulf %9, %18 : vector<32x128xf32>
    %20 = vector.broadcast %2 : vector<1x128xf32> to vector<32x128xf32>
    %21 = arith.mulf %19, %20 : vector<32x128xf32>
    %22 = vector.broadcast %3 : vector<1x128xf32> to vector<32x128xf32>
    %23 = arith.addf %21, %22 : vector<32x128xf32>
    %c0_10 = arith.constant 0 : index
    %c0_11 = arith.constant 0 : index
    %24 = vector.load %arg4[%c0_10, %c0_11] : memref<128x384xf32, #tpu.memory_space<vmem>>, vector<128x384xf32>
    %cst_12 = arith.constant dense<0.000000e+00> : vector<32x384xf32>
    %25 = tpu.matmul %23, %24, %cst_12 {dimension_numbers = #tpu.dot_dimension_numbers<[1], [0], [0], [1], [0, 0, 1, 1], [], []>} : vector<32x128xf32>, vector<128x384xf32>, vector<32x384xf32> -> vector<32x384xf32>
    %c0_13 = arith.constant 0 : index
    %c0_14 = arith.constant 0 : index
    %26 = vector.load %arg5[%c0_13, %c0_14] : memref<1x384xf32, #tpu.memory_space<vmem>>, vector<1x384xf32>
    %27 = vector.broadcast %26 : vector<1x384xf32> to vector<32x384xf32>
    %28 = arith.addf %25, %27 : vector<32x384xf32>
    %29 = vector.extract_strided_slice %28 {offsets = [0, 0], sizes = [32, 128], strides = [1, 1]} : vector<32x384xf32> to vector<32x128xf32>
    %30 = vector.extract_strided_slice %28 {offsets = [0, 128], sizes = [32, 128], strides = [1, 1]} : vector<32x384xf32> to vector<32x128xf32>
    %31 = vector.extract_strided_slice %28 {offsets = [0, 256], sizes = [32, 128], strides = [1, 1]} : vector<32x384xf32> to vector<32x128xf32>
    %32 = tpu.iota {dimensions = array<i32: 0>} : vector<32x32xi32>
    %33 = tpu.iota {dimensions = array<i32: 1>} : vector<32x32xi32>
    %34 = arith.cmpi sge, %32, %33 : vector<32x32xi32>
    %35 = vector.extract_strided_slice %29 {offsets = [0, 0], sizes = [32, 32], strides = [1, 1]} : vector<32x128xf32> to vector<32x32xf32>
    %36 = vector.extract_strided_slice %30 {offsets = [0, 0], sizes = [32, 32], strides = [1, 1]} : vector<32x128xf32> to vector<32x32xf32>
    %37 = vector.extract_strided_slice %31 {offsets = [0, 0], sizes = [32, 32], strides = [1, 1]} : vector<32x128xf32> to vector<32x32xf32>
    %cst_15 = arith.constant dense<0.000000e+00> : vector<32x32xf32>
    %38 = tpu.matmul %35, %36, %cst_15 {dimension_numbers = #tpu.dot_dimension_numbers<[1], [1], [0], [0], [0, 0, 1, 0], [], []>} : vector<32x32xf32>, vector<32x32xf32>, vector<32x32xf32> -> vector<32x32xf32>
    %cst_16 = arith.constant 0.176776692 : f32
    %39 = vector.broadcast %cst_16 : f32 to vector<32x32xf32>
    %40 = arith.mulf %38, %39 : vector<32x32xf32>
    %cst_17 = arith.constant -1.000000e+30 : f32
    %41 = vector.broadcast %cst_17 : f32 to vector<32x32xf32>
    %42 = arith.select %34, %40, %41 : vector<32x32xi1>, vector<32x32xf32>
    %cst_18 = arith.constant dense<0xFF800000> : vector<32xf32>
    %43 = vector.multi_reduction <maximumf>, %42, %cst_18 [1] : vector<32x32xf32> to vector<32xf32>
    %44 = vector.shape_cast %43 : vector<32xf32> to vector<32x1xf32>
    %45 = vector.broadcast %44 : vector<32x1xf32> to vector<32x32xf32>
    %46 = arith.subf %42, %45 : vector<32x32xf32>
    %47 = math.exp %46 : vector<32x32xf32>
    %cst_19 = arith.constant dense<0.000000e+00> : vector<32xf32>
    %48 = vector.multi_reduction <add>, %47, %cst_19 [1] : vector<32x32xf32> to vector<32xf32>
    %49 = vector.shape_cast %48 : vector<32xf32> to vector<32x1xf32>
    %50 = tpu.reciprocal %49 {approx = true} : vector<32x1xf32> -> vector<32x1xf32>
    %51 = vector.broadcast %50 : vector<32x1xf32> to vector<32x32xf32>
    %52 = arith.mulf %47, %51 : vector<32x32xf32>
    %cst_20 = arith.constant dense<0.000000e+00> : vector<32x32xf32>
    %53 = tpu.matmul %52, %37, %cst_20 {dimension_numbers = #tpu.dot_dimension_numbers<[1], [0], [0], [1], [0, 0, 1, 1], [], []>} : vector<32x32xf32>, vector<32x32xf32>, vector<32x32xf32> -> vector<32x32xf32>
    %54 = vector.extract_strided_slice %29 {offsets = [0, 32], sizes = [32, 32], strides = [1, 1]} : vector<32x128xf32> to vector<32x32xf32>
    %55 = vector.extract_strided_slice %30 {offsets = [0, 32], sizes = [32, 32], strides = [1, 1]} : vector<32x128xf32> to vector<32x32xf32>
    %56 = vector.extract_strided_slice %31 {offsets = [0, 32], sizes = [32, 32], strides = [1, 1]} : vector<32x128xf32> to vector<32x32xf32>
    %cst_21 = arith.constant dense<0.000000e+00> : vector<32x32xf32>
    %57 = tpu.matmul %54, %55, %cst_21 {dimension_numbers = #tpu.dot_dimension_numbers<[1], [1], [0], [0], [0, 0, 1, 0], [], []>} : vector<32x32xf32>, vector<32x32xf32>, vector<32x32xf32> -> vector<32x32xf32>
    %cst_22 = arith.constant 0.176776692 : f32
    %58 = vector.broadcast %cst_22 : f32 to vector<32x32xf32>
    %59 = arith.mulf %57, %58 : vector<32x32xf32>
    %cst_23 = arith.constant -1.000000e+30 : f32
    %60 = vector.broadcast %cst_23 : f32 to vector<32x32xf32>
    %61 = arith.select %34, %59, %60 : vector<32x32xi1>, vector<32x32xf32>
    %cst_24 = arith.constant dense<0xFF800000> : vector<32xf32>
    %62 = vector.multi_reduction <maximumf>, %61, %cst_24 [1] : vector<32x32xf32> to vector<32xf32>
    %63 = vector.shape_cast %62 : vector<32xf32> to vector<32x1xf32>
    %64 = vector.broadcast %63 : vector<32x1xf32> to vector<32x32xf32>
    %65 = arith.subf %61, %64 : vector<32x32xf32>
    %66 = math.exp %65 : vector<32x32xf32>
    %cst_25 = arith.constant dense<0.000000e+00> : vector<32xf32>
    %67 = vector.multi_reduction <add>, %66, %cst_25 [1] : vector<32x32xf32> to vector<32xf32>
    %68 = vector.shape_cast %67 : vector<32xf32> to vector<32x1xf32>
    %69 = tpu.reciprocal %68 {approx = true} : vector<32x1xf32> -> vector<32x1xf32>
    %70 = vector.broadcast %69 : vector<32x1xf32> to vector<32x32xf32>
    %71 = arith.mulf %66, %70 : vector<32x32xf32>
    %cst_26 = arith.constant dense<0.000000e+00> : vector<32x32xf32>
    %72 = tpu.matmul %71, %56, %cst_26 {dimension_numbers = #tpu.dot_dimension_numbers<[1], [0], [0], [1], [0, 0, 1, 1], [], []>} : vector<32x32xf32>, vector<32x32xf32>, vector<32x32xf32> -> vector<32x32xf32>
    %73 = vector.extract_strided_slice %29 {offsets = [0, 64], sizes = [32, 32], strides = [1, 1]} : vector<32x128xf32> to vector<32x32xf32>
    %74 = vector.extract_strided_slice %30 {offsets = [0, 64], sizes = [32, 32], strides = [1, 1]} : vector<32x128xf32> to vector<32x32xf32>
    %75 = vector.extract_strided_slice %31 {offsets = [0, 64], sizes = [32, 32], strides = [1, 1]} : vector<32x128xf32> to vector<32x32xf32>
    %cst_27 = arith.constant dense<0.000000e+00> : vector<32x32xf32>
    %76 = tpu.matmul %73, %74, %cst_27 {dimension_numbers = #tpu.dot_dimension_numbers<[1], [1], [0], [0], [0, 0, 1, 0], [], []>} : vector<32x32xf32>, vector<32x32xf32>, vector<32x32xf32> -> vector<32x32xf32>
    %cst_28 = arith.constant 0.176776692 : f32
    %77 = vector.broadcast %cst_28 : f32 to vector<32x32xf32>
    %78 = arith.mulf %76, %77 : vector<32x32xf32>
    %cst_29 = arith.constant -1.000000e+30 : f32
    %79 = vector.broadcast %cst_29 : f32 to vector<32x32xf32>
    %80 = arith.select %34, %78, %79 : vector<32x32xi1>, vector<32x32xf32>
    %cst_30 = arith.constant dense<0xFF800000> : vector<32xf32>
    %81 = vector.multi_reduction <maximumf>, %80, %cst_30 [1] : vector<32x32xf32> to vector<32xf32>
    %82 = vector.shape_cast %81 : vector<32xf32> to vector<32x1xf32>
    %83 = vector.broadcast %82 : vector<32x1xf32> to vector<32x32xf32>
    %84 = arith.subf %80, %83 : vector<32x32xf32>
    %85 = math.exp %84 : vector<32x32xf32>
    %cst_31 = arith.constant dense<0.000000e+00> : vector<32xf32>
    %86 = vector.multi_reduction <add>, %85, %cst_31 [1] : vector<32x32xf32> to vector<32xf32>
    %87 = vector.shape_cast %86 : vector<32xf32> to vector<32x1xf32>
    %88 = tpu.reciprocal %87 {approx = true} : vector<32x1xf32> -> vector<32x1xf32>
    %89 = vector.broadcast %88 : vector<32x1xf32> to vector<32x32xf32>
    %90 = arith.mulf %85, %89 : vector<32x32xf32>
    %cst_32 = arith.constant dense<0.000000e+00> : vector<32x32xf32>
    %91 = tpu.matmul %90, %75, %cst_32 {dimension_numbers = #tpu.dot_dimension_numbers<[1], [0], [0], [1], [0, 0, 1, 1], [], []>} : vector<32x32xf32>, vector<32x32xf32>, vector<32x32xf32> -> vector<32x32xf32>
    %92 = vector.extract_strided_slice %29 {offsets = [0, 96], sizes = [32, 32], strides = [1, 1]} : vector<32x128xf32> to vector<32x32xf32>
    %93 = vector.extract_strided_slice %30 {offsets = [0, 96], sizes = [32, 32], strides = [1, 1]} : vector<32x128xf32> to vector<32x32xf32>
    %94 = vector.extract_strided_slice %31 {offsets = [0, 96], sizes = [32, 32], strides = [1, 1]} : vector<32x128xf32> to vector<32x32xf32>
    %cst_33 = arith.constant dense<0.000000e+00> : vector<32x32xf32>
    %95 = tpu.matmul %92, %93, %cst_33 {dimension_numbers = #tpu.dot_dimension_numbers<[1], [1], [0], [0], [0, 0, 1, 0], [], []>} : vector<32x32xf32>, vector<32x32xf32>, vector<32x32xf32> -> vector<32x32xf32>
    %cst_34 = arith.constant 0.176776692 : f32
    %96 = vector.broadcast %cst_34 : f32 to vector<32x32xf32>
    %97 = arith.mulf %95, %96 : vector<32x32xf32>
    %cst_35 = arith.constant -1.000000e+30 : f32
    %98 = vector.broadcast %cst_35 : f32 to vector<32x32xf32>
    %99 = arith.select %34, %97, %98 : vector<32x32xi1>, vector<32x32xf32>
    %cst_36 = arith.constant dense<0xFF800000> : vector<32xf32>
    %100 = vector.multi_reduction <maximumf>, %99, %cst_36 [1] : vector<32x32xf32> to vector<32xf32>
    %101 = vector.shape_cast %100 : vector<32xf32> to vector<32x1xf32>
    %102 = vector.broadcast %101 : vector<32x1xf32> to vector<32x32xf32>
    %103 = arith.subf %99, %102 : vector<32x32xf32>
    %104 = math.exp %103 : vector<32x32xf32>
    %cst_37 = arith.constant dense<0.000000e+00> : vector<32xf32>
    %105 = vector.multi_reduction <add>, %104, %cst_37 [1] : vector<32x32xf32> to vector<32xf32>
    %106 = vector.shape_cast %105 : vector<32xf32> to vector<32x1xf32>
    %107 = tpu.reciprocal %106 {approx = true} : vector<32x1xf32> -> vector<32x1xf32>
    %108 = vector.broadcast %107 : vector<32x1xf32> to vector<32x32xf32>
    %109 = arith.mulf %104, %108 : vector<32x32xf32>
    %cst_38 = arith.constant dense<0.000000e+00> : vector<32x32xf32>
    %110 = tpu.matmul %109, %94, %cst_38 {dimension_numbers = #tpu.dot_dimension_numbers<[1], [0], [0], [1], [0, 0, 1, 1], [], []>} : vector<32x32xf32>, vector<32x32xf32>, vector<32x32xf32> -> vector<32x32xf32>
    %111 = tpu.concatenate %53, %72, %91, %110 in 1 : vector<32x32xf32>, vector<32x32xf32>, vector<32x32xf32>, vector<32x32xf32> -> vector<32x128xf32>
    %c0_39 = arith.constant 0 : index
    %c0_40 = arith.constant 0 : index
    %112 = vector.load %arg6[%c0_39, %c0_40] : memref<128x128xf32, #tpu.memory_space<vmem>>, vector<128x128xf32>
    %cst_41 = arith.constant dense<0.000000e+00> : vector<32x128xf32>
    %113 = tpu.matmul %111, %112, %cst_41 {dimension_numbers = #tpu.dot_dimension_numbers<[1], [0], [0], [1], [0, 0, 1, 1], [], []>} : vector<32x128xf32>, vector<128x128xf32>, vector<32x128xf32> -> vector<32x128xf32>
    %114 = arith.addf %1, %113 : vector<32x128xf32>
    %c0_42 = arith.constant 0 : index
    %c0_43 = arith.constant 0 : index
    %115 = vector.load %arg7[%c0_42, %c0_43] : memref<1x128xf32, #tpu.memory_space<vmem>>, vector<1x128xf32>
    %116 = vector.broadcast %115 : vector<1x128xf32> to vector<32x128xf32>
    %117 = arith.addf %114, %116 : vector<32x128xf32>
    %c0_44 = arith.constant 0 : index
    %c0_45 = arith.constant 0 : index
    %118 = vector.load %arg8[%c0_44, %c0_45] : memref<1x128xf32, #tpu.memory_space<vmem>>, vector<1x128xf32>
    %c0_46 = arith.constant 0 : index
    %c0_47 = arith.constant 0 : index
    %119 = vector.load %arg9[%c0_46, %c0_47] : memref<1x128xf32, #tpu.memory_space<vmem>>, vector<1x128xf32>
    %cst_48 = arith.constant dense<0.000000e+00> : vector<32xf32>
    %120 = vector.multi_reduction <add>, %117, %cst_48 [1] : vector<32x128xf32> to vector<32xf32>
    %121 = vector.shape_cast %120 : vector<32xf32> to vector<32x1xf32>
    %cst_49 = arith.constant 1.280000e+02 : f32
    %122 = vector.broadcast %cst_49 : f32 to vector<32x1xf32>
    %123 = arith.divf %121, %122 : vector<32x1xf32>
    %124 = vector.broadcast %123 : vector<32x1xf32> to vector<32x128xf32>
    %125 = arith.subf %117, %124 : vector<32x128xf32>
    %126 = arith.mulf %125, %125 : vector<32x128xf32>
    %cst_50 = arith.constant dense<0.000000e+00> : vector<32xf32>
    %127 = vector.multi_reduction <add>, %126, %cst_50 [1] : vector<32x128xf32> to vector<32xf32>
    %128 = vector.shape_cast %127 : vector<32xf32> to vector<32x1xf32>
    %cst_51 = arith.constant 1.280000e+02 : f32
    %129 = vector.broadcast %cst_51 : f32 to vector<32x1xf32>
    %130 = arith.divf %128, %129 : vector<32x1xf32>
    %cst_52 = arith.constant 9.99999974E-6 : f32
    %131 = vector.broadcast %cst_52 : f32 to vector<32x1xf32>
    %132 = arith.addf %130, %131 : vector<32x1xf32>
    %133 = math.rsqrt %132 : vector<32x1xf32>
    %134 = vector.broadcast %133 : vector<32x1xf32> to vector<32x128xf32>
    %135 = arith.mulf %125, %134 : vector<32x128xf32>
    %136 = vector.broadcast %118 : vector<1x128xf32> to vector<32x128xf32>
    %137 = arith.mulf %135, %136 : vector<32x128xf32>
    %138 = vector.broadcast %119 : vector<1x128xf32> to vector<32x128xf32>
    %139 = arith.addf %137, %138 : vector<32x128xf32>
    %c0_53 = arith.constant 0 : index
    %c0_54 = arith.constant 0 : index
    %140 = vector.load %arg10[%c0_53, %c0_54] : memref<128x512xf32, #tpu.memory_space<vmem>>, vector<128x512xf32>
    %cst_55 = arith.constant dense<0.000000e+00> : vector<32x512xf32>
    %141 = tpu.matmul %139, %140, %cst_55 {dimension_numbers = #tpu.dot_dimension_numbers<[1], [0], [0], [1], [0, 0, 1, 1], [], []>} : vector<32x128xf32>, vector<128x512xf32>, vector<32x512xf32> -> vector<32x512xf32>
    %c0_56 = arith.constant 0 : index
    %c0_57 = arith.constant 0 : index
    %142 = vector.load %arg11[%c0_56, %c0_57] : memref<1x512xf32, #tpu.memory_space<vmem>>, vector<1x512xf32>
    %143 = vector.broadcast %142 : vector<1x512xf32> to vector<32x512xf32>
    %144 = arith.addf %141, %143 : vector<32x512xf32>
    %cst_58 = arith.constant 5.000000e-01 : f32
    %145 = vector.broadcast %cst_58 : f32 to vector<32x512xf32>
    %146 = arith.mulf %145, %144 : vector<32x512xf32>
    %cst_59 = arith.constant 4.471500e-02 : f32
    %147 = vector.broadcast %cst_59 : f32 to vector<32x512xf32>
    %148 = arith.mulf %147, %144 : vector<32x512xf32>
    %149 = arith.mulf %148, %144 : vector<32x512xf32>
    %150 = arith.mulf %149, %144 : vector<32x512xf32>
    %151 = arith.addf %144, %150 : vector<32x512xf32>
    %cst_60 = arith.constant 0.797884583 : f32
    %152 = vector.broadcast %cst_60 : f32 to vector<32x512xf32>
    %153 = arith.mulf %152, %151 : vector<32x512xf32>
    %154 = math.tanh %153 : vector<32x512xf32>
    %cst_61 = arith.constant 1.000000e+00 : f32
    %155 = vector.broadcast %cst_61 : f32 to vector<32x512xf32>
    %156 = arith.addf %155, %154 : vector<32x512xf32>
    %157 = arith.mulf %146, %156 : vector<32x512xf32>
    %c0_62 = arith.constant 0 : index
    %c0_63 = arith.constant 0 : index
    %158 = vector.load %arg12[%c0_62, %c0_63] : memref<512x128xf32, #tpu.memory_space<vmem>>, vector<512x128xf32>
    %cst_64 = arith.constant dense<0.000000e+00> : vector<32x128xf32>
    %159 = tpu.matmul %157, %158, %cst_64 {dimension_numbers = #tpu.dot_dimension_numbers<[1], [0], [0], [1], [0, 0, 1, 1], [], []>} : vector<32x512xf32>, vector<512x128xf32>, vector<32x128xf32> -> vector<32x128xf32>
    %160 = arith.addf %117, %159 : vector<32x128xf32>
    %c0_65 = arith.constant 0 : index
    %c0_66 = arith.constant 0 : index
    %161 = vector.load %arg13[%c0_65, %c0_66] : memref<1x128xf32, #tpu.memory_space<vmem>>, vector<1x128xf32>
    %162 = vector.broadcast %161 : vector<1x128xf32> to vector<32x128xf32>
    %163 = arith.addf %160, %162 : vector<32x128xf32>
    %c0_67 = arith.constant 0 : index
    %c0_68 = arith.constant 0 : index
    %c0_69 = arith.constant 0 : index
    %164 = vector.load %arg14[%c0_67, %c0_68, %c0_69] : memref<1x32x128xf32, #tpu.memory_space<vmem>>, vector<1x32x128xf32>
    %165 = vector.shape_cast %164 : vector<1x32x128xf32> to vector<32x128xf32>
    %166 = vector.shape_cast %163 : vector<32x128xf32> to vector<1x32x128xf32>
    tpu.vector_store %arg14[%c0_67, %c0_68, %c0_69], %166 {strides = array<i32>} : memref<1x32x128xf32, #tpu.memory_space<vmem>>, vector<1x32x128xf32>,
    return
  }
  func.func @transform_0(%arg0: i32) -> (i32, i32, i32) {
    %c0_i32 = arith.constant 0 : i32
    %c0_i32_0 = arith.constant 0 : i32
    %c0_i32_1 = arith.constant 0 : i32
    return %arg0, %c0_i32, %c0_i32_0 : i32, i32, i32
  }
  func.func @transform_1(%arg0: i32) -> (i32, i32) {
    %c0_i32 = arith.constant 0 : i32
    %c0_i32_0 = arith.constant 0 : i32
    %c0_i32_1 = arith.constant 0 : i32
    return %c0_i32, %c0_i32_0 : i32, i32
  }
  func.func @transform_2(%arg0: i32) -> (i32, i32) {
    %c0_i32 = arith.constant 0 : i32
    %c0_i32_0 = arith.constant 0 : i32
    %c0_i32_1 = arith.constant 0 : i32
    return %c0_i32, %c0_i32_0 : i32, i32
  }
  func.func @transform_3(%arg0: i32) -> (i32, i32) {
    %c0_i32 = arith.constant 0 : i32
    %c0_i32_0 = arith.constant 0 : i32
    %c0_i32_1 = arith.constant 0 : i32
    return %c0_i32, %c0_i32_0 : i32, i32
  }
  func.func @transform_4(%arg0: i32) -> (i32, i32) {
    %c0_i32 = arith.constant 0 : i32
    %c0_i32_0 = arith.constant 0 : i32
    %c0_i32_1 = arith.constant 0 : i32
    return %c0_i32, %c0_i32_0 : i32, i32
  }
  func.func @transform_5(%arg0: i32) -> (i32, i32) {
    %c0_i32 = arith.constant 0 : i32
    %c0_i32_0 = arith.constant 0 : i32
    %c0_i32_1 = arith.constant 0 : i32
    return %c0_i32, %c0_i32_0 : i32, i32
  }
  func.func @transform_6(%arg0: i32) -> (i32, i32) {
    %c0_i32 = arith.constant 0 : i32
    %c0_i32_0 = arith.constant 0 : i32
    %c0_i32_1 = arith.constant 0 : i32
    return %c0_i32, %c0_i32_0 : i32, i32
  }
  func.func @transform_7(%arg0: i32) -> (i32, i32) {
    %c0_i32 = arith.constant 0 : i32
    %c0_i32_0 = arith.constant 0 : i32
    %c0_i32_1 = arith.constant 0 : i32
    return %c0_i32, %c0_i32_0 : i32, i32
  }
  func.func @transform_8(%arg0: i32) -> (i32, i32) {
    %c0_i32 = arith.constant 0 : i32
    %c0_i32_0 = arith.constant 0 : i32
    %c0_i32_1 = arith.constant 0 : i32
    return %c0_i32, %c0_i32_0 : i32, i32
  }
  func.func @transform_9(%arg0: i32) -> (i32, i32) {
    %c0_i32 = arith.constant 0 : i32
    %c0_i32_0 = arith.constant 0 : i32
    %c0_i32_1 = arith.constant 0 : i32
    return %c0_i32, %c0_i32_0 : i32, i32
  }
  func.func @transform_10(%arg0: i32) -> (i32, i32) {
    %c0_i32 = arith.constant 0 : i32
    %c0_i32_0 = arith.constant 0 : i32
    %c0_i32_1 = arith.constant 0 : i32
    return %c0_i32, %c0_i32_0 : i32, i32
  }
  func.func @transform_11(%arg0: i32) -> (i32, i32) {
    %c0_i32 = arith.constant 0 : i32
    %c0_i32_0 = arith.constant 0 : i32
    %c0_i32_1 = arith.constant 0 : i32
    return %c0_i32, %c0_i32_0 : i32, i32
  }
  func.func @transform_12(%arg0: i32) -> (i32, i32) {
    %c0_i32 = arith.constant 0 : i32
    %c0_i32_0 = arith.constant 0 : i32
    %c0_i32_1 = arith.constant 0 : i32
    return %c0_i32, %c0_i32_0 : i32, i32
  }
  func.func @transform_13(%arg0: i32) -> (i32, i32, i32) {
    %c0_i32 = arith.constant 0 : i32
    %c0_i32_0 = arith.constant 0 : i32
    %c0_i32_1 = arith.constant 0 : i32
    return %arg0, %c0_i32, %c0_i32_0 : i32, i32, i32
  }
}

</mosaic_0001>

<llo_original>
// kernel: _lambda_.4
$region0: #{_lambda_.4}
  #allocation0 [shape = 'u32[]', space=smem, size = 0x4, offset = 0x4, fixed_abs, tag = 'smem constant byte address 0x4 - core index']
  #allocation1 [shape = 'u32[144,128]{1,0:T(1,128)}', space=vmem, size = 0x12000, scoped, tag = 'internal scratch']
  %s0 = inlined_call_operand.vmem [shape: f32[32,192], index: 0, kind: input, shape index: {}]
  %s1 = inlined_call_operand.vmem [shape: f32[192,128], index: 1, kind: input, shape index: {}]
  %s2 = inlined_call_operand.vmem [shape: f32[1,128], index: 2, kind: input, shape index: {}]
  %s3 = inlined_call_operand.vmem [shape: f32[32,128], index: 3, kind: output, shape index: {}]
  %s4 = sld [smem:[#allocation0]]
  $region22: #{_lambda_.4} parent=0
    _
  %s6 = ssub.s32 1, %s4
  %s7 = scalar_select 0, %s6, %s4
  // Predicated region
  $region2: #{_lambda_.4} parent=0 // pred_check
    _
  $region3: #{_lambda_.4} parent=0 // pred_check_branch
    %9 = sbr.rel (0) target = $region5
  $region4: #{_lambda_.4} parent=0 // pred_region
    _
  $region5: #{_lambda_.4} parent=0 // pred_fallthru
    _
  // Predicated region
  $region6: #{_lambda_.4} parent=0 // pred_check
    _
  $region7: #{_lambda_.4} parent=0 // pred_check_branch
    %11 = sbr.rel (0) target = $region9
  $region8: #{_lambda_.4} parent=0 // pred_region
    _
  $region9: #{_lambda_.4} parent=0 // pred_fallthru
    _
  // Predicated region
  $region10: #{_lambda_.4} parent=0 // pred_check
    _
  $region11: #{_lambda_.4} parent=0 // pred_check_branch
    %13 = sbr.rel (0) target = $region13
  $region12: #{_lambda_.4} parent=0 // pred_region
    _
  $region13: #{_lambda_.4} parent=0 // pred_fallthru
    _
  %v14 = vld [vmem:[%s0] sm:$0xff]
  %v15 = vld [vmem:[%s0 + $0x8] sm:$0xff]
  %v16 = vld [vmem:[%s0 + $0x10] sm:$0xff]
  %v17 = vld [vmem:[%s0 + $0x18] sm:$0xff]
  %v18 = vld [vmem:[%s0 + $0x20] sm:$0xff]
  %v19 = vld [vmem:[%s0 + $0x28] sm:$0xff]
  %v20 = vld [vmem:[%s0 + $0x30] sm:$0xff]
  %v21 = vld [vmem:[%s0 + $0x38] sm:$0xff]
  %v22 = vld [vmem:[%s1] sm:$0xff]
  %v23 = vld [vmem:[%s1 + $0x8] sm:$0xff]
  %v24 = vld [vmem:[%s1 + $0x10] sm:$0xff]
  %v25 = vld [vmem:[%s1 + $0x18] sm:$0xff]
  %v26 = vld [vmem:[%s1 + $0x20] sm:$0xff]
  %v27 = vld [vmem:[%s1 + $0x28] sm:$0xff]
  %v28 = vld [vmem:[%s1 + $0x30] sm:$0xff]
  %v29 = vld [vmem:[%s1 + $0x38] sm:$0xff]
  %v30 = vld [vmem:[%s1 + $0x40] sm:$0xff]
  %v31 = vld [vmem:[%s1 + $0x48] sm:$0xff]
  %v32 = vld [vmem:[%s1 + $0x50] sm:$0xff]
  %v33 = vld [vmem:[%s1 + $0x58] sm:$0xff]
  %v34 = vld [vmem:[%s1 + $0x60] sm:$0xff]
  %v35 = vld [vmem:[%s1 + $0x68] sm:$0xff]
  %v36 = vld [vmem:[%s1 + $0x70] sm:$0xff]
  %v37 = vld [vmem:[%s1 + $0x78] sm:$0xff]
  %v38 = vld [vmem:[%s1 + $0x80] sm:$0xff]
  %v39 = vld [vmem:[%s1 + $0x88] sm:$0xff]
  %v40 = vld [vmem:[%s1 + $0x90] sm:$0xff]
  %v41 = vld [vmem:[%s1 + $0x98] sm:$0xff]
  %v42 = vld [vmem:[%s1 + $0xa0] sm:$0xff]
  %v43 = vld [vmem:[%s1 + $0xa8] sm:$0xff]
  %v44 = vld [vmem:[%s1 + $0xb0] sm:$0xff]
  %v45 = vld [vmem:[%s1 + $0xb8] sm:$0xff]
  %v46 = vld [vmem:[%s2] sm:$0x1]
  %v48 = vlaneseq
  %v49 = vshrl.u32 %v48, 7
  %v50 = vsub.s32 0, %v49
  %v51 = vrot.slane %v46, %v50
  %vm53 = vcmask 523264
  %v55 = vsel %vm53, %v15, 0
  %v58 = vsel %vm53, %v17, 0
  %v61 = vsel %vm53, %v19, 0
  %v64 = vsel %vm53, %v21, 0
  %66 = vmatprep.subr.mxu0 0.0
  %67 = vmatpush1.msra.mxu0 %v22
  %68 = vmatprep.subr.mxu0 0.0
  %69 = vmatpush1.msra.mxu0 %v23
  %70 = vmatprep.subr.mxu0 0.0
  %71 = vmatpush1.msra.mxu0 %v24
  %72 = vmatprep.subr.mxu0 0.0
  %73 = vmatpush1.msra.mxu0 %v25
  %74 = vmatprep.subr.mxu0 0.0
  %75 = vmatpush1.msra.mxu0 %v26
  %76 = vmatprep.subr.mxu0 0.0
  %77 = vmatpush1.msra.mxu0 %v27
  %78 = vmatprep.subr.mxu0 0.0
  %79 = vmatpush1.msra.mxu0 %v28
  %80 = vmatprep.subr.mxu0 0.0
  %81 = vmatpush1.msra.mxu0 %v29
  %82 = vmatprep.subr.mxu0 0.0
  %83 = vmatpush1.msra.mxu0 %v30
  %84 = vmatprep.subr.mxu0 0.0
  %85 = vmatpush1.msra.mxu0 %v31
  %86 = vmatprep.subr.mxu0 0.0
  %87 = vmatpush1.msra.mxu0 %v32
  %88 = vmatprep.subr.mxu0 0.0
  %89 = vmatpush1.msra.mxu0 %v33
  %90 = vmatprep.subr.mxu0 0.0
  %91 = vmatpush1.msra.mxu0 %v34
  %92 = vmatprep.subr.mxu0 0.0
  %93 = vmatpush1.msra.mxu0 %v35
  %94 = vmatprep.subr.mxu0 0.0
  %95 = vmatpush1.msra.mxu0 %v36
  %96 = vmatprep.subr.mxu0 0.0
  %97 = vmatpush1.msra.mxu0 %v37
  %98 = vmatprep.subr.mxu0 0.0
  %99 = vmatpush1.msra.mxu0 %v38
  %100 = vmatprep.subr.mxu0 0.0
  %101 = vmatpush1.msra.mxu0 %v39
  %102 = vmatprep.subr.mxu0 0.0
  %103 = vmatpush1.msra.mxu0 %v40
  %104 = vmatprep.subr.mxu0 0.0
  %105 = vmatpush1.msra.mxu0 %v41
  %106 = vmatprep.subr.mxu0 0.0
  %107 = vmatpush1.msra.mxu0 %v42
  %108 = vmatprep.subr.mxu0 0.0
  %109 = vmatpush1.msra.mxu0 %v43
  %110 = vmatprep.subr.mxu0 0.0
  %111 = vmatpush1.msra.mxu0 %v44
  %112 = vmatprep.subr.mxu0 0.0
  %113 = vmatpush1.msra.mxu0 %v45
  %114 = vmatprep.subr.mxu0 0.0
  %115 = vmatpush1.msra.mxu0 0.0
  %116 = vmatprep.subr.mxu0 0.0
  %117 = vmatpush1.msra.mxu0 0.0
  %118 = vmatprep.subr.mxu0 0.0
  %119 = vmatpush1.msra.mxu0 0.0
  %120 = vmatprep.subr.mxu0 0.0
  %121 = vmatpush1.msra.mxu0 0.0
  %122 = vmatprep.subr.mxu0 0.0
  %123 = vmatpush1.msra.mxu0 0.0
  %124 = vmatprep.subr.mxu0 0.0
  %125 = vmatpush1.msra.mxu0 0.0
  %126 = vmatprep.subr.mxu0 0.0
  %127 = vmatpush1.msra.mxu0 0.0
  %128 = vmatprep.subr.mxu0 0.0
  %129 = vmatpush1.msra.mxu0 0.0
  %130 = vmatprep.mubr.f32.mxu0 %v55
  %131 = vmatmul.mubr.f32.gmra.mrb[0].mxu0 %v14
  %v132 = vpop.f32.mrb[0].mxu0
  %v133 = vadd.f32 %v51, %v132
  %v134 = vpop.f32.mrb[0].mxu0
  %135 = vmatprep.mubr.f32.mxu0 %v58
  %136 = vmatmul.mubr.f32.gmra.mrb[0].mxu0 %v16
  %v137 = vpop.f32.mrb[0].mxu0
  %v138 = vadd.f32 %v51, %v137
  %v139 = vpop.f32.mrb[0].mxu0
  %140 = vmatprep.mubr.f32.mxu0 %v61
  %141 = vmatmul.mubr.f32.gmra.mrb[0].mxu0 %v18
  %v142 = vpop.f32.mrb[0].mxu0
  %v143 = vadd.f32 %v51, %v142
  %v144 = vpop.f32.mrb[0].mxu0
  %145 = vmatprep.mubr.f32.mxu0 %v64
  %146 = vmatmul.mubr.f32.gmra.mrb[0].mxu0 %v20
  %v147 = vpop.f32.mrb[0].mxu0
  %v148 = vadd.f32 %v51, %v147
  %v149 = vpop.f32.mrb[0].mxu0
  %150 = vdwg.mxu0
  %151 = vst [vmem:[%s3] sm:$0xff] %v133
  %152 = vst [vmem:[%s3 + $0x8] sm:$0xff] %v138
  %153 = vst [vmem:[%s3 + $0x10] sm:$0xff] %v143
  %154 = vst [vmem:[%s3 + $0x18] sm:$0xff] %v148
  // Predicated region
  $region14: #{_lambda_.4} parent=0 // pred_check
    _
  $region15: #{_lambda_.4} parent=0 // pred_check_branch
    %156 = sbr.rel (0) target = $region17
  $region16: #{_lambda_.4} parent=0 // pred_region
    _
  $region17: #{_lambda_.4} parent=0 // pred_fallthru
    _
  // Predicated region
  $region18: #{_lambda_.4} parent=0 // pred_check
    _
  $region19: #{_lambda_.4} parent=0 // pred_check_branch
    %158 = sbr.rel (0) target = $region21
  $region20: #{_lambda_.4} parent=0 // pred_region
    _
  $region21: #{_lambda_.4} parent=0 // pred_fallthru
    _

// kernel: _lambda_.7
$region0: #{_lambda_.7}
  #allocation0 [shape = 'u32[]', space=smem, size = 0x4, offset = 0x4, fixed_abs, tag = 'smem constant byte address 0x4 - core index']
  #allocation1 [shape = 'u32[144,128]{1,0:T(1,128)}', space=vmem, size = 0x12000, scoped, tag = 'internal scratch']
  %s0 = inlined_call_operand.vmem [shape: f32[2,32,128], index: 0, kind: input, shape index: {}]
  %s1 = inlined_call_operand.vmem [shape: f32[1,128], index: 1, kind: input, shape index: {}]
  %s2 = inlined_call_operand.vmem [shape: f32[1,128], index: 2, kind: input, shape index: {}]
  %s3 = inlined_call_operand.vmem [shape: f32[128,128], index: 3, kind: input, shape index: {}]
  %s4 = inlined_call_operand.hbm [shape: f32[2,32,128], index: 4, kind: output, shape index: {}]
  %s5 = sld [smem:[#allocation0]]
  $region49: #{_lambda_.7} parent=0
    _
  %s7 = ssub.s32 1, %s5
  %s8 = scalar_select 0, %s7, %s5
  $region1: #{_lambda_.7} parent=0
    #allocation2 [shape = 'u8[32768]{0}', space=vmem, size = 0x8000, scoped, tag = 'output window, operand 0']
    #allocation3 [shape = 's32[2]{0}', space=sflag, size = 0x8, scoped, tag = 'scoped memory for _lambda_.7']
    %9 = vsyncpa [#allocation3], 0
    %s10 = scalar_lea.sflag [#allocation3], 1
    %11 = vsyncpa %s10, 0
    loop: start=0, step=1, limit=4
    $region2: #{_lambda_.7} parent=1 // loop_pre_header
      _
    $region3: #{_lambda_.7} parent=1 // loop_header
      %s13 = sphi 0, %s17
      %p14 = scmp.ge.s32.totalorder %s13, 4
      %s23 = sphi 0, %s25
      %s26 = sphi 0, %s23
      %s27 = sphi 0, %s26
      %s43 = sphi 0, %s27
      %s47 = sphi 0, %s47
      %s49 = sphi 0, %s47
      %s50 = sphi 0, %s49
      %s64 = sphi 0, %s50
      %s68 = sphi 0, %s68
      %s70 = sphi 0, %s68
      %s71 = sphi 0, %s70
      %s85 = sphi 0, %s71
      %s89 = sphi 0, %s89
      %s91 = sphi 0, %s89
      %s92 = sphi 0, %s91
      %s106 = sphi 0, %s92
      %s112 = sphi 0, %s114
      %s115 = sphi 0, %s112
      %s116 = sphi 0, %s115
      %s132 = sphi 0, %s116
    $region4: #{_lambda_.7} parent=1 // loop_header_branch
      %16 = sbr.rel (%p14) target = $region8
    $region5: #{_lambda_.7} parent=1 // loop_body
      %s18 = ssub.s32 %s13, 1
      %s19 = ssub.s32 %s13, 2
      %s20 = sadd.s32 %s13, 1
      %s21 = ssub.s32 %s13, %s20
      %p22 = scmp.eq.s32.totalorder %s21, 0
      %s24 = sadd.s32 %s23, 1
      %s25 = scalar_select %p22, %s23, %s24
      %p28 = pneg %p22
      %p29 = scmp.eq.s32.totalorder %s13, 1
      %p30 = por %p28, %p29
      %p31 = scmp.ne.s32.totalorder %s23, %s26
      %p32 = scmp.eq.s32.totalorder %s13, 0
      %p33 = por %p31, %p32
      %p34 = scmp.ne.s32.totalorder %s23, %s26
      %p35 = scmp.eq.s32.totalorder %s18, 1
      %p36 = por %p34, %p35
      %p37 = scmp.ne.s32.totalorder %s26, %s27
      %p38 = scmp.eq.s32.totalorder %s18, 0
      %p39 = por %p37, %p38
      %p40 = scmp.ne.s32.totalorder %s26, %s27
      %p41 = scmp.eq.s32.totalorder %s19, 1
      %p42 = por %p40, %p41
      %p44 = scmp.ne.s32.totalorder %s27, %s43
      %p45 = scmp.eq.s32.totalorder %s19, 0
      %p46 = por %p44, %p45
      %s48 = sadd.s32 %s47, 1
      %p51 = scmp.eq.s32.totalorder %s13, 1
      %p52 = scmp.ne.s32.totalorder %s47, %s49
      %p53 = scmp.eq.s32.totalorder %s13, 0
      %p54 = por %p52, %p53
      %p55 = scmp.ne.s32.totalorder %s47, %s49
      %p56 = scmp.eq.s32.totalorder %s18, 1
      %p57 = por %p55, %p56
      %p58 = scmp.ne.s32.totalorder %s49, %s50
      %p59 = scmp.eq.s32.totalorder %s18, 0
      %p60 = por %p58, %p59
      %p61 = scmp.ne.s32.totalorder %s49, %s50
      %p62 = scmp.eq.s32.totalorder %s19, 1
      %p63 = por %p61, %p62
      %p65 = scmp.ne.s32.totalorder %s50, %s64
      %p66 = scmp.eq.s32.totalorder %s19, 0
      %p67 = por %p65, %p66
      %s69 = sadd.s32 %s68, 1
      %p72 = scmp.eq.s32.totalorder %s13, 1
      %p73 = scmp.ne.s32.totalorder %s68, %s70
      %p74 = scmp.eq.s32.totalorder %s13, 0
      %p75 = por %p73, %p74
      %p76 = scmp.ne.s32.totalorder %s68, %s70
      %p77 = scmp.eq.s32.totalorder %s18, 1
      %p78 = por %p76, %p77
      %p79 = scmp.ne.s32.totalorder %s70, %s71
      %p80 = scmp.eq.s32.totalorder %s18, 0
      %p81 = por %p79, %p80
      %p82 = scmp.ne.s32.totalorder %s70, %s71
      %p83 = scmp.eq.s32.totalorder %s19, 1
      %p84 = por %p82, %p83
      %p86 = scmp.ne.s32.totalorder %s71, %s85
      %p87 = scmp.eq.s32.totalorder %s19, 0
      %p88 = por %p86, %p87
      %s90 = sadd.s32 %s89, 1
      %p93 = scmp.eq.s32.totalorder %s13, 1
      %p94 = scmp.ne.s32.totalorder %s89, %s91
      %p95 = scmp.eq.s32.totalorder %s13, 0
      %p96 = por %p94, %p95
      %p97 = scmp.ne.s32.totalorder %s89, %s91
      %p98 = scmp.eq.s32.totalorder %s18, 1
      %p99 = por %p97, %p98
      %p100 = scmp.ne.s32.totalorder %s91, %s92
      %p101 = scmp.eq.s32.totalorder %s18, 0
      %p102 = por %p100, %p101
      %p103 = scmp.ne.s32.totalorder %s91, %s92
      %p104 = scmp.eq.s32.totalorder %s19, 1
      %p105 = por %p103, %p104
      %p107 = scmp.ne.s32.totalorder %s92, %s106
      %p108 = scmp.eq.s32.totalorder %s19, 0
      %p109 = por %p107, %p108
      %s110 = ssub.s32 %s13, %s20
      %p111 = scmp.eq.s32.totalorder %s110, 0
      %s113 = sadd.s32 %s112, 1
      %s114 = scalar_select %p111, %s112, %s113
      %p117 = pneg %p111
      %p118 = scmp.eq.s32.totalorder %s13, 1
      %p119 = por %p117, %p118
      %p120 = scmp.ne.s32.totalorder %s112, %s115
      %p121 = scmp.eq.s32.totalorder %s13, 0
      %p122 = por %p120, %p121
      %p123 = scmp.ne.s32.totalorder %s112, %s115
      %p124 = scmp.eq.s32.totalorder %s18, 1
      %p125 = por %p123, %p124
      %p126 = scmp.ne.s32.totalorder %s115, %s116
      %p127 = scmp.eq.s32.totalorder %s18, 0
      %p128 = por %p126, %p127
      %p129 = scmp.ne.s32.totalorder %s115, %s116
      %p130 = scmp.eq.s32.totalorder %s19, 1
      %p131 = por %p129, %p130
      %p133 = scmp.ne.s32.totalorder %s116, %s132
      %p134 = scmp.eq.s32.totalorder %s19, 0
      %p135 = por %p133, %p134
      %p136 = scmp.le.s32.totalorder 1, %s13
      %p137 = scmp.lt.s32.totalorder %s13, 3
      %p138 = pnand %p136, %p137
      %p139 = pneg %p138
      // Predicated region
      $region9: #{_lambda_.7} parent=5 // pred_check
        _
      $region10: #{_lambda_.7} parent=5 // pred_check_branch
        %141 = sbr.rel (%p138) target = $region12
      $region11: #{_lambda_.7} parent=5 // pred_region
        %s142 = ssub.s32 %s13, 1
        // Predicated region
        $region13: #{_lambda_.7} parent=11 // pred_check
          %p143 = pneg %p60
        $region14: #{_lambda_.7} parent=11 // pred_check_branch
          %145 = sbr.rel (%p143) target = $region16
        $region15: #{_lambda_.7} parent=11 // pred_region
          _
        $region16: #{_lambda_.7} parent=11 // pred_fallthru
          _
        // Predicated region
        $region17: #{_lambda_.7} parent=11 // pred_check
          %p146 = pneg %p81
        $region18: #{_lambda_.7} parent=11 // pred_check_branch
          %148 = sbr.rel (%p146) target = $region20
        $region19: #{_lambda_.7} parent=11 // pred_region
          _
        $region20: #{_lambda_.7} parent=11 // pred_fallthru
          _
        // Predicated region
        $region21: #{_lambda_.7} parent=11 // pred_check
          %p149 = pneg %p102
        $region22: #{_lambda_.7} parent=11 // pred_check_branch
          %151 = sbr.rel (%p149) target = $region24
        $region23: #{_lambda_.7} parent=11 // pred_region
          _
        $region24: #{_lambda_.7} parent=11 // pred_fallthru
          _
      $region12: #{_lambda_.7} parent=5 // pred_fallthru
        _
      %p152 = scmp.lt.s32.totalorder %s13, 2
      // Predicated region
      $region25: #{_lambda_.7} parent=5 // pred_check
        %p153 = pneg %p152
      $region26: #{_lambda_.7} parent=5 // pred_check_branch
        %155 = sbr.rel (%p153) target = $region28
      $region27: #{_lambda_.7} parent=5 // pred_region
        // Predicated region
        $region29: #{_lambda_.7} parent=27 // pred_check
          %p156 = pneg %p33
        $region30: #{_lambda_.7} parent=27 // pred_check_branch
          %158 = sbr.rel (%p156) target = $region32
        $region31: #{_lambda_.7} parent=27 // pred_region
          %p159 = scmp.lt.s32.totalorder %s13, 1
          %s160 = scalar_select %p159, %s13, 1
          %s161 = smul.addr %s160, 4
          %s162 = smul.addr %s161, 8
          %s163 = scalar_lea.vmem %s0, %s162
        $region32: #{_lambda_.7} parent=27 // pred_fallthru
          _
      $region28: #{_lambda_.7} parent=5 // pred_fallthru
        _
      %p164 = scmp.le.s32.totalorder 1, %s13
      %p165 = scmp.lt.s32.totalorder %s13, 3
      %p166 = pnand %p164, %p165
      %p167 = pneg %p166
      // Predicated region
      $region33: #{_lambda_.7} parent=5 // pred_check
        _
      $region34: #{_lambda_.7} parent=5 // pred_check_branch
        %169 = sbr.rel (%p166) target = $region36
      $region35: #{_lambda_.7} parent=5 // pred_region
        %s170 = ssub.s32 %s13, 1
        %p171 = scmp.lt.s32.totalorder %s18, 1
        %s172 = scalar_select %p171, %s18, 1
        %s173 = smul.addr %s172, 4
        %s174 = smul.addr %s173, 8
        %s175 = scalar_lea.vmem %s0, %s174
        %p176 = pneg %p39
        %p177 = pneg %p36
        %p178 = pneg %p60
        %p179 = pneg %p57
        %p180 = pneg %p81
        %p181 = pneg %p78
        %p182 = pneg %p102
        %p183 = pneg %p99
        %p184 = pneg %p128
        %p185 = pneg %p125
        %s186 = sand.u32 %s115, 1
        %s187 = scalar_lea.sflag [#allocation3], %s186
        %s188 = sand.u32 %s115, 1
        %s189 = smul.addr %s188, 32
        %s190 = scalar_lea.vmem [#allocation2], %s189
        %p191 = scmp.lt.s32.totalorder %s18, 1
        %s192 = scalar_select %p191, %s18, 1
        %s193 = smul.addr %s192, 4
        %s194 = smul.addr %s193, 8
        %s195 = scalar_lea.vmem %s0, %s194
        %v196 = vld [vmem:[%s195] sm:$0xff]
        %v197 = vld [vmem:[%s195 + $0x8] sm:$0xff]
        %v198 = vld [vmem:[%s195 + $0x10] sm:$0xff]
        %v199 = vld [vmem:[%s195 + $0x18] sm:$0xff]
        %v200 = vld [vmem:[%s1] sm:$0x1]
        %v201 = vld [vmem:[%s2] sm:$0x1]
        %202 = vadd.xlane.f32.xlu0 %v196
        %v203 = vpop.xlane.xlu0 %202
        %204 = vadd.xlane.f32.xlu0 %v197
        %v205 = vpop.xlane.xlu0 %204
        %206 = vadd.xlane.f32.xlu0 %v198
        %v207 = vpop.xlane.xlu0 %206
        %208 = vadd.xlane.f32.xlu0 %v199
        %v209 = vpop.xlane.xlu0 %208
        %v210 = vrcp.pop 128.0
        %v211 = vmul.f32 %v203, %v210
        %v212 = vmul.f32 %v205, %v210
        %v213 = vmul.f32 %v207, %v210
        %v214 = vmul.f32 %v209, %v210
        %v215 = vsub.f32 %v196, %v211
        %v216 = vsub.f32 %v197, %v212
        %v217 = vsub.f32 %v198, %v213
        %v218 = vsub.f32 %v199, %v214
        %v219 = vmul.f32 %v215, %v215
        %v220 = vmul.f32 %v216, %v216
        %v221 = vmul.f32 %v217, %v217
        %v222 = vmul.f32 %v218, %v218
        %223 = vadd.xlane.f32.xlu0 %v219
        %v224 = vpop.xlane.xlu0 %223
        %225 = vadd.xlane.f32.xlu0 %v220
        %v226 = vpop.xlane.xlu0 %225
        %227 = vadd.xlane.f32.xlu0 %v221
        %v228 = vpop.xlane.xlu0 %227
        %229 = vadd.xlane.f32.xlu0 %v222
        %v230 = vpop.xlane.xlu0 %229
        %v231 = vmul.f32 %v224, %v210
        %v232 = vmul.f32 %v226, %v210
        %v233 = vmul.f32 %v228, %v210
        %v234 = vmul.f32 %v230, %v210
        %v235 = vadd.f32 %v231, 1e-05
        %v236 = vadd.f32 %v232, 1e-05
        %v237 = vadd.f32 %v233, 1e-05
        %v238 = vadd.f32 %v234, 1e-05
        %v239 = vrsqrt.pop %v235
        %v240 = vrsqrt.pop %v236
        %v241 = vrsqrt.pop %v237
        %v242 = vrsqrt.pop %v238
        %v243 = vmul.f32 %v215, %v239
        %v244 = vmul.f32 %v216, %v240
        %v245 = vmul.f32 %v217, %v241
        %v246 = vmul.f32 %v218, %v242
        %v248 = vlaneseq
        %v249 = vshrl.u32 %v248, 7
        %v250 = vsub.s32 0, %v249
        %v251 = vrot.slane %v200, %v250
        %v253 = vmul.f32 %v243, %v251
        %v254 = vmul.f32 %v244, %v251
        %v255 = vmul.f32 %v245, %v251
        %v256 = vmul.f32 %v246, %v251
        %v258 = vlaneseq
        %v259 = vshrl.u32 %v258, 7
        %v260 = vsub.s32 0, %v259
        %v261 = vrot.slane %v201, %v260
        %v263 = vadd.f32 %v253, %v261
        %v264 = vadd.f32 %v254, %v261
        %v265 = vadd.f32 %v255, %v261
        %v266 = vadd.f32 %v256, %v261
        %v267 = vld [vmem:[%s3] sm:$0xff]
        %v268 = vld [vmem:[%s3 + $0x8] sm:$0xff]
        %v269 = vld [vmem:[%s3 + $0x10] sm:$0xff]
        %v270 = vld [vmem:[%s3 + $0x18] sm:$0xff]
        %v271 = vld [vmem:[%s3 + $0x20] sm:$0xff]
        %v272 = vld [vmem:[%s3 + $0x28] sm:$0xff]
        %v273 = vld [vmem:[%s3 + $0x30] sm:$0xff]
        %v274 = vld [vmem:[%s3 + $0x38] sm:$0xff]
        %v275 = vld [vmem:[%s3 + $0x40] sm:$0xff]
        %v276 = vld [vmem:[%s3 + $0x48] sm:$0xff]
        %v277 = vld [vmem:[%s3 + $0x50] sm:$0xff]
        %v278 = vld [vmem:[%s3 + $0x58] sm:$0xff]
        %v279 = vld [vmem:[%s3 + $0x60] sm:$0xff]
        %v280 = vld [vmem:[%s3 + $0x68] sm:$0xff]
        %v281 = vld [vmem:[%s3 + $0x70] sm:$0xff]
        %v282 = vld [vmem:[%s3 + $0x78] sm:$0xff]
        %283 = vmatprep.subr.mxu0 0.0
        %284 = vmatpush1.msra.mxu0 %v267
        %285 = vmatprep.subr.mxu0 0.0
        %286 = vmatpush1.msra.mxu0 %v268
        %287 = vmatprep.subr.mxu0 0.0
        %288 = vmatpush1.msra.mxu0 %v269
        %289 = vmatprep.subr.mxu0 0.0
        %290 = vmatpush1.msra.mxu0 %v270
        %291 = vmatprep.subr.mxu0 0.0
        %292 = vmatpush1.msra.mxu0 %v271
        %293 = vmatprep.subr.mxu0 0.0
        %294 = vmatpush1.msra.mxu0 %v272
        %295 = vmatprep.subr.mxu0 0.0
        %296 = vmatpush1.msra.mxu0 %v273
        %297 = vmatprep.subr.mxu0 0.0
        %298 = vmatpush1.msra.mxu0 %v274
        %299 = vmatprep.subr.mxu0 0.0
        %300 = vmatpush1.msra.mxu0 %v275
        %301 = vmatprep.subr.mxu0 0.0
        %302 = vmatpush1.msra.mxu0 %v276
        %303 = vmatprep.subr.mxu0 0.0
        %304 = vmatpush1.msra.mxu0 %v277
        %305 = vmatprep.subr.mxu0 0.0
        %306 = vmatpush1.msra.mxu0 %v278
        %307 = vmatprep.subr.mxu0 0.0
        %308 = vmatpush1.msra.mxu0 %v279
        %309 = vmatprep.subr.mxu0 0.0
        %310 = vmatpush1.msra.mxu0 %v280
        %311 = vmatprep.subr.mxu0 0.0
        %312 = vmatpush1.msra.mxu0 %v281
        %313 = vmatprep.subr.mxu0 0.0
        %314 = vmatpush1.msra.mxu0 %v282
        %315 = vmatprep.subr.mxu0 0.0
        %316 = vmatpush1.msra.mxu0 0.0
        %317 = vmatprep.subr.mxu0 0.0
        %318 = vmatpush1.msra.mxu0 0.0
        %319 = vmatprep.subr.mxu0 0.0
        %320 = vmatpush1.msra.mxu0 0.0
        %321 = vmatprep.subr.mxu0 0.0
        %322 = vmatpush1.msra.mxu0 0.0
        %323 = vmatprep.subr.mxu0 0.0
        %324 = vmatpush1.msra.mxu0 0.0
        %325 = vmatprep.subr.mxu0 0.0
        %326 = vmatpush1.msra.mxu0 0.0
        %327 = vmatprep.subr.mxu0 0.0
        %328 = vmatpush1.msra.mxu0 0.0
        %329 = vmatprep.subr.mxu0 0.0
        %330 = vmatpush1.msra.mxu0 0.0
        %331 = vmatprep.subr.mxu0 0.0
        %332 = vmatpush1.msra.mxu0 0.0
        %333 = vmatprep.subr.mxu0 0.0
        %334 = vmatpush1.msra.mxu0 0.0
        %335 = vmatprep.subr.mxu0 0.0
        %336 = vmatpush1.msra.mxu0 0.0
        %337 = vmatprep.subr.mxu0 0.0
        %338 = vmatpush1.msra.mxu0 0.0
        %339 = vmatprep.subr.mxu0 0.0
        %340 = vmatpush1.msra.mxu0 0.0
        %341 = vmatprep.subr.mxu0 0.0
        %342 = vmatpush1.msra.mxu0 0.0
        %343 = vmatprep.subr.mxu0 0.0
        %344 = vmatpush1.msra.mxu0 0.0
        %345 = vmatprep.subr.mxu0 0.0
        %346 = vmatpush1.msra.mxu0 0.0
        %347 = vmatprep.mubr.f32.mxu0 0.0
        %348 = vmatmul.mubr.f32.gmra.mrb[0].mxu0 %v263
        %v349 = vpop.f32.mrb[0].mxu0
        %v350 = vadd.f32 0.0, %v349
        %v351 = vpop.f32.mrb[0].mxu0
        %352 = vmatprep.mubr.f32.mxu0 0.0
        %353 = vmatmul.mubr.f32.gmra.mrb[0].mxu0 %v264
        %v354 = vpop.f32.mrb[0].mxu0
        %v355 = vadd.f32 0.0, %v354
        %v356 = vpop.f32.mrb[0].mxu0
        %357 = vmatprep.mubr.f32.mxu0 0.0
        %358 = vmatmul.mubr.f32.gmra.mrb[0].mxu0 %v265
        %v359 = vpop.f32.mrb[0].mxu0
        %v360 = vadd.f32 0.0, %v359
        %v361 = vpop.f32.mrb[0].mxu0
        %362 = vmatprep.mubr.f32.mxu0 0.0
        %363 = vmatmul.mubr.f32.gmra.mrb[0].mxu0 %v266
        %v364 = vpop.f32.mrb[0].mxu0
        %v365 = vadd.f32 0.0, %v364
        %v366 = vpop.f32.mrb[0].mxu0
        %367 = vdwg.mxu0
        %v368 = vadd.f32 %v350, %v355
        %v369 = vadd.f32 %v368, %v360
        %v370 = vadd.f32 %v369, %v365
        %371 = vadd.xlane.f32.xlu0 %v370
        %v372 = vpop.xlane.xlu0 %371
        %v373 = vrot.slane %v372, 4
        %v374 = vadd.f32 %v372, %v373
        %v375 = vrot.slane %v374, 2
        %v376 = vadd.f32 %v374, %v375
        %v377 = vrot.slane %v376, 1
        %v378 = vadd.f32 %v376, %v377
        %s379 = vtos %v378
        %v380 = vstv %s379
        %v381 = vrcp.pop 4096.0
        %v382 = vmul.f32 %v380, %v381
        %v383 = vsub.f32 %v350, %v382
        %v384 = vsub.f32 %v355, %v382
        %v385 = vsub.f32 %v360, %v382
        %v386 = vsub.f32 %v365, %v382
        %v387 = vmul.f32 %v383, %v383
        %v388 = vmul.f32 %v384, %v384
        %v389 = vmul.f32 %v385, %v385
        %v390 = vmul.f32 %v386, %v386
        %v391 = vadd.f32 %v387, %v388
        %v392 = vadd.f32 %v391, %v389
        %v393 = vadd.f32 %v392, %v390
        %394 = vadd.xlane.f32.xlu0 %v393
        %v395 = vpop.xlane.xlu0 %394
        %v396 = vrot.slane %v395, 4
        %v397 = vadd.f32 %v395, %v396
        %v398 = vrot.slane %v397, 2
        %v399 = vadd.f32 %v397, %v398
        %v400 = vrot.slane %v399, 1
        %v401 = vadd.f32 %v399, %v400
        %s402 = vtos %v401
        %v403 = vstv %s402
        %v404 = vmul.f32 %v403, %v381
        %v405 = vadd.f32 %v404, 1e-05
        %v406 = vrsqrt.pop %v405
        %v407 = vmul.f32 %v383, %v406
        %v408 = vmul.f32 %v384, %v406
        %v409 = vmul.f32 %v385, %v406
        %v410 = vmul.f32 %v386, %v406
        %411 = vst [vmem:[%s190] sm:$0xff] %v407
        %412 = vst [vmem:[%s190 + $0x8] sm:$0xff] %v408
        %413 = vst [vmem:[%s190 + $0x10] sm:$0xff] %v409
        %414 = vst [vmem:[%s190 + $0x18] sm:$0xff] %v410
        %s415 = sand.u32 %s115, 1
        %s416 = scalar_lea.sflag [#allocation3], %s415
        %s417 = sand.u32 %s115, 1
        %s418 = smul.addr %s417, 32
        %s419 = scalar_lea.vmem [#allocation2], %s418
        // Predicated region
        $region37: #{_lambda_.7} parent=35 // pred_check
          %p420 = pneg %p125
        $region38: #{_lambda_.7} parent=35 // pred_check_branch
          %422 = sbr.rel (%p420) target = $region40
        $region39: #{_lambda_.7} parent=35 // pred_region
          %s424 = ssub.s32 512, 512
          %425 = vsyncadd %s416, %s424
          %s426 = smul.addr %s18, 4
          %s427 = smul.addr %s426, 128
          %s428 = scalar_lea.hbm %s4, %s427
          %s429 = sshll.u32 %s419, 4
          %s430 = int_to_ptr.vmem [resolvable:$true] %s429
          %435 = dma.vmem_to_hbm [thread:$0]  %s430, 512, %s428, %s416, 128, 128, 8
        $region40: #{_lambda_.7} parent=35 // pred_fallthru
          _
      $region36: #{_lambda_.7} parent=5 // pred_fallthru
        _
      %p436 = scmp.le.s32.totalorder 2, %s13
      // Predicated region
      $region41: #{_lambda_.7} parent=5 // pred_check
        %p437 = pneg %p436
      $region42: #{_lambda_.7} parent=5 // pred_check_branch
        %439 = sbr.rel (%p437) target = $region44
      $region43: #{_lambda_.7} parent=5 // pred_region
        %s440 = ssub.s32 %s13, 2
        // Predicated region
        $region45: #{_lambda_.7} parent=43 // pred_check
          %p441 = pneg %p131
        $region46: #{_lambda_.7} parent=43 // pred_check_branch
          %443 = sbr.rel (%p441) target = $region48
        $region47: #{_lambda_.7} parent=43 // pred_region
          %s444 = sand.u32 %s116, 1
          %s445 = scalar_lea.sflag [#allocation3], %s444
          %s446 = sand.u32 %s116, 1
          %s447 = smul.addr %s446, 32
          %s448 = scalar_lea.vmem [#allocation2], %s447
          %449 = dma.done %s445, 512
        $region48: #{_lambda_.7} parent=43 // pred_fallthru
          _
      $region44: #{_lambda_.7} parent=5 // pred_fallthru
        _
    $region6: #{_lambda_.7} parent=1 // loop_footer
      %s17 = sadd.s32 1, %s13
    $region7: #{_lambda_.7} parent=1 // loop_footer_branch
      %12 = sbr.rel target = $region3
    $region8: #{_lambda_.7} parent=1 // loop_exit
      _
    %450 = vsyncpa [#allocation3], 1
    %s451 = scalar_lea.sflag [#allocation3], 1
    %452 = vsyncpa %s451, 1

// kernel: _lambda_.5
$region0: #{_lambda_.5}
  #allocation0 [shape = 'u32[]', space=smem, size = 0x4, offset = 0x4, fixed_abs, tag = 'smem constant byte address 0x4 - core index']
  #allocation1 [shape = 'u32[144,128]{1,0:T(1,128)}', space=vmem, size = 0x12000, scoped, tag = 'internal scratch']
  %s0 = inlined_call_operand.vmem [shape: f32[2,32,128], index: 0, kind: input, shape index: {}]
  %s1 = inlined_call_operand.vmem [shape: f32[1,128], index: 1, kind: input, shape index: {}]
  %s2 = inlined_call_operand.vmem [shape: f32[1,128], index: 2, kind: input, shape index: {}]
  %s3 = inlined_call_operand.vmem [shape: f32[128,384], index: 3, kind: input, shape index: {}]
  %s4 = inlined_call_operand.vmem [shape: f32[1,384], index: 4, kind: input, shape index: {}]
  %s5 = inlined_call_operand.vmem [shape: f32[128,128], index: 5, kind: input, shape index: {}]
  %s6 = inlined_call_operand.vmem [shape: f32[1,128], index: 6, kind: input, shape index: {}]
  %s7 = inlined_call_operand.vmem [shape: f32[1,128], index: 7, kind: input, shape index: {}]
  %s8 = inlined_call_operand.vmem [shape: f32[1,128], index: 8, kind: input, shape index: {}]
  %s9 = inlined_call_operand.vmem [shape: f32[128,512], index: 9, kind: input, shape index: {}]
  %s10 = inlined_call_operand.vmem [shape: f32[1,512], index: 10, kind: input, shape index: {}]
  %s11 = inlined_call_operand.vmem [shape: f32[512,128], index: 11, kind: input, shape index: {}]
  %s12 = inlined_call_operand.vmem [shape: f32[1,128], index: 12, kind: input, shape index: {}]
  %s13 = inlined_call_operand.vmem [shape: f32[2,32,128], index: 13, kind: output, shape index: {}]
  %s14 = sld [smem:[#allocation0]]
  $region85: #{_lambda_.5} parent=0
    _
  %s16 = ssub.s32 1, %s14
  %s17 = scalar_select 0, %s16, %s14
  loop: start=0, step=1, limit=4
  $region2: #{_lambda_.5} parent=0 // loop_pre_header
    _
  $region3: #{_lambda_.5} parent=0 // loop_header
    %s19 = sphi 0, %s23
    %p20 = scmp.ge.s32.totalorder %s19, 4
    %s29 = sphi 0, %s31
    %s32 = sphi 0, %s29
    %s33 = sphi 0, %s32
    %s49 = sphi 0, %s33
    %s53 = sphi 0, %s53
    %s55 = sphi 0, %s53
    %s56 = sphi 0, %s55
    %s70 = sphi 0, %s56
    %s74 = sphi 0, %s74
    %s76 = sphi 0, %s74
    %s77 = sphi 0, %s76
    %s91 = sphi 0, %s77
    %s95 = sphi 0, %s95
    %s97 = sphi 0, %s95
    %s98 = sphi 0, %s97
    %s112 = sphi 0, %s98
    %s116 = sphi 0, %s116
    %s118 = sphi 0, %s116
    %s119 = sphi 0, %s118
    %s133 = sphi 0, %s119
    %s137 = sphi 0, %s137
    %s139 = sphi 0, %s137
    %s140 = sphi 0, %s139
    %s154 = sphi 0, %s140
    %s158 = sphi 0, %s158
    %s160 = sphi 0, %s158
    %s161 = sphi 0, %s160
    %s175 = sphi 0, %s161
    %s179 = sphi 0, %s179
    %s181 = sphi 0, %s179
    %s182 = sphi 0, %s181
    %s196 = sphi 0, %s182
    %s200 = sphi 0, %s200
    %s202 = sphi 0, %s200
    %s203 = sphi 0, %s202
    %s217 = sphi 0, %s203
    %s221 = sphi 0, %s221
    %s223 = sphi 0, %s221
    %s224 = sphi 0, %s223
    %s238 = sphi 0, %s224
    %s242 = sphi 0, %s242
    %s244 = sphi 0, %s242
    %s245 = sphi 0, %s244
    %s259 = sphi 0, %s245
    %s263 = sphi 0, %s263
    %s265 = sphi 0, %s263
    %s266 = sphi 0, %s265
    %s280 = sphi 0, %s266
    %s284 = sphi 0, %s284
    %s286 = sphi 0, %s284
    %s287 = sphi 0, %s286
    %s301 = sphi 0, %s287
    %s307 = sphi 0, %s309
    %s310 = sphi 0, %s307
    %s311 = sphi 0, %s310
    %s327 = sphi 0, %s311
  $region4: #{_lambda_.5} parent=0 // loop_header_branch
    %22 = sbr.rel (%p20) target = $region8
  $region5: #{_lambda_.5} parent=0 // loop_body
    %s24 = ssub.s32 %s19, 1
    %s25 = ssub.s32 %s19, 2
    %s26 = sadd.s32 %s19, 1
    %s27 = ssub.s32 %s19, %s26
    %p28 = scmp.eq.s32.totalorder %s27, 0
    %s30 = sadd.s32 %s29, 1
    %s31 = scalar_select %p28, %s29, %s30
    %p34 = pneg %p28
    %p35 = scmp.eq.s32.totalorder %s19, 1
    %p36 = por %p34, %p35
    %p37 = scmp.ne.s32.totalorder %s29, %s32
    %p38 = scmp.eq.s32.totalorder %s19, 0
    %p39 = por %p37, %p38
    %p40 = scmp.ne.s32.totalorder %s29, %s32
    %p41 = scmp.eq.s32.totalorder %s24, 1
    %p42 = por %p40, %p41
    %p43 = scmp.ne.s32.totalorder %s32, %s33
    %p44 = scmp.eq.s32.totalorder %s24, 0
    %p45 = por %p43, %p44
    %p46 = scmp.ne.s32.totalorder %s32, %s33
    %p47 = scmp.eq.s32.totalorder %s25, 1
    %p48 = por %p46, %p47
    %p50 = scmp.ne.s32.totalorder %s33, %s49
    %p51 = scmp.eq.s32.totalorder %s25, 0
    %p52 = por %p50, %p51
    %s54 = sadd.s32 %s53, 1
    %p57 = scmp.eq.s32.totalorder %s19, 1
    %p58 = scmp.ne.s32.totalorder %s53, %s55
    %p59 = scmp.eq.s32.totalorder %s19, 0
    %p60 = por %p58, %p59
    %p61 = scmp.ne.s32.totalorder %s53, %s55
    %p62 = scmp.eq.s32.totalorder %s24, 1
    %p63 = por %p61, %p62
    %p64 = scmp.ne.s32.totalorder %s55, %s56
    %p65 = scmp.eq.s32.totalorder %s24, 0
    %p66 = por %p64, %p65
    %p67 = scmp.ne.s32.totalorder %s55, %s56
    %p68 = scmp.eq.s32.totalorder %s25, 1
    %p69 = por %p67, %p68
    %p71 = scmp.ne.s32.totalorder %s56, %s70
    %p72 = scmp.eq.s32.totalorder %s25, 0
    %p73 = por %p71, %p72
    %s75 = sadd.s32 %s74, 1
    %p78 = scmp.eq.s32.totalorder %s19, 1
    %p79 = scmp.ne.s32.totalorder %s74, %s76
    %p80 = scmp.eq.s32.totalorder %s19, 0
    %p81 = por %p79, %p80
    %p82 = scmp.ne.s32.totalorder %s74, %s76
    %p83 = scmp.eq.s32.totalorder %s24, 1
    %p84 = por %p82, %p83
    %p85 = scmp.ne.s32.totalorder %s76, %s77
    %p86 = scmp.eq.s32.totalorder %s24, 0
    %p87 = por %p85, %p86
    %p88 = scmp.ne.s32.totalorder %s76, %s77
    %p89 = scmp.eq.s32.totalorder %s25, 1
    %p90 = por %p88, %p89
    %p92 = scmp.ne.s32.totalorder %s77, %s91
    %p93 = scmp.eq.s32.totalorder %s25, 0
    %p94 = por %p92, %p93
    %s96 = sadd.s32 %s95, 1
    %p99 = scmp.eq.s32.totalorder %s19, 1
    %p100 = scmp.ne.s32.totalorder %s95, %s97
    %p101 = scmp.eq.s32.totalorder %s19, 0
    %p102 = por %p100, %p101
    %p103 = scmp.ne.s32.totalorder %s95, %s97
    %p104 = scmp.eq.s32.totalorder %s24, 1
    %p105 = por %p103, %p104
    %p106 = scmp.ne.s32.totalorder %s97, %s98
    %p107 = scmp.eq.s32.totalorder %s24, 0
    %p108 = por %p106, %p107
    %p109 = scmp.ne.s32.totalorder %s97, %s98
    %p110 = scmp.eq.s32.totalorder %s25, 1
    %p111 = por %p109, %p110
    %p113 = scmp.ne.s32.totalorder %s98, %s112
    %p114 = scmp.eq.s32.totalorder %s25, 0
    %p115 = por %p113, %p114
    %s117 = sadd.s32 %s116, 1
    %p120 = scmp.eq.s32.totalorder %s19, 1
    %p121 = scmp.ne.s32.totalorder %s116, %s118
    %p122 = scmp.eq.s32.totalorder %s19, 0
    %p123 = por %p121, %p122
    %p124 = scmp.ne.s32.totalorder %s116, %s118
    %p125 = scmp.eq.s32.totalorder %s24, 1
    %p126 = por %p124, %p125
    %p127 = scmp.ne.s32.totalorder %s118, %s119
    %p128 = scmp.eq.s32.totalorder %s24, 0
    %p129 = por %p127, %p128
    %p130 = scmp.ne.s32.totalorder %s118, %s119
    %p131 = scmp.eq.s32.totalorder %s25, 1
    %p132 = por %p130, %p131
    %p134 = scmp.ne.s32.totalorder %s119, %s133
    %p135 = scmp.eq.s32.totalorder %s25, 0
    %p136 = por %p134, %p135
    %s138 = sadd.s32 %s137, 1
    %p141 = scmp.eq.s32.totalorder %s19, 1
    %p142 = scmp.ne.s32.totalorder %s137, %s139
    %p143 = scmp.eq.s32.totalorder %s19, 0
    %p144 = por %p142, %p143
    %p145 = scmp.ne.s32.totalorder %s137, %s139
    %p146 = scmp.eq.s32.totalorder %s24, 1
    %p147 = por %p145, %p146
    %p148 = scmp.ne.s32.totalorder %s139, %s140
    %p149 = scmp.eq.s32.totalorder %s24, 0
    %p150 = por %p148, %p149
    %p151 = scmp.ne.s32.totalorder %s139, %s140
    %p152 = scmp.eq.s32.totalorder %s25, 1
    %p153 = por %p151, %p152
    %p155 = scmp.ne.s32.totalorder %s140, %s154
    %p156 = scmp.eq.s32.totalorder %s25, 0
    %p157 = por %p155, %p156
    %s159 = sadd.s32 %s158, 1
    %p162 = scmp.eq.s32.totalorder %s19, 1
    %p163 = scmp.ne.s32.totalorder %s158, %s160
    %p164 = scmp.eq.s32.totalorder %s19, 0
    %p165 = por %p163, %p164
    %p166 = scmp.ne.s32.totalorder %s158, %s160
    %p167 = scmp.eq.s32.totalorder %s24, 1
    %p168 = por %p166, %p167
    %p169 = scmp.ne.s32.totalorder %s160, %s161
    %p170 = scmp.eq.s32.totalorder %s24, 0
    %p171 = por %p169, %p170
    %p172 = scmp.ne.s32.totalorder %s160, %s161
    %p173 = scmp.eq.s32.totalorder %s25, 1
    %p174 = por %p172, %p173
    %p176 = scmp.ne.s32.totalorder %s161, %s175
    %p177 = scmp.eq.s32.totalorder %s25, 0
    %p178 = por %p176, %p177
    %s180 = sadd.s32 %s179, 1
    %p183 = scmp.eq.s32.totalorder %s19, 1
    %p184 = scmp.ne.s32.totalorder %s179, %s181
    %p185 = scmp.eq.s32.totalorder %s19, 0
    %p186 = por %p184, %p185
    %p187 = scmp.ne.s32.totalorder %s179, %s181
    %p188 = scmp.eq.s32.totalorder %s24, 1
    %p189 = por %p187, %p188
    %p190 = scmp.ne.s32.totalorder %s181, %s182
    %p191 = scmp.eq.s32.totalorder %s24, 0
    %p192 = por %p190, %p191
    %p193 = scmp.ne.s32.totalorder %s181, %s182
    %p194 = scmp.eq.s32.totalorder %s25, 1
    %p195 = por %p193, %p194
    %p197 = scmp.ne.s32.totalorder %s182, %s196
    %p198 = scmp.eq.s32.totalorder %s25, 0
    %p199 = por %p197, %p198
    %s201 = sadd.s32 %s200, 1
    %p204 = scmp.eq.s32.totalorder %s19, 1
    %p205 = scmp.ne.s32.totalorder %s200, %s202
    %p206 = scmp.eq.s32.totalorder %s19, 0
    %p207 = por %p205, %p206
    %p208 = scmp.ne.s32.totalorder %s200, %s202
    %p209 = scmp.eq.s32.totalorder %s24, 1
    %p210 = por %p208, %p209
    %p211 = scmp.ne.s32.totalorder %s202, %s203
    %p212 = scmp.eq.s32.totalorder %s24, 0
    %p213 = por %p211, %p212
    %p214 = scmp.ne.s32.totalorder %s202, %s203
    %p215 = scmp.eq.s32.totalorder %s25, 1
    %p216 = por %p214, %p215
    %p218 = scmp.ne.s32.totalorder %s203, %s217
    %p219 = scmp.eq.s32.totalorder %s25, 0
    %p220 = por %p218, %p219
    %s222 = sadd.s32 %s221, 1
    %p225 = scmp.eq.s32.totalorder %s19, 1
    %p226 = scmp.ne.s32.totalorder %s221, %s223
    %p227 = scmp.eq.s32.totalorder %s19, 0
    %p228 = por %p226, %p227
    %p229 = scmp.ne.s32.totalorder %s221, %s223
    %p230 = scmp.eq.s32.totalorder %s24, 1
    %p231 = por %p229, %p230
    %p232 = scmp.ne.s32.totalorder %s223, %s224
    %p233 = scmp.eq.s32.totalorder %s24, 0
    %p234 = por %p232, %p233
    %p235 = scmp.ne.s32.totalorder %s223, %s224
    %p236 = scmp.eq.s32.totalorder %s25, 1
    %p237 = por %p235, %p236
    %p239 = scmp.ne.s32.totalorder %s224, %s238
    %p240 = scmp.eq.s32.totalorder %s25, 0
    %p241 = por %p239, %p240
    %s243 = sadd.s32 %s242, 1
    %p246 = scmp.eq.s32.totalorder %s19, 1
    %p247 = scmp.ne.s32.totalorder %s242, %s244
    %p248 = scmp.eq.s32.totalorder %s19, 0
    %p249 = por %p247, %p248
    %p250 = scmp.ne.s32.totalorder %s242, %s244
    %p251 = scmp.eq.s32.totalorder %s24, 1
    %p252 = por %p250, %p251
    %p253 = scmp.ne.s32.totalorder %s244, %s245
    %p254 = scmp.eq.s32.totalorder %s24, 0
    %p255 = por %p253, %p254
    %p256 = scmp.ne.s32.totalorder %s244, %s245
    %p257 = scmp.eq.s32.totalorder %s25, 1
    %p258 = por %p256, %p257
    %p260 = scmp.ne.s32.totalorder %s245, %s259
    %p261 = scmp.eq.s32.totalorder %s25, 0
    %p262 = por %p260, %p261
    %s264 = sadd.s32 %s263, 1
    %p267 = scmp.eq.s32.totalorder %s19, 1
    %p268 = scmp.ne.s32.totalorder %s263, %s265
    %p269 = scmp.eq.s32.totalorder %s19, 0
    %p270 = por %p268, %p269
    %p271 = scmp.ne.s32.totalorder %s263, %s265
    %p272 = scmp.eq.s32.totalorder %s24, 1
    %p273 = por %p271, %p272
    %p274 = scmp.ne.s32.totalorder %s265, %s266
    %p275 = scmp.eq.s32.totalorder %s24, 0
    %p276 = por %p274, %p275
    %p277 = scmp.ne.s32.totalorder %s265, %s266
    %p278 = scmp.eq.s32.totalorder %s25, 1
    %p279 = por %p277, %p278
    %p281 = scmp.ne.s32.totalorder %s266, %s280
    %p282 = scmp.eq.s32.totalorder %s25, 0
    %p283 = por %p281, %p282
    %s285 = sadd.s32 %s284, 1
    %p288 = scmp.eq.s32.totalorder %s19, 1
    %p289 = scmp.ne.s32.totalorder %s284, %s286
    %p290 = scmp.eq.s32.totalorder %s19, 0
    %p291 = por %p289, %p290
    %p292 = scmp.ne.s32.totalorder %s284, %s286
    %p293 = scmp.eq.s32.totalorder %s24, 1
    %p294 = por %p292, %p293
    %p295 = scmp.ne.s32.totalorder %s286, %s287
    %p296 = scmp.eq.s32.totalorder %s24, 0
    %p297 = por %p295, %p296
    %p298 = scmp.ne.s32.totalorder %s286, %s287
    %p299 = scmp.eq.s32.totalorder %s25, 1
    %p300 = por %p298, %p299
    %p302 = scmp.ne.s32.totalorder %s287, %s301
    %p303 = scmp.eq.s32.totalorder %s25, 0
    %p304 = por %p302, %p303
    %s305 = ssub.s32 %s19, %s26
    %p306 = scmp.eq.s32.totalorder %s305, 0
    %s308 = sadd.s32 %s307, 1
    %s309 = scalar_select %p306, %s307, %s308
    %p312 = pneg %p306
    %p313 = scmp.eq.s32.totalorder %s19, 1
    %p314 = por %p312, %p313
    %p315 = scmp.ne.s32.totalorder %s307, %s310
    %p316 = scmp.eq.s32.totalorder %s19, 0
    %p317 = por %p315, %p316
    %p318 = scmp.ne.s32.totalorder %s307, %s310
    %p319 = scmp.eq.s32.totalorder %s24, 1
    %p320 = por %p318, %p319
    %p321 = scmp.ne.s32.totalorder %s310, %s311
    %p322 = scmp.eq.s32.totalorder %s24, 0
    %p323 = por %p321, %p322
    %p324 = scmp.ne.s32.totalorder %s310, %s311
    %p325 = scmp.eq.s32.totalorder %s25, 1
    %p326 = por %p324, %p325
    %p328 = scmp.ne.s32.totalorder %s311, %s327
    %p329 = scmp.eq.s32.totalorder %s25, 0
    %p330 = por %p328, %p329
    %p331 = scmp.le.s32.totalorder 1, %s19
    %p332 = scmp.lt.s32.totalorder %s19, 3
    %p333 = pnand %p331, %p332
    %p334 = pneg %p333
    // Predicated region
    $region9: #{_lambda_.5} parent=5 // pred_check
      _
    $region10: #{_lambda_.5} parent=5 // pred_check_branch
      %336 = sbr.rel (%p333) target = $region12
    $region11: #{_lambda_.5} parent=5 // pred_region
      %s337 = ssub.s32 %s19, 1
      // Predicated region
      $region13: #{_lambda_.5} parent=11 // pred_check
        %p338 = pneg %p66
      $region14: #{_lambda_.5} parent=11 // pred_check_branch
        %340 = sbr.rel (%p338) target = $region16
      $region15: #{_lambda_.5} parent=11 // pred_region
        _
      $region16: #{_lambda_.5} parent=11 // pred_fallthru
        _
      // Predicated region
      $region17: #{_lambda_.5} parent=11 // pred_check
        %p341 = pneg %p87
      $region18: #{_lambda_.5} parent=11 // pred_check_branch
        %343 = sbr.rel (%p341) target = $region20
      $region19: #{_lambda_.5} parent=11 // pred_region
        _
      $region20: #{_lambda_.5} parent=11 // pred_fallthru
        _
      // Predicated region
      $region21: #{_lambda_.5} parent=11 // pred_check
        %p344 = pneg %p108
      $region22: #{_lambda_.5} parent=11 // pred_check_branch
        %346 = sbr.rel (%p344) target = $region24
      $region23: #{_lambda_.5} parent=11 // pred_region
        _
      $region24: #{_lambda_.5} parent=11 // pred_fallthru
        _
      // Predicated region
      $region25: #{_lambda_.5} parent=11 // pred_check
        %p347 = pneg %p129
      $region26: #{_lambda_.5} parent=11 // pred_check_branch
        %349 = sbr.rel (%p347) target = $region28
      $region27: #{_lambda_.5} parent=11 // pred_region
        _
      $region28: #{_lambda_.5} parent=11 // pred_fallthru
        _
      // Predicated region
      $region29: #{_lambda_.5} parent=11 // pred_check
        %p350 = pneg %p150
      $region30: #{_lambda_.5} parent=11 // pred_check_branch
        %352 = sbr.rel (%p350) target = $region32
      $region31: #{_lambda_.5} parent=11 // pred_region
        _
      $region32: #{_lambda_.5} parent=11 // pred_fallthru
        _
      // Predicated region
      $region33: #{_lambda_.5} parent=11 // pred_check
        %p353 = pneg %p171
      $region34: #{_lambda_.5} parent=11 // pred_check_branch
        %355 = sbr.rel (%p353) target = $region36
      $region35: #{_lambda_.5} parent=11 // pred_region
        _
      $region36: #{_lambda_.5} parent=11 // pred_fallthru
        _
      // Predicated region
      $region37: #{_lambda_.5} parent=11 // pred_check
        %p356 = pneg %p192
      $region38: #{_lambda_.5} parent=11 // pred_check_branch
        %358 = sbr.rel (%p356) target = $region40
      $region39: #{_lambda_.5} parent=11 // pred_region
        _
      $region40: #{_lambda_.5} parent=11 // pred_fallthru
        _
      // Predicated region
      $region41: #{_lambda_.5} parent=11 // pred_check
        %p359 = pneg %p213
      $region42: #{_lambda_.5} parent=11 // pred_check_branch
        %361 = sbr.rel (%p359) target = $region44
      $region43: #{_lambda_.5} parent=11 // pred_region
        _
      $region44: #{_lambda_.5} parent=11 // pred_fallthru
        _
      // Predicated region
      $region45: #{_lambda_.5} parent=11 // pred_check
        %p362 = pneg %p234
      $region46: #{_lambda_.5} parent=11 // pred_check_branch
        %364 = sbr.rel (%p362) target = $region48
      $region47: #{_lambda_.5} parent=11 // pred_region
        _
      $region48: #{_lambda_.5} parent=11 // pred_fallthru
        _
      // Predicated region
      $region49: #{_lambda_.5} parent=11 // pred_check
        %p365 = pneg %p255
      $region50: #{_lambda_.5} parent=11 // pred_check_branch
        %367 = sbr.rel (%p365) target = $region52
      $region51: #{_lambda_.5} parent=11 // pred_region
        _
      $region52: #{_lambda_.5} parent=11 // pred_fallthru
        _
      // Predicated region
      $region53: #{_lambda_.5} parent=11 // pred_check
        %p368 = pneg %p276
      $region54: #{_lambda_.5} parent=11 // pred_check_branch
        %370 = sbr.rel (%p368) target = $region56
      $region55: #{_lambda_.5} parent=11 // pred_region
        _
      $region56: #{_lambda_.5} parent=11 // pred_fallthru
        _
      // Predicated region
      $region57: #{_lambda_.5} parent=11 // pred_check
        %p371 = pneg %p297
      $region58: #{_lambda_.5} parent=11 // pred_check_branch
        %373 = sbr.rel (%p371) target = $region60
      $region59: #{_lambda_.5} parent=11 // pred_region
        _
      $region60: #{_lambda_.5} parent=11 // pred_fallthru
        _
    $region12: #{_lambda_.5} parent=5 // pred_fallthru
      _
    %p374 = scmp.lt.s32.totalorder %s19, 2
    // Predicated region
    $region61: #{_lambda_.5} parent=5 // pred_check
      %p375 = pneg %p374
    $region62: #{_lambda_.5} parent=5 // pred_check_branch
      %377 = sbr.rel (%p375) target = $region64
    $region63: #{_lambda_.5} parent=5 // pred_region
      // Predicated region
      $region65: #{_lambda_.5} parent=63 // pred_check
        %p378 = pneg %p39
      $region66: #{_lambda_.5} parent=63 // pred_check_branch
        %380 = sbr.rel (%p378) target = $region68
      $region67: #{_lambda_.5} parent=63 // pred_region
        %p381 = scmp.lt.s32.totalorder %s19, 1
        %s382 = scalar_select %p381, %s19, 1
        %s383 = smul.addr %s382, 4
        %s384 = smul.addr %s383, 8
        %s385 = scalar_lea.vmem %s0, %s384
      $region68: #{_lambda_.5} parent=63 // pred_fallthru
        _
    $region64: #{_lambda_.5} parent=5 // pred_fallthru
      _
    %p386 = scmp.le.s32.totalorder 1, %s19
    %p387 = scmp.lt.s32.totalorder %s19, 3
    %p388 = pnand %p386, %p387
    %p389 = pneg %p388
    // Predicated region
    $region69: #{_lambda_.5} parent=5 // pred_check
      _
    $region70: #{_lambda_.5} parent=5 // pred_check_branch
      %391 = sbr.rel (%p388) target = $region72
    $region71: #{_lambda_.5} parent=5 // pred_region
      %s392 = ssub.s32 %s19, 1
      %p393 = scmp.lt.s32.totalorder %s24, 1
      %s394 = scalar_select %p393, %s24, 1
      %s395 = smul.addr %s394, 4
      %s396 = smul.addr %s395, 8
      %s397 = scalar_lea.vmem %s0, %s396
      %p398 = pneg %p45
      %p399 = pneg %p42
      %p400 = pneg %p66
      %p401 = pneg %p63
      %p402 = pneg %p87
      %p403 = pneg %p84
      %p404 = pneg %p108
      %p405 = pneg %p105
      %p406 = pneg %p129
      %p407 = pneg %p126
      %p408 = pneg %p150
      %p409 = pneg %p147
      %p410 = pneg %p171
      %p411 = pneg %p168
      %p412 = pneg %p192
      %p413 = pneg %p189
      %p414 = pneg %p213
      %p415 = pneg %p210
      %p416 = pneg %p234
      %p417 = pneg %p231
      %p418 = pneg %p255
      %p419 = pneg %p252
      %p420 = pneg %p276
      %p421 = pneg %p273
      %p422 = pneg %p297
      %p423 = pneg %p294
      %p424 = pneg %p323
      %p425 = pneg %p320
      %p426 = scmp.lt.s32.totalorder %s24, 1
      %s427 = scalar_select %p426, %s24, 1
      %s428 = smul.addr %s427, 4
      %s429 = smul.addr %s428, 8
      %s430 = scalar_lea.vmem %s13, %s429
      %p431 = scmp.lt.s32.totalorder %s24, 1
      %s432 = scalar_select %p431, %s24, 1
      %s433 = smul.addr %s432, 4
      %s434 = smul.addr %s433, 8
      %s435 = scalar_lea.vmem %s0, %s434
      %p436 = scmp.lt.s32.totalorder %s24, 1
      %s437 = scalar_select %p436, %s24, 1
      %s438 = smul.addr %s437, 4
      %s439 = smul.addr %s438, 8
      %s440 = scalar_lea.vmem %s13, %s439
      %v441 = vld [vmem:[%s435] sm:$0xff]
      %v442 = vld [vmem:[%s435 + $0x8] sm:$0xff]
      %v443 = vld [vmem:[%s435 + $0x10] sm:$0xff]
      %v444 = vld [vmem:[%s435 + $0x18] sm:$0xff]
      %v445 = vld [vmem:[%s1] sm:$0x1]
      %v446 = vld [vmem:[%s2] sm:$0x1]
      %447 = vadd.xlane.f32.xlu0 %v441
      %v448 = vpop.xlane.xlu0 %447
      %449 = vadd.xlane.f32.xlu0 %v442
      %v450 = vpop.xlane.xlu0 %449
      %451 = vadd.xlane.f32.xlu0 %v443
      %v452 = vpop.xlane.xlu0 %451
      %453 = vadd.xlane.f32.xlu0 %v444
      %v454 = vpop.xlane.xlu0 %453
      %v455 = vrcp.pop 128.0
      %v456 = vmul.f32 %v448, %v455
      %v457 = vmul.f32 %v450, %v455
      %v458 = vmul.f32 %v452, %v455
      %v459 = vmul.f32 %v454, %v455
      %v460 = vsub.f32 %v441, %v456
      %v461 = vsub.f32 %v442, %v457
      %v462 = vsub.f32 %v443, %v458
      %v463 = vsub.f32 %v444, %v459
      %v464 = vmul.f32 %v460, %v460
      %v465 = vmul.f32 %v461, %v461
      %v466 = vmul.f32 %v462, %v462
      %v467 = vmul.f32 %v463, %v463
      %468 = vadd.xlane.f32.xlu0 %v464
      %v469 = vpop.xlane.xlu0 %468
      %470 = vadd.xlane.f32.xlu0 %v465
      %v471 = vpop.xlane.xlu0 %470
      %472 = vadd.xlane.f32.xlu0 %v466
      %v473 = vpop.xlane.xlu0 %472
      %474 = vadd.xlane.f32.xlu0 %v467
      %v475 = vpop.xlane.xlu0 %474
      %v476 = vmul.f32 %v469, %v455
      %v477 = vmul.f32 %v471, %v455
      %v478 = vmul.f32 %v473, %v455
      %v479 = vmul.f32 %v475, %v455
      %v480 = vadd.f32 %v476, 1e-05
      %v481 = vadd.f32 %v477, 1e-05
      %v482 = vadd.f32 %v478, 1e-05
      %v483 = vadd.f32 %v479, 1e-05
      %v484 = vrsqrt.pop %v480
      %v485 = vrsqrt.pop %v481
      %v486 = vrsqrt.pop %v482
      %v487 = vrsqrt.pop %v483
      %v488 = vmul.f32 %v460, %v484
      %v489 = vmul.f32 %v461, %v485
      %v490 = vmul.f32 %v462, %v486
      %v491 = vmul.f32 %v463, %v487
      %v493 = vlaneseq
      %v494 = vshrl.u32 %v493, 7
      %v495 = vsub.s32 0, %v494
      %v496 = vrot.slane %v445, %v495
      %v498 = vmul.f32 %v488, %v496
      %v499 = vmul.f32 %v489, %v496
      %v500 = vmul.f32 %v490, %v496
      %v501 = vmul.f32 %v491, %v496
      %v503 = vlaneseq
      %v504 = vshrl.u32 %v503, 7
      %v505 = vsub.s32 0, %v504
      %v506 = vrot.slane %v446, %v505
      %v508 = vadd.f32 %v498, %v506
      %v509 = vadd.f32 %v499, %v506
      %v510 = vadd.f32 %v500, %v506
      %v511 = vadd.f32 %v501, %v506
      %v512 = vld [vmem:[%s3] sm:$0xff]
      %v513 = vld [vmem:[%s3 + $0x8] sm:$0xff]
      %v514 = vld [vmem:[%s3 + $0x10] sm:$0xff]
      %v515 = vld [vmem:[%s3 + $0x18] sm:$0xff]
      %v516 = vld [vmem:[%s3 + $0x20] sm:$0xff]
      %v517 = vld [vmem:[%s3 + $0x28] sm:$0xff]
      %v518 = vld [vmem:[%s3 + $0x30] sm:$0xff]
      %v519 = vld [vmem:[%s3 + $0x38] sm:$0xff]
      %v520 = vld [vmem:[%s3 + $0x40] sm:$0xff]
      %v521 = vld [vmem:[%s3 + $0x48] sm:$0xff]
      %v522 = vld [vmem:[%s3 + $0x50] sm:$0xff]
      %v523 = vld [vmem:[%s3 + $0x58] sm:$0xff]
      %v524 = vld [vmem:[%s3 + $0x60] sm:$0xff]
      %v525 = vld [vmem:[%s3 + $0x68] sm:$0xff]
      %v526 = vld [vmem:[%s3 + $0x70] sm:$0xff]
      %v527 = vld [vmem:[%s3 + $0x78] sm:$0xff]
      %v528 = vld [vmem:[%s3 + $0x80] sm:$0xff]
      %v529 = vld [vmem:[%s3 + $0x88] sm:$0xff]
      %v530 = vld [vmem:[%s3 + $0x90] sm:$0xff]
      %v531 = vld [vmem:[%s3 + $0x98] sm:$0xff]
      %v532 = vld [vmem:[%s3 + $0xa0] sm:$0xff]
      %v533 = vld [vmem:[%s3 + $0xa8] sm:$0xff]
      %v534 = vld [vmem:[%s3 + $0xb0] sm:$0xff]
      %v535 = vld [vmem:[%s3 + $0xb8] sm:$0xff]
      %v536 = vld [vmem:[%s3 + $0xc0] sm:$0xff]
      %v537 = vld [vmem:[%s3 + $0xc8] sm:$0xff]
      %v538 = vld [vmem:[%s3 + $0xd0] sm:$0xff]
      %v539 = vld [vmem:[%s3 + $0xd8] sm:$0xff]
      %v540 = vld [vmem:[%s3 + $0xe0] sm:$0xff]
      %v541 = vld [vmem:[%s3 + $0xe8] sm:$0xff]
      %v542 = vld [vmem:[%s3 + $0xf0] sm:$0xff]
      %v543 = vld [vmem:[%s3 + $0xf8] sm:$0xff]
      %v544 = vld [vmem:[%s3 + $0x100] sm:$0xff]
      %v545 = vld [vmem:[%s3 + $0x108] sm:$0xff]
      %v546 = vld [vmem:[%s3 + $0x110] sm:$0xff]
      %v547 = vld [vmem:[%s3 + $0x118] sm:$0xff]
      %v548 = vld [vmem:[%s3 + $0x120] sm:$0xff]
      %v549 = vld [vmem:[%s3 + $0x128] sm:$0xff]
      %v550 = vld [vmem:[%s3 + $0x130] sm:$0xff]
      %v551 = vld [vmem:[%s3 + $0x138] sm:$0xff]
      %v552 = vld [vmem:[%s3 + $0x140] sm:$0xff]
      %v553 = vld [vmem:[%s3 + $0x148] sm:$0xff]
      %v554 = vld [vmem:[%s3 + $0x150] sm:$0xff]
      %v555 = vld [vmem:[%s3 + $0x158] sm:$0xff]
      %v556 = vld [vmem:[%s3 + $0x160] sm:$0xff]
      %v557 = vld [vmem:[%s3 + $0x168] sm:$0xff]
      %v558 = vld [vmem:[%s3 + $0x170] sm:$0xff]
      %v559 = vld [vmem:[%s3 + $0x178] sm:$0xff]
      %v560 = vld [vmem:[%s4] sm:$0x7]
      %v562 = vlaneseq
      %v563 = vshrl.u32 %v562, 7
      %v564 = vsub.s32 0, %v563
      %v565 = vrot.slane %v560, %v564
      %v566 = vlaneseq
      %v567 = vshrl.u32 %v566, 7
      %v568 = vsub.s32 1, %v567
      %v569 = vrot.slane %v560, %v568
      %v570 = vlaneseq
      %v571 = vshrl.u32 %v570, 7
      %v572 = vsub.s32 2, %v571
      %v573 = vrot.slane %v560, %v572
      %577 = vmatprep.subr.mxu0 %v513
      %578 = vmatpush1.msra.mxu0 %v512
      %579 = vmatprep.subr.mxu0 %v516
      %580 = vmatpush1.msra.mxu0 %v515
      %581 = vmatprep.subr.mxu0 %v519
      %582 = vmatpush1.msra.mxu0 %v518
      %583 = vmatprep.subr.mxu0 %v522
      %584 = vmatpush1.msra.mxu0 %v521
      %585 = vmatprep.subr.mxu0 %v525
      %586 = vmatpush1.msra.mxu0 %v524
      %587 = vmatprep.subr.mxu0 %v528
      %588 = vmatpush1.msra.mxu0 %v527
      %589 = vmatprep.subr.mxu0 %v531
      %590 = vmatpush1.msra.mxu0 %v530
      %591 = vmatprep.subr.mxu0 %v534
      %592 = vmatpush1.msra.mxu0 %v533
      %593 = vmatprep.subr.mxu0 %v537
      %594 = vmatpush1.msra.mxu0 %v536
      %595 = vmatprep.subr.mxu0 %v540
      %596 = vmatpush1.msra.mxu0 %v539
      %597 = vmatprep.subr.mxu0 %v543
      %598 = vmatpush1.msra.mxu0 %v542
      %599 = vmatprep.subr.mxu0 %v546
      %600 = vmatpush1.msra.mxu0 %v545
      %601 = vmatprep.subr.mxu0 %v549
      %602 = vmatpush1.msra.mxu0 %v548
      %603 = vmatprep.subr.mxu0 %v552
      %604 = vmatpush1.msra.mxu0 %v551
      %605 = vmatprep.subr.mxu0 %v555
      %606 = vmatpush1.msra.mxu0 %v554
      %607 = vmatprep.subr.mxu0 %v558
      %608 = vmatpush1.msra.mxu0 %v557
      %609 = vmatprep.subr.mxu0 0.0
      %610 = vmatpush1.msra.mxu0 0.0
      %611 = vmatprep.subr.mxu0 0.0
      %612 = vmatpush1.msra.mxu0 0.0
      %613 = vmatprep.subr.mxu0 0.0
      %614 = vmatpush1.msra.mxu0 0.0
      %615 = vmatprep.subr.mxu0 0.0
      %616 = vmatpush1.msra.mxu0 0.0
      %617 = vmatprep.subr.mxu0 0.0
      %618 = vmatpush1.msra.mxu0 0.0
      %619 = vmatprep.subr.mxu0 0.0
      %620 = vmatpush1.msra.mxu0 0.0
      %621 = vmatprep.subr.mxu0 0.0
      %622 = vmatpush1.msra.mxu0 0.0
      %623 = vmatprep.subr.mxu0 0.0
      %624 = vmatpush1.msra.mxu0 0.0
      %625 = vmatprep.subr.mxu0 0.0
      %626 = vmatpush1.msra.mxu0 0.0
      %627 = vmatprep.subr.mxu0 0.0
      %628 = vmatpush1.msra.mxu0 0.0
      %629 = vmatprep.subr.mxu0 0.0
      %630 = vmatpush1.msra.mxu0 0.0
      %631 = vmatprep.subr.mxu0 0.0
      %632 = vmatpush1.msra.mxu0 0.0
      %633 = vmatprep.subr.mxu0 0.0
      %634 = vmatpush1.msra.mxu0 0.0
      %635 = vmatprep.subr.mxu0 0.0
      %636 = vmatpush1.msra.mxu0 0.0
      %637 = vmatprep.subr.mxu0 0.0
      %638 = vmatpush1.msra.mxu0 0.0
      %639 = vmatprep.subr.mxu0 0.0
      %640 = vmatpush1.msra.mxu0 0.0
      %641 = vmatprep.mubr.f32.mxu0 0.0
      %642 = vmatmul.mubr.f32.gmra.mrb[0].mxu0 %v508
      %v643 = vpop.f32.mrb[0].mxu0
      %v644 = vadd.f32 %v565, %v643
      %v645 = vpop.f32.mrb[0].mxu0
      %v646 = vadd.f32 %v569, %v645
      %647 = vmatprep.mubr.f32.mxu0 0.0
      %648 = vmatmul.mubr.f32.gmra.mrb[0].mxu0 %v509
      %v649 = vpop.f32.mrb[0].mxu0
      %v650 = vadd.f32 %v565, %v649
      %v651 = vpop.f32.mrb[0].mxu0
      %v652 = vadd.f32 %v569, %v651
      %653 = vmatprep.mubr.f32.mxu0 0.0
      %654 = vmatmul.mubr.f32.gmra.mrb[0].mxu0 %v510
      %v655 = vpop.f32.mrb[0].mxu0
      %v656 = vadd.f32 %v565, %v655
      %v657 = vpop.f32.mrb[0].mxu0
      %v658 = vadd.f32 %v569, %v657
      %659 = vmatprep.mubr.f32.mxu0 0.0
      %660 = vmatmul.mubr.f32.gmra.mrb[0].mxu0 %v511
      %v661 = vpop.f32.mrb[0].mxu0
      %v662 = vadd.f32 %v565, %v661
      %v663 = vpop.f32.mrb[0].mxu0
      %v664 = vadd.f32 %v569, %v663
      %665 = vdwg.mxu0
      %666 = vmatprep.subr.mxu0 0.0
      %667 = vmatpush1.msra.mxu0 %v514
      %668 = vmatprep.subr.mxu0 0.0
      %669 = vmatpush1.msra.mxu0 %v517
      %670 = vmatprep.subr.mxu0 0.0
      %671 = vmatpush1.msra.mxu0 %v520
      %672 = vmatprep.subr.mxu0 0.0
      %673 = vmatpush1.msra.mxu0 %v523
      %674 = vmatprep.subr.mxu0 0.0
      %675 = vmatpush1.msra.mxu0 %v526
      %676 = vmatprep.subr.mxu0 0.0
      %677 = vmatpush1.msra.mxu0 %v529
      %678 = vmatprep.subr.mxu0 0.0
      %679 = vmatpush1.msra.mxu0 %v532
      %680 = vmatprep.subr.mxu0 0.0
      %681 = vmatpush1.msra.mxu0 %v535
      %682 = vmatprep.subr.mxu0 0.0
      %683 = vmatpush1.msra.mxu0 %v538
      %684 = vmatprep.subr.mxu0 0.0
      %685 = vmatpush1.msra.mxu0 %v541
      %686 = vmatprep.subr.mxu0 0.0
      %687 = vmatpush1.msra.mxu0 %v544
      %688 = vmatprep.subr.mxu0 0.0
      %689 = vmatpush1.msra.mxu0 %v547
      %690 = vmatprep.subr.mxu0 0.0
      %691 = vmatpush1.msra.mxu0 %v550
      %692 = vmatprep.subr.mxu0 0.0
      %693 = vmatpush1.msra.mxu0 %v553
      %694 = vmatprep.subr.mxu0 0.0
      %695 = vmatpush1.msra.mxu0 %v556
      %696 = vmatprep.subr.mxu0 0.0
      %697 = vmatpush1.msra.mxu0 %v559
      %698 = vmatprep.subr.mxu0 0.0
      %699 = vmatpush1.msra.mxu0 0.0
      %700 = vmatprep.subr.mxu0 0.0
      %701 = vmatpush1.msra.mxu0 0.0
      %702 = vmatprep.subr.mxu0 0.0
      %703 = vmatpush1.msra.mxu0 0.0
      %704 = vmatprep.subr.mxu0 0.0
      %705 = vmatpush1.msra.mxu0 0.0
      %706 = vmatprep.subr.mxu0 0.0
      %707 = vmatpush1.msra.mxu0 0.0
      %708 = vmatprep.subr.mxu0 0.0
      %709 = vmatpush1.msra.mxu0 0.0
      %710 = vmatprep.subr.mxu0 0.0
      %711 = vmatpush1.msra.mxu0 0.0
      %712 = vmatprep.subr.mxu0 0.0
      %713 = vmatpush1.msra.mxu0 0.0
      %714 = vmatprep.subr.mxu0 0.0
      %715 = vmatpush1.msra.mxu0 0.0
      %716 = vmatprep.subr.mxu0 0.0
      %717 = vmatpush1.msra.mxu0 0.0
      %718 = vmatprep.subr.mxu0 0.0
      %719 = vmatpush1.msra.mxu0 0.0
      %720 = vmatprep.subr.mxu0 0.0
      %721 = vmatpush1.msra.mxu0 0.0
      %722 = vmatprep.subr.mxu0 0.0
      %723 = vmatpush1.msra.mxu0 0.0
      %724 = vmatprep.subr.mxu0 0.0
      %725 = vmatpush1.msra.mxu0 0.0
      %726 = vmatprep.subr.mxu0 0.0
      %727 = vmatpush1.msra.mxu0 0.0
      %728 = vmatprep.subr.mxu0 0.0
      %729 = vmatpush1.msra.mxu0 0.0
      %730 = vmatprep.mubr.f32.mxu0 0.0
      %731 = vmatmul.mubr.f32.gmra.mrb[0].mxu0 %v508
      %v732 = vpop.f32.mrb[0].mxu0
      %v733 = vadd.f32 %v573, %v732
      %v734 = vpop.f32.mrb[0].mxu0
      %735 = vmatprep.mubr.f32.mxu0 0.0
      %736 = vmatmul.mubr.f32.gmra.mrb[0].mxu0 %v509
      %v737 = vpop.f32.mrb[0].mxu0
      %v738 = vadd.f32 %v573, %v737
      %v739 = vpop.f32.mrb[0].mxu0
      %740 = vmatprep.mubr.f32.mxu0 0.0
      %741 = vmatmul.mubr.f32.gmra.mrb[0].mxu0 %v510
      %v742 = vpop.f32.mrb[0].mxu0
      %v743 = vadd.f32 %v573, %v742
      %v744 = vpop.f32.mrb[0].mxu0
      %745 = vmatprep.mubr.f32.mxu0 0.0
      %746 = vmatmul.mubr.f32.gmra.mrb[0].mxu0 %v511
      %v747 = vpop.f32.mrb[0].mxu0
      %v748 = vadd.f32 %v573, %v747
      %v749 = vpop.f32.mrb[0].mxu0
      %750 = vdwg.mxu0
      %v751 = vlaneseq
      %v752 = vshrl.u32 %v751, 7
      %v753 = vadd.s32 %v752, 8
      %v754 = vadd.s32 %v752, 16
      %v755 = vadd.s32 %v752, 24
      %v756 = vlaneseq
      %v757 = vand.u32 %v756, 127
      %vm758 = vcmp.ge.s32.totalorder %v752, %v757
      %vm759 = vcmp.ge.s32.totalorder %v753, %v757
      %vm760 = vcmp.ge.s32.totalorder %v754, %v757
      %vm761 = vcmp.ge.s32.totalorder %v755, %v757
      %vm762 = vcmask 261120
      %v764 = vsel %vm762, %v644, 0
      %v767 = vsel %vm762, %v650, 0
      %v770 = vsel %vm762, %v656, 0
      %v773 = vsel %vm762, %v662, 0
      %v776 = vsel %vm762, %v646, 0
      %v779 = vsel %vm762, %v652, 0
      %v782 = vsel %vm762, %v658, 0
      %v785 = vsel %vm762, %v664, 0
      %787 = vmatprep.subr.mxu0 0.0
      %788 = vmatpush1.xpose.msra.mxu0 %v776
      %789 = vmatprep.subr.mxu0 0.0
      %790 = vmatpush1.xpose.msra.mxu0 %v779
      %791 = vmatprep.subr.mxu0 0.0
      %792 = vmatpush1.xpose.msra.mxu0 %v782
      %793 = vmatprep.subr.mxu0 0.0
      %794 = vmatpush1.xpose.msra.mxu0 %v785
      %795 = vmatprep.subr.mxu0 0.0
      %796 = vmatpush1.xpose.msra.mxu0 0.0
      %797 = vmatprep.subr.mxu0 0.0
      %798 = vmatpush1.xpose.msra.mxu0 0.0
      %799 = vmatprep.subr.mxu0 0.0
      %800 = vmatpush1.xpose.msra.mxu0 0.0
      %801 = vmatprep.subr.mxu0 0.0
      %802 = vmatpush1.xpose.msra.mxu0 0.0
      %803 = vmatprep.subr.mxu0 0.0
      %804 = vmatpush1.xpose.msra.mxu0 0.0
      %805 = vmatprep.subr.mxu0 0.0
      %806 = vmatpush1.xpose.msra.mxu0 0.0
      %807 = vmatprep.subr.mxu0 0.0
      %808 = vmatpush1.xpose.msra.mxu0 0.0
      %809 = vmatprep.subr.mxu0 0.0
      %810 = vmatpush1.xpose.msra.mxu0 0.0
      %811 = vmatprep.subr.mxu0 0.0
      %812 = vmatpush1.xpose.msra.mxu0 0.0
      %813 = vmatprep.subr.mxu0 0.0
      %814 = vmatpush1.xpose.msra.mxu0 0.0
      %815 = vmatprep.subr.mxu0 0.0
      %816 = vmatpush1.xpose.msra.mxu0 0.0
      %817 = vmatprep.subr.mxu0 0.0
      %818 = vmatpush1.xpose.msra.mxu0 0.0
      %819 = vmatprep.subr.mxu0 0.0
      %820 = vmatpush1.xpose.msra.mxu0 0.0
      %821 = vmatprep.subr.mxu0 0.0
      %822 = vmatpush1.xpose.msra.mxu0 0.0
      %823 = vmatprep.subr.mxu0 0.0
      %824 = vmatpush1.xpose.msra.mxu0 0.0
      %825 = vmatprep.subr.mxu0 0.0
      %826 = vmatpush1.xpose.msra.mxu0 0.0
      %827 = vmatprep.subr.mxu0 0.0
      %828 = vmatpush1.xpose.msra.mxu0 0.0
      %829 = vmatprep.subr.mxu0 0.0
      %830 = vmatpush1.xpose.msra.mxu0 0.0
      %831 = vmatprep.subr.mxu0 0.0
      %832 = vmatpush1.xpose.msra.mxu0 0.0
      %833 = vmatprep.subr.mxu0 0.0
      %834 = vmatpush1.xpose.msra.mxu0 0.0
      %835 = vmatprep.subr.mxu0 0.0
      %836 = vmatpush1.xpose.msra.mxu0 0.0
      %837 = vmatprep.subr.mxu0 0.0
      %838 = vmatpush1.xpose.msra.mxu0 0.0
      %839 = vmatprep.subr.mxu0 0.0
      %840 = vmatpush1.xpose.msra.mxu0 0.0
      %841 = vmatprep.subr.mxu0 0.0
      %842 = vmatpush1.xpose.msra.mxu0 0.0
      %843 = vmatprep.subr.mxu0 0.0
      %844 = vmatpush1.xpose.msra.mxu0 0.0
      %845 = vmatprep.subr.mxu0 0.0
      %846 = vmatpush1.xpose.msra.mxu0 0.0
      %847 = vmatprep.subr.mxu0 0.0
      %848 = vmatpush1.xpose.msra.mxu0 0.0
      %849 = vmatprep.subr.mxu0 0.0
      %850 = vmatpush1.xpose.msra.mxu0 0.0
      %851 = vmatprep.mubr.f32.mxu0 0.0
      %852 = vmatmul.mubr.f32.gmra.mrb[0].mxu0 %v764
      %v853 = vpop.f32.mrb[0].mxu0
      %v854 = vadd.f32 0.0, %v853
      %v855 = vpop.f32.mrb[0].mxu0
      %856 = vmatprep.mubr.f32.mxu0 0.0
      %857 = vmatmul.mubr.f32.gmra.mrb[0].mxu0 %v767
      %v858 = vpop.f32.mrb[0].mxu0
      %v859 = vadd.f32 0.0, %v858
      %v860 = vpop.f32.mrb[0].mxu0
      %861 = vmatprep.mubr.f32.mxu0 0.0
      %862 = vmatmul.mubr.f32.gmra.mrb[0].mxu0 %v770
      %v863 = vpop.f32.mrb[0].mxu0
      %v864 = vadd.f32 0.0, %v863
      %v865 = vpop.f32.mrb[0].mxu0
      %866 = vmatprep.mubr.f32.mxu0 0.0
      %867 = vmatmul.mubr.f32.gmra.mrb[0].mxu0 %v773
      %v868 = vpop.f32.mrb[0].mxu0
      %v869 = vadd.f32 0.0, %v868
      %v870 = vpop.f32.mrb[0].mxu0
      %871 = vdwg.mxu0
      %v872 = vmul.f32 %v854, 0.17677669
      %v873 = vmul.f32 %v859, 0.17677669
      %v874 = vmul.f32 %v864, 0.17677669
      %v875 = vmul.f32 %v869, 0.17677669
      %v876 = vsel %vm758, %v872, -1e+30
      %v877 = vsel %vm759, %v873, -1e+30
      %v878 = vsel %vm760, %v874, -1e+30
      %v879 = vsel %vm761, %v875, -1e+30
      %v880 = vsel %vm762, %v876, -inf
      %881 = vmax.xlane.f32.xlu0 %v880
      %v882 = vpop.xlane.xlu0 %881
      %v883 = vsel %vm762, %v877, -inf
      %884 = vmax.xlane.f32.xlu0 %v883
      %v885 = vpop.xlane.xlu0 %884
      %v886 = vsel %vm762, %v878, -inf
      %887 = vmax.xlane.f32.xlu0 %v886
      %v888 = vpop.xlane.xlu0 %887
      %v889 = vsel %vm762, %v879, -inf
      %890 = vmax.xlane.f32.xlu0 %v889
      %v891 = vpop.xlane.xlu0 %890
      %v892 = vsub.f32 %v876, %v882
      %v893 = vsub.f32 %v877, %v885
      %v894 = vsub.f32 %v878, %v888
      %v895 = vsub.f32 %v879, %v891
      %v896 = vmul.f32 %v892, 1.442695
      %v897 = vpow.pop %v896
      %v898 = vmul.f32 %v893, 1.442695
      %v899 = vpow.pop %v898
      %v900 = vmul.f32 %v894, 1.442695
      %v901 = vpow.pop %v900
      %v902 = vmul.f32 %v895, 1.442695
      %v903 = vpow.pop %v902
      %v904 = vsel %vm762, %v897, 0.0
      %905 = vadd.xlane.f32.xlu0 %v904
      %v906 = vpop.xlane.xlu0 %905
      %v907 = vsel %vm762, %v899, 0.0
      %908 = vadd.xlane.f32.xlu0 %v907
      %v909 = vpop.xlane.xlu0 %908
      %v910 = vsel %vm762, %v901, 0.0
      %911 = vadd.xlane.f32.xlu0 %v910
      %v912 = vpop.xlane.xlu0 %911
      %v913 = vsel %vm762, %v903, 0.0
      %914 = vadd.xlane.f32.xlu0 %v913
      %v915 = vpop.xlane.xlu0 %914
      %v916 = vrcp.pop %v906
      %v917 = vrcp.pop %v909
      %v918 = vrcp.pop %v912
      %v919 = vrcp.pop %v915
      %v920 = vmul.f32 %v897, %v916
      %v921 = vmul.f32 %v899, %v917
      %v922 = vmul.f32 %v901, %v918
      %v923 = vmul.f32 %v903, %v919
      %v925 = vsel %vm762, %v920, 0
      %v928 = vsel %vm762, %v921, 0
      %v931 = vsel %vm762, %v922, 0
      %v934 = vsel %vm762, %v923, 0
      %936 = vmatprep.subr.mxu0 0.0
      %937 = vmatpush1.msra.mxu0 %v733
      %938 = vmatprep.subr.mxu0 0.0
      %939 = vmatpush1.msra.mxu0 %v738
      %940 = vmatprep.subr.mxu0 0.0
      %941 = vmatpush1.msra.mxu0 %v743
      %942 = vmatprep.subr.mxu0 0.0
      %943 = vmatpush1.msra.mxu0 %v748
      %944 = vmatprep.subr.mxu0 0.0
      %945 = vmatpush1.msra.mxu0 0.0
      %946 = vmatprep.subr.mxu0 0.0
      %947 = vmatpush1.msra.mxu0 0.0
      %948 = vmatprep.subr.mxu0 0.0
      %949 = vmatpush1.msra.mxu0 0.0
      %950 = vmatprep.subr.mxu0 0.0
      %951 = vmatpush1.msra.mxu0 0.0
      %952 = vmatprep.subr.mxu0 0.0
      %953 = vmatpush1.msra.mxu0 0.0
      %954 = vmatprep.subr.mxu0 0.0
      %955 = vmatpush1.msra.mxu0 0.0
      %956 = vmatprep.subr.mxu0 0.0
      %957 = vmatpush1.msra.mxu0 0.0
      %958 = vmatprep.subr.mxu0 0.0
      %959 = vmatpush1.msra.mxu0 0.0
      %960 = vmatprep.subr.mxu0 0.0
      %961 = vmatpush1.msra.mxu0 0.0
      %962 = vmatprep.subr.mxu0 0.0
      %963 = vmatpush1.msra.mxu0 0.0
      %964 = vmatprep.subr.mxu0 0.0
      %965 = vmatpush1.msra.mxu0 0.0
      %966 = vmatprep.subr.mxu0 0.0
      %967 = vmatpush1.msra.mxu0 0.0
      %968 = vmatprep.subr.mxu0 0.0
      %969 = vmatpush1.msra.mxu0 0.0
      %970 = vmatprep.subr.mxu0 0.0
      %971 = vmatpush1.msra.mxu0 0.0
      %972 = vmatprep.subr.mxu0 0.0
      %973 = vmatpush1.msra.mxu0 0.0
      %974 = vmatprep.subr.mxu0 0.0
      %975 = vmatpush1.msra.mxu0 0.0
      %976 = vmatprep.subr.mxu0 0.0
      %977 = vmatpush1.msra.mxu0 0.0
      %978 = vmatprep.subr.mxu0 0.0
      %979 = vmatpush1.msra.mxu0 0.0
      %980 = vmatprep.subr.mxu0 0.0
      %981 = vmatpush1.msra.mxu0 0.0
      %982 = vmatprep.subr.mxu0 0.0
      %983 = vmatpush1.msra.mxu0 0.0
      %984 = vmatprep.subr.mxu0 0.0
      %985 = vmatpush1.msra.mxu0 0.0
      %986 = vmatprep.subr.mxu0 0.0
      %987 = vmatpush1.msra.mxu0 0.0
      %988 = vmatprep.subr.mxu0 0.0
      %989 = vmatpush1.msra.mxu0 0.0
      %990 = vmatprep.subr.mxu0 0.0
      %991 = vmatpush1.msra.mxu0 0.0
      %992 = vmatprep.subr.mxu0 0.0
      %993 = vmatpush1.msra.mxu0 0.0
      %994 = vmatprep.subr.mxu0 0.0
      %995 = vmatpush1.msra.mxu0 0.0
      %996 = vmatprep.subr.mxu0 0.0
      %997 = vmatpush1.msra.mxu0 0.0
      %998 = vmatprep.subr.mxu0 0.0
      %999 = vmatpush1.msra.mxu0 0.0
      %1000 = vmatprep.mubr.f32.mxu0 0.0
      %1001 = vmatmul.mubr.f32.gmra.mrb[0].mxu0 %v925
      %v1002 = vpop.f32.mrb[0].mxu0
      %v1003 = vadd.f32 0.0, %v1002
      %v1004 = vpop.f32.mrb[0].mxu0
      %1005 = vmatprep.mubr.f32.mxu0 0.0
      %1006 = vmatmul.mubr.f32.gmra.mrb[0].mxu0 %v928
      %v1007 = vpop.f32.mrb[0].mxu0
      %v1008 = vadd.f32 0.0, %v1007
      %v1009 = vpop.f32.mrb[0].mxu0
      %1010 = vmatprep.mubr.f32.mxu0 0.0
      %1011 = vmatmul.mubr.f32.gmra.mrb[0].mxu0 %v931
      %v1012 = vpop.f32.mrb[0].mxu0
      %v1013 = vadd.f32 0.0, %v1012
      %v1014 = vpop.f32.mrb[0].mxu0
      %1015 = vmatprep.mubr.f32.mxu0 0.0
      %1016 = vmatmul.mubr.f32.gmra.mrb[0].mxu0 %v934
      %v1017 = vpop.f32.mrb[0].mxu0
      %v1018 = vadd.f32 0.0, %v1017
      %v1019 = vpop.f32.mrb[0].mxu0
      %1020 = vdwg.mxu0
      %1021 = vrot.lane.b32.xlu0 %v644, 96
      %v1022 = vpop.permute.xlu0 %1021
      %1023 = vrot.lane.b32.xlu0 %v650, 96
      %v1024 = vpop.permute.xlu0 %1023
      %1025 = vrot.lane.b32.xlu0 %v656, 96
      %v1026 = vpop.permute.xlu0 %1025
      %1027 = vrot.lane.b32.xlu0 %v662, 96
      %v1028 = vpop.permute.xlu0 %1027
      %1029 = vrot.lane.b32.xlu0 %v646, 96
      %v1030 = vpop.permute.xlu0 %1029
      %1031 = vrot.lane.b32.xlu0 %v652, 96
      %v1032 = vpop.permute.xlu0 %1031
      %1033 = vrot.lane.b32.xlu0 %v658, 96
      %v1034 = vpop.permute.xlu0 %1033
      %1035 = vrot.lane.b32.xlu0 %v664, 96
      %v1036 = vpop.permute.xlu0 %1035
      %v1037 = vsel %vm762, %v1022, 0
      %v1039 = vsel %vm762, %v1024, 0
      %v1041 = vsel %vm762, %v1026, 0
      %v1043 = vsel %vm762, %v1028, 0
      %v1045 = vsel %vm762, %v1030, 0
      %v1047 = vsel %vm762, %v1032, 0
      %v1049 = vsel %vm762, %v1034, 0
      %v1051 = vsel %vm762, %v1036, 0
      %1053 = vmatprep.subr.mxu0 0.0
      %1054 = vmatpush1.xpose.msra.mxu0 %v1045
      %1055 = vmatprep.subr.mxu0 0.0
      %1056 = vmatpush1.xpose.msra.mxu0 %v1047
      %1057 = vmatprep.subr.mxu0 0.0
      %1058 = vmatpush1.xpose.msra.mxu0 %v1049
      %1059 = vmatprep.subr.mxu0 0.0
      %1060 = vmatpush1.xpose.msra.mxu0 %v1051
      %1061 = vmatprep.subr.mxu0 0.0
      %1062 = vmatpush1.xpose.msra.mxu0 0.0
      %1063 = vmatprep.subr.mxu0 0.0
      %1064 = vmatpush1.xpose.msra.mxu0 0.0
      %1065 = vmatprep.subr.mxu0 0.0
      %1066 = vmatpush1.xpose.msra.mxu0 0.0
      %1067 = vmatprep.subr.mxu0 0.0
      %1068 = vmatpush1.xpose.msra.mxu0 0.0
      %1069 = vmatprep.subr.mxu0 0.0
      %1070 = vmatpush1.xpose.msra.mxu0 0.0
      %1071 = vmatprep.subr.mxu0 0.0
      %1072 = vmatpush1.xpose.msra.mxu0 0.0
      %1073 = vmatprep.subr.mxu0 0.0
      %1074 = vmatpush1.xpose.msra.mxu0 0.0
      %1075 = vmatprep.subr.mxu0 0.0
      %1076 = vmatpush1.xpose.msra.mxu0 0.0
      %1077 = vmatprep.subr.mxu0 0.0
      %1078 = vmatpush1.xpose.msra.mxu0 0.0
      %1079 = vmatprep.subr.mxu0 0.0
      %1080 = vmatpush1.xpose.msra.mxu0 0.0
      %1081 = vmatprep.subr.mxu0 0.0
      %1082 = vmatpush1.xpose.msra.mxu0 0.0
      %1083 = vmatprep.subr.mxu0 0.0
      %1084 = vmatpush1.xpose.msra.mxu0 0.0
      %1085 = vmatprep.subr.mxu0 0.0
      %1086 = vmatpush1.xpose.msra.mxu0 0.0
      %1087 = vmatprep.subr.mxu0 0.0
      %1088 = vmatpush1.xpose.msra.mxu0 0.0
      %1089 = vmatprep.subr.mxu0 0.0
      %1090 = vmatpush1.xpose.msra.mxu0 0.0
      %1091 = vmatprep.subr.mxu0 0.0
      %1092 = vmatpush1.xpose.msra.mxu0 0.0
      %1093 = vmatprep.subr.mxu0 0.0
      %1094 = vmatpush1.xpose.msra.mxu0 0.0
      %1095 = vmatprep.subr.mxu0 0.0
      %1096 = vmatpush1.xpose.msra.mxu0 0.0
      %1097 = vmatprep.subr.mxu0 0.0
      %1098 = vmatpush1.xpose.msra.mxu0 0.0
      %1099 = vmatprep.subr.mxu0 0.0
      %1100 = vmatpush1.xpose.msra.mxu0 0.0
      %1101 = vmatprep.subr.mxu0 0.0
      %1102 = vmatpush1.xpose.msra.mxu0 0.0
      %1103 = vmatprep.subr.mxu0 0.0
      %1104 = vmatpush1.xpose.msra.mxu0 0.0
      %1105 = vmatprep.subr.mxu0 0.0
      %1106 = vmatpush1.xpose.msra.mxu0 0.0
      %1107 = vmatprep.subr.mxu0 0.0
      %1108 = vmatpush1.xpose.msra.mxu0 0.0
      %1109 = vmatprep.subr.mxu0 0.0
      %1110 = vmatpush1.xpose.msra.mxu0 0.0
      %1111 = vmatprep.subr.mxu0 0.0
      %1112 = vmatpush1.xpose.msra.mxu0 0.0
      %1113 = vmatprep.subr.mxu0 0.0
      %1114 = vmatpush1.xpose.msra.mxu0 0.0
      %1115 = vmatprep.subr.mxu0 0.0
      %1116 = vmatpush1.xpose.msra.mxu0 0.0
      %1117 = vmatprep.mubr.f32.mxu0 0.0
      %1118 = vmatmul.mubr.f32.gmra.mrb[0].mxu0 %v1037
      %v1119 = vpop.f32.mrb[0].mxu0
      %v1120 = vadd.f32 0.0, %v1119
      %v1121 = vpop.f32.mrb[0].mxu0
      %1122 = vmatprep.mubr.f32.mxu0 0.0
      %1123 = vmatmul.mubr.f32.gmra.mrb[0].mxu0 %v1039
      %v1124 = vpop.f32.mrb[0].mxu0
      %v1125 = vadd.f32 0.0, %v1124
      %v1126 = vpop.f32.mrb[0].mxu0
      %1127 = vmatprep.mubr.f32.mxu0 0.0
      %1128 = vmatmul.mubr.f32.gmra.mrb[0].mxu0 %v1041
      %v1129 = vpop.f32.mrb[0].mxu0
      %v1130 = vadd.f32 0.0, %v1129
      %v1131 = vpop.f32.mrb[0].mxu0
      %1132 = vmatprep.mubr.f32.mxu0 0.0
      %1133 = vmatmul.mubr.f32.gmra.mrb[0].mxu0 %v1043
      %v1134 = vpop.f32.mrb[0].mxu0
      %v1135 = vadd.f32 0.0, %v1134
      %v1136 = vpop.f32.mrb[0].mxu0
      %1137 = vdwg.mxu0
      %v1138 = vmul.f32 %v1120, 0.17677669
      %v1139 = vmul.f32 %v1125, 0.17677669
      %v1140 = vmul.f32 %v1130, 0.17677669
      %v1141 = vmul.f32 %v1135, 0.17677669
      %v1142 = vsel %vm758, %v1138, -1e+30
      %v1143 = vsel %vm759, %v1139, -1e+30
      %v1144 = vsel %vm760, %v1140, -1e+30
      %v1145 = vsel %vm761, %v1141, -1e+30
      %v1146 = vsel %vm762, %v1142, -inf
      %1147 = vmax.xlane.f32.xlu0 %v1146
      %v1148 = vpop.xlane.xlu0 %1147
      %v1149 = vsel %vm762, %v1143, -inf
      %1150 = vmax.xlane.f32.xlu0 %v1149
      %v1151 = vpop.xlane.xlu0 %1150
      %v1152 = vsel %vm762, %v1144, -inf
      %1153 = vmax.xlane.f32.xlu0 %v1152
      %v1154 = vpop.xlane.xlu0 %1153
      %v1155 = vsel %vm762, %v1145, -inf
      %1156 = vmax.xlane.f32.xlu0 %v1155
      %v1157 = vpop.xlane.xlu0 %1156
      %v1158 = vsub.f32 %v1142, %v1148
      %v1159 = vsub.f32 %v1143, %v1151
      %v1160 = vsub.f32 %v1144, %v1154
      %v1161 = vsub.f32 %v1145, %v1157
      %v1162 = vmul.f32 %v1158, 1.442695
      %v1163 = vpow.pop %v1162
      %v1164 = vmul.f32 %v1159, 1.442695
      %v1165 = vpow.pop %v1164
      %v1166 = vmul.f32 %v1160, 1.442695
      %v1167 = vpow.pop %v1166
      %v1168 = vmul.f32 %v1161, 1.442695
      %v1169 = vpow.pop %v1168
      %v1170 = vsel %vm762, %v1163, 0.0
      %1171 = vadd.xlane.f32.xlu0 %v1170
      %v1172 = vpop.xlane.xlu0 %1171
      %v1173 = vsel %vm762, %v1165, 0.0
      %1174 = vadd.xlane.f32.xlu0 %v1173
      %v1175 = vpop.xlane.xlu0 %1174
      %v1176 = vsel %vm762, %v1167, 0.0
      %1177 = vadd.xlane.f32.xlu0 %v1176
      %v1178 = vpop.xlane.xlu0 %1177
      %v1179 = vsel %vm762, %v1169, 0.0
      %1180 = vadd.xlane.f32.xlu0 %v1179
      %v1181 = vpop.xlane.xlu0 %1180
      %v1182 = vrcp.pop %v1172
      %v1183 = vrcp.pop %v1175
      %v1184 = vrcp.pop %v1178
      %v1185 = vrcp.pop %v1181
      %v1186 = vmul.f32 %v1163, %v1182
      %v1187 = vmul.f32 %v1165, %v1183
      %v1188 = vmul.f32 %v1167, %v1184
      %v1189 = vmul.f32 %v1169, %v1185
      %1194 = vrot.lane.b32.xlu0 %v733, 96
      %v1195 = vpop.permute.xlu0 %1194
      %1196 = vrot.lane.b32.xlu0 %v738, 96
      %v1197 = vpop.permute.xlu0 %1196
      %1198 = vrot.lane.b32.xlu0 %v743, 96
      %v1199 = vpop.permute.xlu0 %1198
      %1200 = vrot.lane.b32.xlu0 %v748, 96
      %v1201 = vpop.permute.xlu0 %1200
      %v1207 = vsel %vm762, %v1186, 0
      %v1210 = vsel %vm762, %v1187, 0
      %v1213 = vsel %vm762, %v1188, 0
      %v1216 = vsel %vm762, %v1189, 0
      %1218 = vmatprep.subr.mxu0 0.0
      %1219 = vmatpush1.msra.mxu0 %v1195
      %1220 = vmatprep.subr.mxu0 0.0
      %1221 = vmatpush1.msra.mxu0 %v1197
      %1222 = vmatprep.subr.mxu0 0.0
      %1223 = vmatpush1.msra.mxu0 %v1199
      %1224 = vmatprep.subr.mxu0 0.0
      %1225 = vmatpush1.msra.mxu0 %v1201
      %1226 = vmatprep.subr.mxu0 0.0
      %1227 = vmatpush1.msra.mxu0 0.0
      %1228 = vmatprep.subr.mxu0 0.0
      %1229 = vmatpush1.msra.mxu0 0.0
      %1230 = vmatprep.subr.mxu0 0.0
      %1231 = vmatpush1.msra.mxu0 0.0
      %1232 = vmatprep.subr.mxu0 0.0
      %1233 = vmatpush1.msra.mxu0 0.0
      %1234 = vmatprep.subr.mxu0 0.0
      %1235 = vmatpush1.msra.mxu0 0.0
      %1236 = vmatprep.subr.mxu0 0.0
      %1237 = vmatpush1.msra.mxu0 0.0
      %1238 = vmatprep.subr.mxu0 0.0
      %1239 = vmatpush1.msra.mxu0 0.0
      %1240 = vmatprep.subr.mxu0 0.0
      %1241 = vmatpush1.msra.mxu0 0.0
      %1242 = vmatprep.subr.mxu0 0.0
      %1243 = vmatpush1.msra.mxu0 0.0
      %1244 = vmatprep.subr.mxu0 0.0
      %1245 = vmatpush1.msra.mxu0 0.0
      %1246 = vmatprep.subr.mxu0 0.0
      %1247 = vmatpush1.msra.mxu0 0.0
      %1248 = vmatprep.subr.mxu0 0.0
      %1249 = vmatpush1.msra.mxu0 0.0
      %1250 = vmatprep.subr.mxu0 0.0
      %1251 = vmatpush1.msra.mxu0 0.0
      %1252 = vmatprep.subr.mxu0 0.0
      %1253 = vmatpush1.msra.mxu0 0.0
      %1254 = vmatprep.subr.mxu0 0.0
      %1255 = vmatpush1.msra.mxu0 0.0
      %1256 = vmatprep.subr.mxu0 0.0
      %1257 = vmatpush1.msra.mxu0 0.0
      %1258 = vmatprep.subr.mxu0 0.0
      %1259 = vmatpush1.msra.mxu0 0.0
      %1260 = vmatprep.subr.mxu0 0.0
      %1261 = vmatpush1.msra.mxu0 0.0
      %1262 = vmatprep.subr.mxu0 0.0
      %1263 = vmatpush1.msra.mxu0 0.0
      %1264 = vmatprep.subr.mxu0 0.0
      %1265 = vmatpush1.msra.mxu0 0.0
      %1266 = vmatprep.subr.mxu0 0.0
      %1267 = vmatpush1.msra.mxu0 0.0
      %1268 = vmatprep.subr.mxu0 0.0
      %1269 = vmatpush1.msra.mxu0 0.0
      %1270 = vmatprep.subr.mxu0 0.0
      %1271 = vmatpush1.msra.mxu0 0.0
      %1272 = vmatprep.subr.mxu0 0.0
      %1273 = vmatpush1.msra.mxu0 0.0
      %1274 = vmatprep.subr.mxu0 0.0
      %1275 = vmatpush1.msra.mxu0 0.0
      %1276 = vmatprep.subr.mxu0 0.0
      %1277 = vmatpush1.msra.mxu0 0.0
      %1278 = vmatprep.subr.mxu0 0.0
      %1279 = vmatpush1.msra.mxu0 0.0
      %1280 = vmatprep.subr.mxu0 0.0
      %1281 = vmatpush1.msra.mxu0 0.0
      %1282 = vmatprep.mubr.f32.mxu0 0.0
      %1283 = vmatmul.mubr.f32.gmra.mrb[0].mxu0 %v1207
      %v1284 = vpop.f32.mrb[0].mxu0
      %v1285 = vadd.f32 0.0, %v1284
      %v1286 = vpop.f32.mrb[0].mxu0
      %1287 = vmatprep.mubr.f32.mxu0 0.0
      %1288 = vmatmul.mubr.f32.gmra.mrb[0].mxu0 %v1210
      %v1289 = vpop.f32.mrb[0].mxu0
      %v1290 = vadd.f32 0.0, %v1289
      %v1291 = vpop.f32.mrb[0].mxu0
      %1292 = vmatprep.mubr.f32.mxu0 0.0
      %1293 = vmatmul.mubr.f32.gmra.mrb[0].mxu0 %v1213
      %v1294 = vpop.f32.mrb[0].mxu0
      %v1295 = vadd.f32 0.0, %v1294
      %v1296 = vpop.f32.mrb[0].mxu0
      %1297 = vmatprep.mubr.f32.mxu0 0.0
      %1298 = vmatmul.mubr.f32.gmra.mrb[0].mxu0 %v1216
      %v1299 = vpop.f32.mrb[0].mxu0
      %v1300 = vadd.f32 0.0, %v1299
      %v1301 = vpop.f32.mrb[0].mxu0
      %1302 = vdwg.mxu0
      %1303 = vrot.lane.b32.xlu0 %v644, 64
      %v1304 = vpop.permute.xlu0 %1303
      %1305 = vrot.lane.b32.xlu0 %v650, 64
      %v1306 = vpop.permute.xlu0 %1305
      %1307 = vrot.lane.b32.xlu0 %v656, 64
      %v1308 = vpop.permute.xlu0 %1307
      %1309 = vrot.lane.b32.xlu0 %v662, 64
      %v1310 = vpop.permute.xlu0 %1309
      %1311 = vrot.lane.b32.xlu0 %v646, 64
      %v1312 = vpop.permute.xlu0 %1311
      %1313 = vrot.lane.b32.xlu0 %v652, 64
      %v1314 = vpop.permute.xlu0 %1313
      %1315 = vrot.lane.b32.xlu0 %v658, 64
      %v1316 = vpop.permute.xlu0 %1315
      %1317 = vrot.lane.b32.xlu0 %v664, 64
      %v1318 = vpop.permute.xlu0 %1317
      %v1319 = vsel %vm762, %v1304, 0
      %v1321 = vsel %vm762, %v1306, 0
      %v1323 = vsel %vm762, %v1308, 0
      %v1325 = vsel %vm762, %v1310, 0
      %v1327 = vsel %vm762, %v1312, 0
      %v1329 = vsel %vm762, %v1314, 0
      %v1331 = vsel %vm762, %v1316, 0
      %v1333 = vsel %vm762, %v1318, 0
      %1335 = vmatprep.subr.mxu0 0.0
      %1336 = vmatpush1.xpose.msra.mxu0 %v1327
      %1337 = vmatprep.subr.mxu0 0.0
      %1338 = vmatpush1.xpose.msra.mxu0 %v1329
      %1339 = vmatprep.subr.mxu0 0.0
      %1340 = vmatpush1.xpose.msra.mxu0 %v1331
      %1341 = vmatprep.subr.mxu0 0.0
      %1342 = vmatpush1.xpose.msra.mxu0 %v1333
      %1343 = vmatprep.subr.mxu0 0.0
      %1344 = vmatpush1.xpose.msra.mxu0 0.0
      %1345 = vmatprep.subr.mxu0 0.0
      %1346 = vmatpush1.xpose.msra.mxu0 0.0
      %1347 = vmatprep.subr.mxu0 0.0
      %1348 = vmatpush1.xpose.msra.mxu0 0.0
      %1349 = vmatprep.subr.mxu0 0.0
      %1350 = vmatpush1.xpose.msra.mxu0 0.0
      %1351 = vmatprep.subr.mxu0 0.0
      %1352 = vmatpush1.xpose.msra.mxu0 0.0
      %1353 = vmatprep.subr.mxu0 0.0
      %1354 = vmatpush1.xpose.msra.mxu0 0.0
      %1355 = vmatprep.subr.mxu0 0.0
      %1356 = vmatpush1.xpose.msra.mxu0 0.0
      %1357 = vmatprep.subr.mxu0 0.0
      %1358 = vmatpush1.xpose.msra.mxu0 0.0
      %1359 = vmatprep.subr.mxu0 0.0
      %1360 = vmatpush1.xpose.msra.mxu0 0.0
      %1361 = vmatprep.subr.mxu0 0.0
      %1362 = vmatpush1.xpose.msra.mxu0 0.0
      %1363 = vmatprep.subr.mxu0 0.0
      %1364 = vmatpush1.xpose.msra.mxu0 0.0
      %1365 = vmatprep.subr.mxu0 0.0
      %1366 = vmatpush1.xpose.msra.mxu0 0.0
      %1367 = vmatprep.subr.mxu0 0.0
      %1368 = vmatpush1.xpose.msra.mxu0 0.0
      %1369 = vmatprep.subr.mxu0 0.0
      %1370 = vmatpush1.xpose.msra.mxu0 0.0
      %1371 = vmatprep.subr.mxu0 0.0
      %1372 = vmatpush1.xpose.msra.mxu0 0.0
      %1373 = vmatprep.subr.mxu0 0.0
      %1374 = vmatpush1.xpose.msra.mxu0 0.0
      %1375 = vmatprep.subr.mxu0 0.0
      %1376 = vmatpush1.xpose.msra.mxu0 0.0
      %1377 = vmatprep.subr.mxu0 0.0
      %1378 = vmatpush1.xpose.msra.mxu0 0.0
      %1379 = vmatprep.subr.mxu0 0.0
      %1380 = vmatpush1.xpose.msra.mxu0 0.0
      %1381 = vmatprep.subr.mxu0 0.0
      %1382 = vmatpush1.xpose.msra.mxu0 0.0
      %1383 = vmatprep.subr.mxu0 0.0
      %1384 = vmatpush1.xpose.msra.mxu0 0.0
      %1385 = vmatprep.subr.mxu0 0.0
      %1386 = vmatpush1.xpose.msra.mxu0 0.0
      %1387 = vmatprep.subr.mxu0 0.0
      %1388 = vmatpush1.xpose.msra.mxu0 0.0
      %1389 = vmatprep.subr.mxu0 0.0
      %1390 = vmatpush1.xpose.msra.mxu0 0.0
      %1391 = vmatprep.subr.mxu0 0.0
      %1392 = vmatpush1.xpose.msra.mxu0 0.0
      %1393 = vmatprep.subr.mxu0 0.0
      %1394 = vmatpush1.xpose.msra.mxu0 0.0
      %1395 = vmatprep.subr.mxu0 0.0
      %1396 = vmatpush1.xpose.msra.mxu0 0.0
      %1397 = vmatprep.subr.mxu0 0.0
      %1398 = vmatpush1.xpose.msra.mxu0 0.0
      %1399 = vmatprep.mubr.f32.mxu0 0.0
      %1400 = vmatmul.mubr.f32.gmra.mrb[0].mxu0 %v1319
      %v1401 = vpop.f32.mrb[0].mxu0
      %v1402 = vadd.f32 0.0, %v1401
      %v1403 = vpop.f32.mrb[0].mxu0
      %1404 = vmatprep.mubr.f32.mxu0 0.0
      %1405 = vmatmul.mubr.f32.gmra.mrb[0].mxu0 %v1321
      %v1406 = vpop.f32.mrb[0].mxu0
      %v1407 = vadd.f32 0.0, %v1406
      %v1408 = vpop.f32.mrb[0].mxu0
      %1409 = vmatprep.mubr.f32.mxu0 0.0
      %1410 = vmatmul.mubr.f32.gmra.mrb[0].mxu0 %v1323
      %v1411 = vpop.f32.mrb[0].mxu0
      %v1412 = vadd.f32 0.0, %v1411
      %v1413 = vpop.f32.mrb[0].mxu0
      %1414 = vmatprep.mubr.f32.mxu0 0.0
      %1415 = vmatmul.mubr.f32.gmra.mrb[0].mxu0 %v1325
      %v1416 = vpop.f32.mrb[0].mxu0
      %v1417 = vadd.f32 0.0, %v1416
      %v1418 = vpop.f32.mrb[0].mxu0
      %1419 = vdwg.mxu0
      %v1420 = vmul.f32 %v1402, 0.17677669
      %v1421 = vmul.f32 %v1407, 0.17677669
      %v1422 = vmul.f32 %v1412, 0.17677669
      %v1423 = vmul.f32 %v1417, 0.17677669
      %v1424 = vsel %vm758, %v1420, -1e+30
      %v1425 = vsel %vm759, %v1421, -1e+30
      %v1426 = vsel %vm760, %v1422, -1e+30
      %v1427 = vsel %vm761, %v1423, -1e+30
      %v1428 = vsel %vm762, %v1424, -inf
      %1429 = vmax.xlane.f32.xlu0 %v1428
      %v1430 = vpop.xlane.xlu0 %1429
      %v1431 = vsel %vm762, %v1425, -inf
      %1432 = vmax.xlane.f32.xlu0 %v1431
      %v1433 = vpop.xlane.xlu0 %1432
      %v1434 = vsel %vm762, %v1426, -inf
      %1435 = vmax.xlane.f32.xlu0 %v1434
      %v1436 = vpop.xlane.xlu0 %1435
      %v1437 = vsel %vm762, %v1427, -inf
      %1438 = vmax.xlane.f32.xlu0 %v1437
      %v1439 = vpop.xlane.xlu0 %1438
      %v1440 = vsub.f32 %v1424, %v1430
      %v1441 = vsub.f32 %v1425, %v1433
      %v1442 = vsub.f32 %v1426, %v1436
      %v1443 = vsub.f32 %v1427, %v1439
      %v1444 = vmul.f32 %v1440, 1.442695
      %v1445 = vpow.pop %v1444
      %v1446 = vmul.f32 %v1441, 1.442695
      %v1447 = vpow.pop %v1446
      %v1448 = vmul.f32 %v1442, 1.442695
      %v1449 = vpow.pop %v1448
      %v1450 = vmul.f32 %v1443, 1.442695
      %v1451 = vpow.pop %v1450
      %v1452 = vsel %vm762, %v1445, 0.0
      %1453 = vadd.xlane.f32.xlu0 %v1452
      %v1454 = vpop.xlane.xlu0 %1453
      %v1455 = vsel %vm762, %v1447, 0.0
      %1456 = vadd.xlane.f32.xlu0 %v1455
      %v1457 = vpop.xlane.xlu0 %1456
      %v1458 = vsel %vm762, %v1449, 0.0
      %1459 = vadd.xlane.f32.xlu0 %v1458
      %v1460 = vpop.xlane.xlu0 %1459
      %v1461 = vsel %vm762, %v1451, 0.0
      %1462 = vadd.xlane.f32.xlu0 %v1461
      %v1463 = vpop.xlane.xlu0 %1462
      %v1464 = vrcp.pop %v1454
      %v1465 = vrcp.pop %v1457
      %v1466 = vrcp.pop %v1460
      %v1467 = vrcp.pop %v1463
      %v1468 = vmul.f32 %v1445, %v1464
      %v1469 = vmul.f32 %v1447, %v1465
      %v1470 = vmul.f32 %v1449, %v1466
      %v1471 = vmul.f32 %v1451, %v1467
      %1472 = vrot.lane.b32.xlu0 %v733, 64
      %v1473 = vpop.permute.xlu0 %1472
      %1474 = vrot.lane.b32.xlu0 %v738, 64
      %v1475 = vpop.permute.xlu0 %1474
      %1476 = vrot.lane.b32.xlu0 %v743, 64
      %v1477 = vpop.permute.xlu0 %1476
      %1478 = vrot.lane.b32.xlu0 %v748, 64
      %v1479 = vpop.permute.xlu0 %1478
      %v1485 = vsel %vm762, %v1468, 0
      %v1488 = vsel %vm762, %v1469, 0
      %v1491 = vsel %vm762, %v1470, 0
      %v1494 = vsel %vm762, %v1471, 0
      %1496 = vmatprep.subr.mxu0 0.0
      %1497 = vmatpush1.msra.mxu0 %v1473
      %1498 = vmatprep.subr.mxu0 0.0
      %1499 = vmatpush1.msra.mxu0 %v1475
      %1500 = vmatprep.subr.mxu0 0.0
      %1501 = vmatpush1.msra.mxu0 %v1477
      %1502 = vmatprep.subr.mxu0 0.0
      %1503 = vmatpush1.msra.mxu0 %v1479
      %1504 = vmatprep.subr.mxu0 0.0
      %1505 = vmatpush1.msra.mxu0 0.0
      %1506 = vmatprep.subr.mxu0 0.0
      %1507 = vmatpush1.msra.mxu0 0.0
      %1508 = vmatprep.subr.mxu0 0.0
      %1509 = vmatpush1.msra.mxu0 0.0
      %1510 = vmatprep.subr.mxu0 0.0
      %1511 = vmatpush1.msra.mxu0 0.0
      %1512 = vmatprep.subr.mxu0 0.0
      %1513 = vmatpush1.msra.mxu0 0.0
      %1514 = vmatprep.subr.mxu0 0.0
      %1515 = vmatpush1.msra.mxu0 0.0
      %1516 = vmatprep.subr.mxu0 0.0
      %1517 = vmatpush1.msra.mxu0 0.0
      %1518 = vmatprep.subr.mxu0 0.0
      %1519 = vmatpush1.msra.mxu0 0.0
      %1520 = vmatprep.subr.mxu0 0.0
      %1521 = vmatpush1.msra.mxu0 0.0
      %1522 = vmatprep.subr.mxu0 0.0
      %1523 = vmatpush1.msra.mxu0 0.0
      %1524 = vmatprep.subr.mxu0 0.0
      %1525 = vmatpush1.msra.mxu0 0.0
      %1526 = vmatprep.subr.mxu0 0.0
      %1527 = vmatpush1.msra.mxu0 0.0
      %1528 = vmatprep.subr.mxu0 0.0
      %1529 = vmatpush1.msra.mxu0 0.0
      %1530 = vmatprep.subr.mxu0 0.0
      %1531 = vmatpush1.msra.mxu0 0.0
      %1532 = vmatprep.subr.mxu0 0.0
      %1533 = vmatpush1.msra.mxu0 0.0
      %1534 = vmatprep.subr.mxu0 0.0
      %1535 = vmatpush1.msra.mxu0 0.0
      %1536 = vmatprep.subr.mxu0 0.0
      %1537 = vmatpush1.msra.mxu0 0.0
      %1538 = vmatprep.subr.mxu0 0.0
      %1539 = vmatpush1.msra.mxu0 0.0
      %1540 = vmatprep.subr.mxu0 0.0
      %1541 = vmatpush1.msra.mxu0 0.0
      %1542 = vmatprep.subr.mxu0 0.0
      %1543 = vmatpush1.msra.mxu0 0.0
      %1544 = vmatprep.subr.mxu0 0.0
      %1545 = vmatpush1.msra.mxu0 0.0
      %1546 = vmatprep.subr.mxu0 0.0
      %1547 = vmatpush1.msra.mxu0 0.0
      %1548 = vmatprep.subr.mxu0 0.0
      %1549 = vmatpush1.msra.mxu0 0.0
      %1550 = vmatprep.subr.mxu0 0.0
      %1551 = vmatpush1.msra.mxu0 0.0
      %1552 = vmatprep.subr.mxu0 0.0
      %1553 = vmatpush1.msra.mxu0 0.0
      %1554 = vmatprep.subr.mxu0 0.0
      %1555 = vmatpush1.msra.mxu0 0.0
      %1556 = vmatprep.subr.mxu0 0.0
      %1557 = vmatpush1.msra.mxu0 0.0
      %1558 = vmatprep.subr.mxu0 0.0
      %1559 = vmatpush1.msra.mxu0 0.0
      %1560 = vmatprep.mubr.f32.mxu0 0.0
      %1561 = vmatmul.mubr.f32.gmra.mrb[0].mxu0 %v1485
      %v1562 = vpop.f32.mrb[0].mxu0
      %v1563 = vadd.f32 0.0, %v1562
      %v1564 = vpop.f32.mrb[0].mxu0
      %1565 = vmatprep.mubr.f32.mxu0 0.0
      %1566 = vmatmul.mubr.f32.gmra.mrb[0].mxu0 %v1488
      %v1567 = vpop.f32.mrb[0].mxu0
      %v1568 = vadd.f32 0.0, %v1567
      %v1569 = vpop.f32.mrb[0].mxu0
      %1570 = vmatprep.mubr.f32.mxu0 0.0
      %1571 = vmatmul.mubr.f32.gmra.mrb[0].mxu0 %v1491
      %v1572 = vpop.f32.mrb[0].mxu0
      %v1573 = vadd.f32 0.0, %v1572
      %v1574 = vpop.f32.mrb[0].mxu0
      %1575 = vmatprep.mubr.f32.mxu0 0.0
      %1576 = vmatmul.mubr.f32.gmra.mrb[0].mxu0 %v1494
      %v1577 = vpop.f32.mrb[0].mxu0
      %v1578 = vadd.f32 0.0, %v1577
      %v1579 = vpop.f32.mrb[0].mxu0
      %1580 = vdwg.mxu0
      %1581 = vrot.lane.b32.xlu0 %v644, 32
      %v1582 = vpop.permute.xlu0 %1581
      %1583 = vrot.lane.b32.xlu0 %v650, 32
      %v1584 = vpop.permute.xlu0 %1583
      %1585 = vrot.lane.b32.xlu0 %v656, 32
      %v1586 = vpop.permute.xlu0 %1585
      %1587 = vrot.lane.b32.xlu0 %v662, 32
      %v1588 = vpop.permute.xlu0 %1587
      %1589 = vrot.lane.b32.xlu0 %v646, 32
      %v1590 = vpop.permute.xlu0 %1589
      %1591 = vrot.lane.b32.xlu0 %v652, 32
      %v1592 = vpop.permute.xlu0 %1591
      %1593 = vrot.lane.b32.xlu0 %v658, 32
      %v1594 = vpop.permute.xlu0 %1593
      %1595 = vrot.lane.b32.xlu0 %v664, 32
      %v1596 = vpop.permute.xlu0 %1595
      %v1597 = vsel %vm762, %v1582, 0
      %v1599 = vsel %vm762, %v1584, 0
      %v1601 = vsel %vm762, %v1586, 0
      %v1603 = vsel %vm762, %v1588, 0
      %v1605 = vsel %vm762, %v1590, 0
      %v1607 = vsel %vm762, %v1592, 0
      %v1609 = vsel %vm762, %v1594, 0
      %v1611 = vsel %vm762, %v1596, 0
      %1613 = vmatprep.subr.mxu0 0.0
      %1614 = vmatpush1.xpose.msra.mxu0 %v1605
      %1615 = vmatprep.subr.mxu0 0.0
      %1616 = vmatpush1.xpose.msra.mxu0 %v1607
      %1617 = vmatprep.subr.mxu0 0.0
      %1618 = vmatpush1.xpose.msra.mxu0 %v1609
      %1619 = vmatprep.subr.mxu0 0.0
      %1620 = vmatpush1.xpose.msra.mxu0 %v1611
      %1621 = vmatprep.subr.mxu0 0.0
      %1622 = vmatpush1.xpose.msra.mxu0 0.0
      %1623 = vmatprep.subr.mxu0 0.0
      %1624 = vmatpush1.xpose.msra.mxu0 0.0
      %1625 = vmatprep.subr.mxu0 0.0
      %1626 = vmatpush1.xpose.msra.mxu0 0.0
      %1627 = vmatprep.subr.mxu0 0.0
      %1628 = vmatpush1.xpose.msra.mxu0 0.0
      %1629 = vmatprep.subr.mxu0 0.0
      %1630 = vmatpush1.xpose.msra.mxu0 0.0
      %1631 = vmatprep.subr.mxu0 0.0
      %1632 = vmatpush1.xpose.msra.mxu0 0.0
      %1633 = vmatprep.subr.mxu0 0.0
      %1634 = vmatpush1.xpose.msra.mxu0 0.0
      %1635 = vmatprep.subr.mxu0 0.0
      %1636 = vmatpush1.xpose.msra.mxu0 0.0
      %1637 = vmatprep.subr.mxu0 0.0
      %1638 = vmatpush1.xpose.msra.mxu0 0.0
      %1639 = vmatprep.subr.mxu0 0.0
      %1640 = vmatpush1.xpose.msra.mxu0 0.0
      %1641 = vmatprep.subr.mxu0 0.0
      %1642 = vmatpush1.xpose.msra.mxu0 0.0
      %1643 = vmatprep.subr.mxu0 0.0
      %1644 = vmatpush1.xpose.msra.mxu0 0.0
      %1645 = vmatprep.subr.mxu0 0.0
      %1646 = vmatpush1.xpose.msra.mxu0 0.0
      %1647 = vmatprep.subr.mxu0 0.0
      %1648 = vmatpush1.xpose.msra.mxu0 0.0
      %1649 = vmatprep.subr.mxu0 0.0
      %1650 = vmatpush1.xpose.msra.mxu0 0.0
      %1651 = vmatprep.subr.mxu0 0.0
      %1652 = vmatpush1.xpose.msra.mxu0 0.0
      %1653 = vmatprep.subr.mxu0 0.0
      %1654 = vmatpush1.xpose.msra.mxu0 0.0
      %1655 = vmatprep.subr.mxu0 0.0
      %1656 = vmatpush1.xpose.msra.mxu0 0.0
      %1657 = vmatprep.subr.mxu0 0.0
      %1658 = vmatpush1.xpose.msra.mxu0 0.0
      %1659 = vmatprep.subr.mxu0 0.0
      %1660 = vmatpush1.xpose.msra.mxu0 0.0
      %1661 = vmatprep.subr.mxu0 0.0
      %1662 = vmatpush1.xpose.msra.mxu0 0.0
      %1663 = vmatprep.subr.mxu0 0.0
      %1664 = vmatpush1.xpose.msra.mxu0 0.0
      %1665 = vmatprep.subr.mxu0 0.0
      %1666 = vmatpush1.xpose.msra.mxu0 0.0
      %1667 = vmatprep.subr.mxu0 0.0
      %1668 = vmatpush1.xpose.msra.mxu0 0.0
      %1669 = vmatprep.subr.mxu0 0.0
      %1670 = vmatpush1.xpose.msra.mxu0 0.0
      %1671 = vmatprep.subr.mxu0 0.0
      %1672 = vmatpush1.xpose.msra.mxu0 0.0
      %1673 = vmatprep.subr.mxu0 0.0
      %1674 = vmatpush1.xpose.msra.mxu0 0.0
      %1675 = vmatprep.subr.mxu0 0.0
      %1676 = vmatpush1.xpose.msra.mxu0 0.0
      %1677 = vmatprep.mubr.f32.mxu0 0.0
      %1678 = vmatmul.mubr.f32.gmra.mrb[0].mxu0 %v1597
      %v1679 = vpop.f32.mrb[0].mxu0
      %v1680 = vadd.f32 0.0, %v1679
      %v1681 = vpop.f32.mrb[0].mxu0
      %1682 = vmatprep.mubr.f32.mxu0 0.0
      %1683 = vmatmul.mubr.f32.gmra.mrb[0].mxu0 %v1599
      %v1684 = vpop.f32.mrb[0].mxu0
      %v1685 = vadd.f32 0.0, %v1684
      %v1686 = vpop.f32.mrb[0].mxu0
      %1687 = vmatprep.mubr.f32.mxu0 0.0
      %1688 = vmatmul.mubr.f32.gmra.mrb[0].mxu0 %v1601
      %v1689 = vpop.f32.mrb[0].mxu0
      %v1690 = vadd.f32 0.0, %v1689
      %v1691 = vpop.f32.mrb[0].mxu0
      %1692 = vmatprep.mubr.f32.mxu0 0.0
      %1693 = vmatmul.mubr.f32.gmra.mrb[0].mxu0 %v1603
      %v1694 = vpop.f32.mrb[0].mxu0
      %v1695 = vadd.f32 0.0, %v1694
      %v1696 = vpop.f32.mrb[0].mxu0
      %1697 = vdwg.mxu0
      %v1698 = vmul.f32 %v1680, 0.17677669
      %v1699 = vmul.f32 %v1685, 0.17677669
      %v1700 = vmul.f32 %v1690, 0.17677669
      %v1701 = vmul.f32 %v1695, 0.17677669
      %v1702 = vsel %vm758, %v1698, -1e+30
      %v1703 = vsel %vm759, %v1699, -1e+30
      %v1704 = vsel %vm760, %v1700, -1e+30
      %v1705 = vsel %vm761, %v1701, -1e+30
      %v1706 = vsel %vm762, %v1702, -inf
      %1707 = vmax.xlane.f32.xlu0 %v1706
      %v1708 = vpop.xlane.xlu0 %1707
      %v1709 = vsel %vm762, %v1703, -inf
      %1710 = vmax.xlane.f32.xlu0 %v1709
      %v1711 = vpop.xlane.xlu0 %1710
      %v1712 = vsel %vm762, %v1704, -inf
      %1713 = vmax.xlane.f32.xlu0 %v1712
      %v1714 = vpop.xlane.xlu0 %1713
      %v1715 = vsel %vm762, %v1705, -inf
      %1716 = vmax.xlane.f32.xlu0 %v1715
      %v1717 = vpop.xlane.xlu0 %1716
      %v1718 = vsub.f32 %v1702, %v1708
      %v1719 = vsub.f32 %v1703, %v1711
      %v1720 = vsub.f32 %v1704, %v1714
      %v1721 = vsub.f32 %v1705, %v1717
      %v1722 = vmul.f32 %v1718, 1.442695
      %v1723 = vpow.pop %v1722
      %v1724 = vmul.f32 %v1719, 1.442695
      %v1725 = vpow.pop %v1724
      %v1726 = vmul.f32 %v1720, 1.442695
      %v1727 = vpow.pop %v1726
      %v1728 = vmul.f32 %v1721, 1.442695
      %v1729 = vpow.pop %v1728
      %v1730 = vsel %vm762, %v1723, 0.0
      %1731 = vadd.xlane.f32.xlu0 %v1730
      %v1732 = vpop.xlane.xlu0 %1731
      %v1733 = vsel %vm762, %v1725, 0.0
      %1734 = vadd.xlane.f32.xlu0 %v1733
      %v1735 = vpop.xlane.xlu0 %1734
      %v1736 = vsel %vm762, %v1727, 0.0
      %1737 = vadd.xlane.f32.xlu0 %v1736
      %v1738 = vpop.xlane.xlu0 %1737
      %v1739 = vsel %vm762, %v1729, 0.0
      %1740 = vadd.xlane.f32.xlu0 %v1739
      %v1741 = vpop.xlane.xlu0 %1740
      %v1742 = vrcp.pop %v1732
      %v1743 = vrcp.pop %v1735
      %v1744 = vrcp.pop %v1738
      %v1745 = vrcp.pop %v1741
      %v1746 = vmul.f32 %v1723, %v1742
      %v1747 = vmul.f32 %v1725, %v1743
      %v1748 = vmul.f32 %v1727, %v1744
      %v1749 = vmul.f32 %v1729, %v1745
      %1750 = vrot.lane.b32.xlu0 %v733, 32
      %v1751 = vpop.permute.xlu0 %1750
      %1752 = vrot.lane.b32.xlu0 %v738, 32
      %v1753 = vpop.permute.xlu0 %1752
      %1754 = vrot.lane.b32.xlu0 %v743, 32
      %v1755 = vpop.permute.xlu0 %1754
      %1756 = vrot.lane.b32.xlu0 %v748, 32
      %v1757 = vpop.permute.xlu0 %1756
      %v1763 = vsel %vm762, %v1746, 0
      %v1766 = vsel %vm762, %v1747, 0
      %v1769 = vsel %vm762, %v1748, 0
      %v1772 = vsel %vm762, %v1749, 0
      %1774 = vmatprep.subr.mxu0 0.0
      %1775 = vmatpush1.msra.mxu0 %v1751
      %1776 = vmatprep.subr.mxu0 0.0
      %1777 = vmatpush1.msra.mxu0 %v1753
      %1778 = vmatprep.subr.mxu0 0.0
      %1779 = vmatpush1.msra.mxu0 %v1755
      %1780 = vmatprep.subr.mxu0 0.0
      %1781 = vmatpush1.msra.mxu0 %v1757
      %1782 = vmatprep.subr.mxu0 0.0
      %1783 = vmatpush1.msra.mxu0 0.0
      %1784 = vmatprep.subr.mxu0 0.0
      %1785 = vmatpush1.msra.mxu0 0.0
      %1786 = vmatprep.subr.mxu0 0.0
      %1787 = vmatpush1.msra.mxu0 0.0
      %1788 = vmatprep.subr.mxu0 0.0
      %1789 = vmatpush1.msra.mxu0 0.0
      %1790 = vmatprep.subr.mxu0 0.0
      %1791 = vmatpush1.msra.mxu0 0.0
      %1792 = vmatprep.subr.mxu0 0.0
      %1793 = vmatpush1.msra.mxu0 0.0
      %1794 = vmatprep.subr.mxu0 0.0
      %1795 = vmatpush1.msra.mxu0 0.0
      %1796 = vmatprep.subr.mxu0 0.0
      %1797 = vmatpush1.msra.mxu0 0.0
      %1798 = vmatprep.subr.mxu0 0.0
      %1799 = vmatpush1.msra.mxu0 0.0
      %1800 = vmatprep.subr.mxu0 0.0
      %1801 = vmatpush1.msra.mxu0 0.0
      %1802 = vmatprep.subr.mxu0 0.0
      %1803 = vmatpush1.msra.mxu0 0.0
      %1804 = vmatprep.subr.mxu0 0.0
      %1805 = vmatpush1.msra.mxu0 0.0
      %1806 = vmatprep.subr.mxu0 0.0
      %1807 = vmatpush1.msra.mxu0 0.0
      %1808 = vmatprep.subr.mxu0 0.0
      %1809 = vmatpush1.msra.mxu0 0.0
      %1810 = vmatprep.subr.mxu0 0.0
      %1811 = vmatpush1.msra.mxu0 0.0
      %1812 = vmatprep.subr.mxu0 0.0
      %1813 = vmatpush1.msra.mxu0 0.0
      %1814 = vmatprep.subr.mxu0 0.0
      %1815 = vmatpush1.msra.mxu0 0.0
      %1816 = vmatprep.subr.mxu0 0.0
      %1817 = vmatpush1.msra.mxu0 0.0
      %1818 = vmatprep.subr.mxu0 0.0
      %1819 = vmatpush1.msra.mxu0 0.0
      %1820 = vmatprep.subr.mxu0 0.0
      %1821 = vmatpush1.msra.mxu0 0.0
      %1822 = vmatprep.subr.mxu0 0.0
      %1823 = vmatpush1.msra.mxu0 0.0
      %1824 = vmatprep.subr.mxu0 0.0
      %1825 = vmatpush1.msra.mxu0 0.0
      %1826 = vmatprep.subr.mxu0 0.0
      %1827 = vmatpush1.msra.mxu0 0.0
      %1828 = vmatprep.subr.mxu0 0.0
      %1829 = vmatpush1.msra.mxu0 0.0
      %1830 = vmatprep.subr.mxu0 0.0
      %1831 = vmatpush1.msra.mxu0 0.0
      %1832 = vmatprep.subr.mxu0 0.0
      %1833 = vmatpush1.msra.mxu0 0.0
      %1834 = vmatprep.subr.mxu0 0.0
      %1835 = vmatpush1.msra.mxu0 0.0
      %1836 = vmatprep.subr.mxu0 0.0
      %1837 = vmatpush1.msra.mxu0 0.0
      %1838 = vmatprep.mubr.f32.mxu0 0.0
      %1839 = vmatmul.mubr.f32.gmra.mrb[0].mxu0 %v1763
      %v1840 = vpop.f32.mrb[0].mxu0
      %v1841 = vadd.f32 0.0, %v1840
      %v1842 = vpop.f32.mrb[0].mxu0
      %1843 = vmatprep.mubr.f32.mxu0 0.0
      %1844 = vmatmul.mubr.f32.gmra.mrb[0].mxu0 %v1766
      %v1845 = vpop.f32.mrb[0].mxu0
      %v1846 = vadd.f32 0.0, %v1845
      %v1847 = vpop.f32.mrb[0].mxu0
      %1848 = vmatprep.mubr.f32.mxu0 0.0
      %1849 = vmatmul.mubr.f32.gmra.mrb[0].mxu0 %v1769
      %v1850 = vpop.f32.mrb[0].mxu0
      %v1851 = vadd.f32 0.0, %v1850
      %v1852 = vpop.f32.mrb[0].mxu0
      %1853 = vmatprep.mubr.f32.mxu0 0.0
      %1854 = vmatmul.mubr.f32.gmra.mrb[0].mxu0 %v1772
      %v1855 = vpop.f32.mrb[0].mxu0
      %v1856 = vadd.f32 0.0, %v1855
      %v1857 = vpop.f32.mrb[0].mxu0
      %1858 = vdwg.mxu0
      %1863 = vrot.lane.b32.xlu0 %v1285, 32
      %v1864 = vpop.permute.xlu0 %1863
      %1865 = vrot.lane.b32.xlu0 %v1290, 32
      %v1866 = vpop.permute.xlu0 %1865
      %1867 = vrot.lane.b32.xlu0 %v1295, 32
      %v1868 = vpop.permute.xlu0 %1867
      %1869 = vrot.lane.b32.xlu0 %v1300, 32
      %v1870 = vpop.permute.xlu0 %1869
      %1879 = vrot.lane.b32.xlu0 %v1563, 64
      %v1880 = vpop.permute.xlu0 %1879
      %1881 = vrot.lane.b32.xlu0 %v1568, 64
      %v1882 = vpop.permute.xlu0 %1881
      %1883 = vrot.lane.b32.xlu0 %v1573, 64
      %v1884 = vpop.permute.xlu0 %1883
      %1885 = vrot.lane.b32.xlu0 %v1578, 64
      %v1886 = vpop.permute.xlu0 %1885
      %1895 = vrot.lane.b32.xlu0 %v1841, 96
      %v1896 = vpop.permute.xlu0 %1895
      %1897 = vrot.lane.b32.xlu0 %v1846, 96
      %v1898 = vpop.permute.xlu0 %1897
      %1899 = vrot.lane.b32.xlu0 %v1851, 96
      %v1900 = vpop.permute.xlu0 %1899
      %1901 = vrot.lane.b32.xlu0 %v1856, 96
      %v1902 = vpop.permute.xlu0 %1901
      %v1907 = vsel %vm762, %v1003, %v1864
      %v1908 = vsel %vm762, %v1008, %v1866
      %v1909 = vsel %vm762, %v1013, %v1868
      %v1910 = vsel %vm762, %v1018, %v1870
      %vm1911 = vcmask 523264
      %v1912 = vsel %vm1911, %v1907, %v1880
      %v1913 = vsel %vm1911, %v1908, %v1882
      %v1914 = vsel %vm1911, %v1909, %v1884
      %v1915 = vsel %vm1911, %v1910, %v1886
      %vm1916 = vcmask 785408
      %v1917 = vsel %vm1916, %v1912, %v1896
      %v1918 = vsel %vm1916, %v1913, %v1898
      %v1919 = vsel %vm1916, %v1914, %v1900
      %v1920 = vsel %vm1916, %v1915, %v1902
      %v1921 = vld [vmem:[%s5] sm:$0xff]
      %v1922 = vld [vmem:[%s5 + $0x8] sm:$0xff]
      %v1923 = vld [vmem:[%s5 + $0x10] sm:$0xff]
      %v1924 = vld [vmem:[%s5 + $0x18] sm:$0xff]
      %v1925 = vld [vmem:[%s5 + $0x20] sm:$0xff]
      %v1926 = vld [vmem:[%s5 + $0x28] sm:$0xff]
      %v1927 = vld [vmem:[%s5 + $0x30] sm:$0xff]
      %v1928 = vld [vmem:[%s5 + $0x38] sm:$0xff]
      %v1929 = vld [vmem:[%s5 + $0x40] sm:$0xff]
      %v1930 = vld [vmem:[%s5 + $0x48] sm:$0xff]
      %v1931 = vld [vmem:[%s5 + $0x50] sm:$0xff]
      %v1932 = vld [vmem:[%s5 + $0x58] sm:$0xff]
      %v1933 = vld [vmem:[%s5 + $0x60] sm:$0xff]
      %v1934 = vld [vmem:[%s5 + $0x68] sm:$0xff]
      %v1935 = vld [vmem:[%s5 + $0x70] sm:$0xff]
      %v1936 = vld [vmem:[%s5 + $0x78] sm:$0xff]
      %1937 = vmatprep.subr.mxu0 0.0
      %1938 = vmatpush1.msra.mxu0 %v1921
      %1939 = vmatprep.subr.mxu0 0.0
      %1940 = vmatpush1.msra.mxu0 %v1922
      %1941 = vmatprep.subr.mxu0 0.0
      %1942 = vmatpush1.msra.mxu0 %v1923
      %1943 = vmatprep.subr.mxu0 0.0
      %1944 = vmatpush1.msra.mxu0 %v1924
      %1945 = vmatprep.subr.mxu0 0.0
      %1946 = vmatpush1.msra.mxu0 %v1925
      %1947 = vmatprep.subr.mxu0 0.0
      %1948 = vmatpush1.msra.mxu0 %v1926
      %1949 = vmatprep.subr.mxu0 0.0
      %1950 = vmatpush1.msra.mxu0 %v1927
      %1951 = vmatprep.subr.mxu0 0.0
      %1952 = vmatpush1.msra.mxu0 %v1928
      %1953 = vmatprep.subr.mxu0 0.0
      %1954 = vmatpush1.msra.mxu0 %v1929
      %1955 = vmatprep.subr.mxu0 0.0
      %1956 = vmatpush1.msra.mxu0 %v1930
      %1957 = vmatprep.subr.mxu0 0.0
      %1958 = vmatpush1.msra.mxu0 %v1931
      %1959 = vmatprep.subr.mxu0 0.0
      %1960 = vmatpush1.msra.mxu0 %v1932
      %1961 = vmatprep.subr.mxu0 0.0
      %1962 = vmatpush1.msra.mxu0 %v1933
      %1963 = vmatprep.subr.mxu0 0.0
      %1964 = vmatpush1.msra.mxu0 %v1934
      %1965 = vmatprep.subr.mxu0 0.0
      %1966 = vmatpush1.msra.mxu0 %v1935
      %1967 = vmatprep.subr.mxu0 0.0
      %1968 = vmatpush1.msra.mxu0 %v1936
      %1969 = vmatprep.subr.mxu0 0.0
      %1970 = vmatpush1.msra.mxu0 0.0
      %1971 = vmatprep.subr.mxu0 0.0
      %1972 = vmatpush1.msra.mxu0 0.0
      %1973 = vmatprep.subr.mxu0 0.0
      %1974 = vmatpush1.msra.mxu0 0.0
      %1975 = vmatprep.subr.mxu0 0.0
      %1976 = vmatpush1.msra.mxu0 0.0
      %1977 = vmatprep.subr.mxu0 0.0
      %1978 = vmatpush1.msra.mxu0 0.0
      %1979 = vmatprep.subr.mxu0 0.0
      %1980 = vmatpush1.msra.mxu0 0.0
      %1981 = vmatprep.subr.mxu0 0.0
      %1982 = vmatpush1.msra.mxu0 0.0
      %1983 = vmatprep.subr.mxu0 0.0
      %1984 = vmatpush1.msra.mxu0 0.0
      %1985 = vmatprep.subr.mxu0 0.0
      %1986 = vmatpush1.msra.mxu0 0.0
      %1987 = vmatprep.subr.mxu0 0.0
      %1988 = vmatpush1.msra.mxu0 0.0
      %1989 = vmatprep.subr.mxu0 0.0
      %1990 = vmatpush1.msra.mxu0 0.0
      %1991 = vmatprep.subr.mxu0 0.0
      %1992 = vmatpush1.msra.mxu0 0.0
      %1993 = vmatprep.subr.mxu0 0.0
      %1994 = vmatpush1.msra.mxu0 0.0
      %1995 = vmatprep.subr.mxu0 0.0
      %1996 = vmatpush1.msra.mxu0 0.0
      %1997 = vmatprep.subr.mxu0 0.0
      %1998 = vmatpush1.msra.mxu0 0.0
      %1999 = vmatprep.subr.mxu0 0.0
      %2000 = vmatpush1.msra.mxu0 0.0
      %2001 = vmatprep.mubr.f32.mxu0 0.0
      %2002 = vmatmul.mubr.f32.gmra.mrb[0].mxu0 %v1917
      %v2003 = vpop.f32.mrb[0].mxu0
      %v2004 = vadd.f32 0.0, %v2003
      %v2005 = vpop.f32.mrb[0].mxu0
      %2006 = vmatprep.mubr.f32.mxu0 0.0
      %2007 = vmatmul.mubr.f32.gmra.mrb[0].mxu0 %v1918
      %v2008 = vpop.f32.mrb[0].mxu0
      %v2009 = vadd.f32 0.0, %v2008
      %v2010 = vpop.f32.mrb[0].mxu0
      %2011 = vmatprep.mubr.f32.mxu0 0.0
      %2012 = vmatmul.mubr.f32.gmra.mrb[0].mxu0 %v1919
      %v2013 = vpop.f32.mrb[0].mxu0
      %v2014 = vadd.f32 0.0, %v2013
      %v2015 = vpop.f32.mrb[0].mxu0
      %2016 = vmatprep.mubr.f32.mxu0 0.0
      %2017 = vmatmul.mubr.f32.gmra.mrb[0].mxu0 %v1920
      %v2018 = vpop.f32.mrb[0].mxu0
      %v2019 = vadd.f32 0.0, %v2018
      %v2020 = vpop.f32.mrb[0].mxu0
      %2021 = vdwg.mxu0
      %v2022 = vadd.f32 %v441, %v2004
      %v2023 = vadd.f32 %v442, %v2009
      %v2024 = vadd.f32 %v443, %v2014
      %v2025 = vadd.f32 %v444, %v2019
      %v2026 = vld [vmem:[%s6] sm:$0x1]
      %v2028 = vlaneseq
      %v2029 = vshrl.u32 %v2028, 7
      %v2030 = vsub.s32 0, %v2029
      %v2031 = vrot.slane %v2026, %v2030
      %v2033 = vadd.f32 %v2022, %v2031
      %v2034 = vadd.f32 %v2023, %v2031
      %v2035 = vadd.f32 %v2024, %v2031
      %v2036 = vadd.f32 %v2025, %v2031
      %v2037 = vld [vmem:[%s7] sm:$0x1]
      %v2038 = vld [vmem:[%s8] sm:$0x1]
      %2039 = vadd.xlane.f32.xlu0 %v2033
      %v2040 = vpop.xlane.xlu0 %2039
      %2041 = vadd.xlane.f32.xlu0 %v2034
      %v2042 = vpop.xlane.xlu0 %2041
      %2043 = vadd.xlane.f32.xlu0 %v2035
      %v2044 = vpop.xlane.xlu0 %2043
      %2045 = vadd.xlane.f32.xlu0 %v2036
      %v2046 = vpop.xlane.xlu0 %2045
      %v2047 = vmul.f32 %v2040, %v455
      %v2048 = vmul.f32 %v2042, %v455
      %v2049 = vmul.f32 %v2044, %v455
      %v2050 = vmul.f32 %v2046, %v455
      %v2051 = vsub.f32 %v2033, %v2047
      %v2052 = vsub.f32 %v2034, %v2048
      %v2053 = vsub.f32 %v2035, %v2049
      %v2054 = vsub.f32 %v2036, %v2050
      %v2055 = vmul.f32 %v2051, %v2051
      %v2056 = vmul.f32 %v2052, %v2052
      %v2057 = vmul.f32 %v2053, %v2053
      %v2058 = vmul.f32 %v2054, %v2054
      %2059 = vadd.xlane.f32.xlu0 %v2055
      %v2060 = vpop.xlane.xlu0 %2059
      %2061 = vadd.xlane.f32.xlu0 %v2056
      %v2062 = vpop.xlane.xlu0 %2061
      %2063 = vadd.xlane.f32.xlu0 %v2057
      %v2064 = vpop.xlane.xlu0 %2063
      %2065 = vadd.xlane.f32.xlu0 %v2058
      %v2066 = vpop.xlane.xlu0 %2065
      %v2067 = vmul.f32 %v2060, %v455
      %v2068 = vmul.f32 %v2062, %v455
      %v2069 = vmul.f32 %v2064, %v455
      %v2070 = vmul.f32 %v2066, %v455
      %v2071 = vadd.f32 %v2067, 1e-05
      %v2072 = vadd.f32 %v2068, 1e-05
      %v2073 = vadd.f32 %v2069, 1e-05
      %v2074 = vadd.f32 %v2070, 1e-05
      %v2075 = vrsqrt.pop %v2071
      %v2076 = vrsqrt.pop %v2072
      %v2077 = vrsqrt.pop %v2073
      %v2078 = vrsqrt.pop %v2074
      %v2079 = vmul.f32 %v2051, %v2075
      %v2080 = vmul.f32 %v2052, %v2076
      %v2081 = vmul.f32 %v2053, %v2077
      %v2082 = vmul.f32 %v2054, %v2078
      %v2084 = vlaneseq
      %v2085 = vshrl.u32 %v2084, 7
      %v2086 = vsub.s32 0, %v2085
      %v2087 = vrot.slane %v2037, %v2086
      %v2089 = vmul.f32 %v2079, %v2087
      %v2090 = vmul.f32 %v2080, %v2087
      %v2091 = vmul.f32 %v2081, %v2087
      %v2092 = vmul.f32 %v2082, %v2087
      %v2094 = vlaneseq
      %v2095 = vshrl.u32 %v2094, 7
      %v2096 = vsub.s32 0, %v2095
      %v2097 = vrot.slane %v2038, %v2096
      %v2099 = vadd.f32 %v2089, %v2097
      %v2100 = vadd.f32 %v2090, %v2097
      %v2101 = vadd.f32 %v2091, %v2097
      %v2102 = vadd.f32 %v2092, %v2097
      %v2103 = vld [vmem:[%s9] sm:$0xff]
      %v2104 = vld [vmem:[%s9 + $0x8] sm:$0xff]
      %v2105 = vld [vmem:[%s9 + $0x10] sm:$0xff]
      %v2106 = vld [vmem:[%s9 + $0x18] sm:$0xff]
      %v2107 = vld [vmem:[%s9 + $0x20] sm:$0xff]
      %v2108 = vld [vmem:[%s9 + $0x28] sm:$0xff]
      %v2109 = vld [vmem:[%s9 + $0x30] sm:$0xff]
      %v2110 = vld [vmem:[%s9 + $0x38] sm:$0xff]
      %v2111 = vld [vmem:[%s9 + $0x40] sm:$0xff]
      %v2112 = vld [vmem:[%s9 + $0x48] sm:$0xff]
      %v2113 = vld [vmem:[%s9 + $0x50] sm:$0xff]
      %v2114 = vld [vmem:[%s9 + $0x58] sm:$0xff]
      %v2115 = vld [vmem:[%s9 + $0x60] sm:$0xff]
      %v2116 = vld [vmem:[%s9 + $0x68] sm:$0xff]
      %v2117 = vld [vmem:[%s9 + $0x70] sm:$0xff]
      %v2118 = vld [vmem:[%s9 + $0x78] sm:$0xff]
      %v2119 = vld [vmem:[%s9 + $0x80] sm:$0xff]
      %v2120 = vld [vmem:[%s9 + $0x88] sm:$0xff]
      %v2121 = vld [vmem:[%s9 + $0x90] sm:$0xff]
      %v2122 = vld [vmem:[%s9 + $0x98] sm:$0xff]
      %v2123 = vld [vmem:[%s9 + $0xa0] sm:$0xff]
      %v2124 = vld [vmem:[%s9 + $0xa8] sm:$0xff]
      %v2125 = vld [vmem:[%s9 + $0xb0] sm:$0xff]
      %v2126 = vld [vmem:[%s9 + $0xb8] sm:$0xff]
      %v2127 = vld [vmem:[%s9 + $0xc0] sm:$0xff]
      %v2128 = vld [vmem:[%s9 + $0xc8] sm:$0xff]
      %v2129 = vld [vmem:[%s9 + $0xd0] sm:$0xff]
      %v2130 = vld [vmem:[%s9 + $0xd8] sm:$0xff]
      %v2131 = vld [vmem:[%s9 + $0xe0] sm:$0xff]
      %v2132 = vld [vmem:[%s9 + $0xe8] sm:$0xff]
      %v2133 = vld [vmem:[%s9 + $0xf0] sm:$0xff]
      %v2134 = vld [vmem:[%s9 + $0xf8] sm:$0xff]
      %v2135 = vld [vmem:[%s9 + $0x100] sm:$0xff]
      %v2136 = vld [vmem:[%s9 + $0x108] sm:$0xff]
      %v2137 = vld [vmem:[%s9 + $0x110] sm:$0xff]
      %v2138 = vld [vmem:[%s9 + $0x118] sm:$0xff]
      %v2139 = vld [vmem:[%s9 + $0x120] sm:$0xff]
      %v2140 = vld [vmem:[%s9 + $0x128] sm:$0xff]
      %v2141 = vld [vmem:[%s9 + $0x130] sm:$0xff]
      %v2142 = vld [vmem:[%s9 + $0x138] sm:$0xff]
      %v2143 = vld [vmem:[%s9 + $0x140] sm:$0xff]
      %v2144 = vld [vmem:[%s9 + $0x148] sm:$0xff]
      %v2145 = vld [vmem:[%s9 + $0x150] sm:$0xff]
      %v2146 = vld [vmem:[%s9 + $0x158] sm:$0xff]
      %v2147 = vld [vmem:[%s9 + $0x160] sm:$0xff]
      %v2148 = vld [vmem:[%s9 + $0x168] sm:$0xff]
      %v2149 = vld [vmem:[%s9 + $0x170] sm:$0xff]
      %v2150 = vld [vmem:[%s9 + $0x178] sm:$0xff]
      %v2151 = vld [vmem:[%s9 + $0x180] sm:$0xff]
      %v2152 = vld [vmem:[%s9 + $0x188] sm:$0xff]
      %v2153 = vld [vmem:[%s9 + $0x190] sm:$0xff]
      %v2154 = vld [vmem:[%s9 + $0x198] sm:$0xff]
      %v2155 = vld [vmem:[%s9 + $0x1a0] sm:$0xff]
      %v2156 = vld [vmem:[%s9 + $0x1a8] sm:$0xff]
      %v2157 = vld [vmem:[%s9 + $0x1b0] sm:$0xff]
      %v2158 = vld [vmem:[%s9 + $0x1b8] sm:$0xff]
      %v2159 = vld [vmem:[%s9 + $0x1c0] sm:$0xff]
      %v2160 = vld [vmem:[%s9 + $0x1c8] sm:$0xff]
      %v2161 = vld [vmem:[%s9 + $0x1d0] sm:$0xff]
      %v2162 = vld [vmem:[%s9 + $0x1d8] sm:$0xff]
      %v2163 = vld [vmem:[%s9 + $0x1e0] sm:$0xff]
      %v2164 = vld [vmem:[%s9 + $0x1e8] sm:$0xff]
      %v2165 = vld [vmem:[%s9 + $0x1f0] sm:$0xff]
      %v2166 = vld [vmem:[%s9 + $0x1f8] sm:$0xff]
      %v2167 = vld [vmem:[%s10] sm:$0xf]
      %v2169 = vlaneseq
      %v2170 = vshrl.u32 %v2169, 7
      %v2171 = vsub.s32 0, %v2170
      %v2172 = vrot.slane %v2167, %v2171
      %v2173 = vlaneseq
      %v2174 = vshrl.u32 %v2173, 7
      %v2175 = vsub.s32 1, %v2174
      %v2176 = vrot.slane %v2167, %v2175
      %v2177 = vlaneseq
      %v2178 = vshrl.u32 %v2177, 7
      %v2179 = vsub.s32 2, %v2178
      %v2180 = vrot.slane %v2167, %v2179
      %v2181 = vlaneseq
      %v2182 = vshrl.u32 %v2181, 7
      %v2183 = vsub.s32 3, %v2182
      %v2184 = vrot.slane %v2167, %v2183
      %2189 = vmatprep.subr.mxu0 %v2104
      %2190 = vmatpush1.msra.mxu0 %v2103
      %2191 = vmatprep.subr.mxu0 %v2108
      %2192 = vmatpush1.msra.mxu0 %v2107
      %2193 = vmatprep.subr.mxu0 %v2112
      %2194 = vmatpush1.msra.mxu0 %v2111
      %2195 = vmatprep.subr.mxu0 %v2116
      %2196 = vmatpush1.msra.mxu0 %v2115
      %2197 = vmatprep.subr.mxu0 %v2120
      %2198 = vmatpush1.msra.mxu0 %v2119
      %2199 = vmatprep.subr.mxu0 %v2124
      %2200 = vmatpush1.msra.mxu0 %v2123
      %2201 = vmatprep.subr.mxu0 %v2128
      %2202 = vmatpush1.msra.mxu0 %v2127
      %2203 = vmatprep.subr.mxu0 %v2132
      %2204 = vmatpush1.msra.mxu0 %v2131
      %2205 = vmatprep.subr.mxu0 %v2136
      %2206 = vmatpush1.msra.mxu0 %v2135
      %2207 = vmatprep.subr.mxu0 %v2140
      %2208 = vmatpush1.msra.mxu0 %v2139
      %2209 = vmatprep.subr.mxu0 %v2144
      %2210 = vmatpush1.msra.mxu0 %v2143
      %2211 = vmatprep.subr.mxu0 %v2148
      %2212 = vmatpush1.msra.mxu0 %v2147
      %2213 = vmatprep.subr.mxu0 %v2152
      %2214 = vmatpush1.msra.mxu0 %v2151
      %2215 = vmatprep.subr.mxu0 %v2156
      %2216 = vmatpush1.msra.mxu0 %v2155
      %2217 = vmatprep.subr.mxu0 %v2160
      %2218 = vmatpush1.msra.mxu0 %v2159
      %2219 = vmatprep.subr.mxu0 %v2164
      %2220 = vmatpush1.msra.mxu0 %v2163
      %2221 = vmatprep.subr.mxu0 0.0
      %2222 = vmatpush1.msra.mxu0 0.0
      %2223 = vmatprep.subr.mxu0 0.0
      %2224 = vmatpush1.msra.mxu0 0.0
      %2225 = vmatprep.subr.mxu0 0.0
      %2226 = vmatpush1.msra.mxu0 0.0
      %2227 = vmatprep.subr.mxu0 0.0
      %2228 = vmatpush1.msra.mxu0 0.0
      %2229 = vmatprep.subr.mxu0 0.0
      %2230 = vmatpush1.msra.mxu0 0.0
      %2231 = vmatprep.subr.mxu0 0.0
      %2232 = vmatpush1.msra.mxu0 0.0
      %2233 = vmatprep.subr.mxu0 0.0
      %2234 = vmatpush1.msra.mxu0 0.0
      %2235 = vmatprep.subr.mxu0 0.0
      %2236 = vmatpush1.msra.mxu0 0.0
      %2237 = vmatprep.subr.mxu0 0.0
      %2238 = vmatpush1.msra.mxu0 0.0
      %2239 = vmatprep.subr.mxu0 0.0
      %2240 = vmatpush1.msra.mxu0 0.0
      %2241 = vmatprep.subr.mxu0 0.0
      %2242 = vmatpush1.msra.mxu0 0.0
      %2243 = vmatprep.subr.mxu0 0.0
      %2244 = vmatpush1.msra.mxu0 0.0
      %2245 = vmatprep.subr.mxu0 0.0
      %2246 = vmatpush1.msra.mxu0 0.0
      %2247 = vmatprep.subr.mxu0 0.0
      %2248 = vmatpush1.msra.mxu0 0.0
      %2249 = vmatprep.subr.mxu0 0.0
      %2250 = vmatpush1.msra.mxu0 0.0
      %2251 = vmatprep.subr.mxu0 0.0
      %2252 = vmatpush1.msra.mxu0 0.0
      %2253 = vmatprep.mubr.f32.mxu0 0.0
      %2254 = vmatmul.mubr.f32.gmra.mrb[0].mxu0 %v2099
      %v2255 = vpop.f32.mrb[0].mxu0
      %v2256 = vadd.f32 %v2172, %v2255
      %v2257 = vpop.f32.mrb[0].mxu0
      %v2258 = vadd.f32 %v2176, %v2257
      %2259 = vmatprep.mubr.f32.mxu0 0.0
      %2260 = vmatmul.mubr.f32.gmra.mrb[0].mxu0 %v2100
      %v2261 = vpop.f32.mrb[0].mxu0
      %v2262 = vadd.f32 %v2172, %v2261
      %v2263 = vpop.f32.mrb[0].mxu0
      %v2264 = vadd.f32 %v2176, %v2263
      %2265 = vmatprep.mubr.f32.mxu0 0.0
      %2266 = vmatmul.mubr.f32.gmra.mrb[0].mxu0 %v2101
      %v2267 = vpop.f32.mrb[0].mxu0
      %v2268 = vadd.f32 %v2172, %v2267
      %v2269 = vpop.f32.mrb[0].mxu0
      %v2270 = vadd.f32 %v2176, %v2269
      %2271 = vmatprep.mubr.f32.mxu0 0.0
      %2272 = vmatmul.mubr.f32.gmra.mrb[0].mxu0 %v2102
      %v2273 = vpop.f32.mrb[0].mxu0
      %v2274 = vadd.f32 %v2172, %v2273
      %v2275 = vpop.f32.mrb[0].mxu0
      %v2276 = vadd.f32 %v2176, %v2275
      %2277 = vdwg.mxu0
      %2278 = vmatprep.subr.mxu0 %v2106
      %2279 = vmatpush1.msra.mxu0 %v2105
      %2280 = vmatprep.subr.mxu0 %v2110
      %2281 = vmatpush1.msra.mxu0 %v2109
      %2282 = vmatprep.subr.mxu0 %v2114
      %2283 = vmatpush1.msra.mxu0 %v2113
      %2284 = vmatprep.subr.mxu0 %v2118
      %2285 = vmatpush1.msra.mxu0 %v2117
      %2286 = vmatprep.subr.mxu0 %v2122
      %2287 = vmatpush1.msra.mxu0 %v2121
      %2288 = vmatprep.subr.mxu0 %v2126
      %2289 = vmatpush1.msra.mxu0 %v2125
      %2290 = vmatprep.subr.mxu0 %v2130
      %2291 = vmatpush1.msra.mxu0 %v2129
      %2292 = vmatprep.subr.mxu0 %v2134
      %2293 = vmatpush1.msra.mxu0 %v2133
      %2294 = vmatprep.subr.mxu0 %v2138
      %2295 = vmatpush1.msra.mxu0 %v2137
      %2296 = vmatprep.subr.mxu0 %v2142
      %2297 = vmatpush1.msra.mxu0 %v2141
      %2298 = vmatprep.subr.mxu0 %v2146
      %2299 = vmatpush1.msra.mxu0 %v2145
      %2300 = vmatprep.subr.mxu0 %v2150
      %2301 = vmatpush1.msra.mxu0 %v2149
      %2302 = vmatprep.subr.mxu0 %v2154
      %2303 = vmatpush1.msra.mxu0 %v2153
      %2304 = vmatprep.subr.mxu0 %v2158
      %2305 = vmatpush1.msra.mxu0 %v2157
      %2306 = vmatprep.subr.mxu0 %v2162
      %2307 = vmatpush1.msra.mxu0 %v2161
      %2308 = vmatprep.subr.mxu0 %v2166
      %2309 = vmatpush1.msra.mxu0 %v2165
      %2310 = vmatprep.subr.mxu0 0.0
      %2311 = vmatpush1.msra.mxu0 0.0
      %2312 = vmatprep.subr.mxu0 0.0
      %2313 = vmatpush1.msra.mxu0 0.0
      %2314 = vmatprep.subr.mxu0 0.0
      %2315 = vmatpush1.msra.mxu0 0.0
      %2316 = vmatprep.subr.mxu0 0.0
      %2317 = vmatpush1.msra.mxu0 0.0
      %2318 = vmatprep.subr.mxu0 0.0
      %2319 = vmatpush1.msra.mxu0 0.0
      %2320 = vmatprep.subr.mxu0 0.0
      %2321 = vmatpush1.msra.mxu0 0.0
      %2322 = vmatprep.subr.mxu0 0.0
      %2323 = vmatpush1.msra.mxu0 0.0
      %2324 = vmatprep.subr.mxu0 0.0
      %2325 = vmatpush1.msra.mxu0 0.0
      %2326 = vmatprep.subr.mxu0 0.0
      %2327 = vmatpush1.msra.mxu0 0.0
      %2328 = vmatprep.subr.mxu0 0.0
      %2329 = vmatpush1.msra.mxu0 0.0
      %2330 = vmatprep.subr.mxu0 0.0
      %2331 = vmatpush1.msra.mxu0 0.0
      %2332 = vmatprep.subr.mxu0 0.0
      %2333 = vmatpush1.msra.mxu0 0.0
      %2334 = vmatprep.subr.mxu0 0.0
      %2335 = vmatpush1.msra.mxu0 0.0
      %2336 = vmatprep.subr.mxu0 0.0
      %2337 = vmatpush1.msra.mxu0 0.0
      %2338 = vmatprep.subr.mxu0 0.0
      %2339 = vmatpush1.msra.mxu0 0.0
      %2340 = vmatprep.subr.mxu0 0.0
      %2341 = vmatpush1.msra.mxu0 0.0
      %2342 = vmatprep.mubr.f32.mxu0 0.0
      %2343 = vmatmul.mubr.f32.gmra.mrb[0].mxu0 %v2099
      %v2344 = vpop.f32.mrb[0].mxu0
      %v2345 = vadd.f32 %v2180, %v2344
      %v2346 = vpop.f32.mrb[0].mxu0
      %v2347 = vadd.f32 %v2184, %v2346
      %2348 = vmatprep.mubr.f32.mxu0 0.0
      %2349 = vmatmul.mubr.f32.gmra.mrb[0].mxu0 %v2100
      %v2350 = vpop.f32.mrb[0].mxu0
      %v2351 = vadd.f32 %v2180, %v2350
      %v2352 = vpop.f32.mrb[0].mxu0
      %v2353 = vadd.f32 %v2184, %v2352
      %2354 = vmatprep.mubr.f32.mxu0 0.0
      %2355 = vmatmul.mubr.f32.gmra.mrb[0].mxu0 %v2101
      %v2356 = vpop.f32.mrb[0].mxu0
      %v2357 = vadd.f32 %v2180, %v2356
      %v2358 = vpop.f32.mrb[0].mxu0
      %v2359 = vadd.f32 %v2184, %v2358
      %2360 = vmatprep.mubr.f32.mxu0 0.0
      %2361 = vmatmul.mubr.f32.gmra.mrb[0].mxu0 %v2102
      %v2362 = vpop.f32.mrb[0].mxu0
      %v2363 = vadd.f32 %v2180, %v2362
      %v2364 = vpop.f32.mrb[0].mxu0
      %v2365 = vadd.f32 %v2184, %v2364
      %2366 = vdwg.mxu0
      %v2367 = vmul.f32 %v2256, 0.5
      %v2368 = vmul.f32 %v2258, 0.5
      %v2369 = vmul.f32 %v2345, 0.5
      %v2370 = vmul.f32 %v2347, 0.5
      %v2371 = vmul.f32 %v2262, 0.5
      %v2372 = vmul.f32 %v2264, 0.5
      %v2373 = vmul.f32 %v2351, 0.5
      %v2374 = vmul.f32 %v2353, 0.5
      %v2375 = vmul.f32 %v2268, 0.5
      %v2376 = vmul.f32 %v2270, 0.5
      %v2377 = vmul.f32 %v2357, 0.5
      %v2378 = vmul.f32 %v2359, 0.5
      %v2379 = vmul.f32 %v2274, 0.5
      %v2380 = vmul.f32 %v2276, 0.5
      %v2381 = vmul.f32 %v2363, 0.5
      %v2382 = vmul.f32 %v2365, 0.5
      %v2383 = vmul.f32 %v2256, 0.044715
      %v2384 = vmul.f32 %v2258, 0.044715
      %v2385 = vmul.f32 %v2345, 0.044715
      %v2386 = vmul.f32 %v2347, 0.044715
      %v2387 = vmul.f32 %v2262, 0.044715
      %v2388 = vmul.f32 %v2264, 0.044715
      %v2389 = vmul.f32 %v2351, 0.044715
      %v2390 = vmul.f32 %v2353, 0.044715
      %v2391 = vmul.f32 %v2268, 0.044715
      %v2392 = vmul.f32 %v2270, 0.044715
      %v2393 = vmul.f32 %v2357, 0.044715
      %v2394 = vmul.f32 %v2359, 0.044715
      %v2395 = vmul.f32 %v2274, 0.044715
      %v2396 = vmul.f32 %v2276, 0.044715
      %v2397 = vmul.f32 %v2363, 0.044715
      %v2398 = vmul.f32 %v2365, 0.044715
      %v2399 = vmul.f32 %v2383, %v2256
      %v2400 = vmul.f32 %v2384, %v2258
      %v2401 = vmul.f32 %v2385, %v2345
      %v2402 = vmul.f32 %v2386, %v2347
      %v2403 = vmul.f32 %v2387, %v2262
      %v2404 = vmul.f32 %v2388, %v2264
      %v2405 = vmul.f32 %v2389, %v2351
      %v2406 = vmul.f32 %v2390, %v2353
      %v2407 = vmul.f32 %v2391, %v2268
      %v2408 = vmul.f32 %v2392, %v2270
      %v2409 = vmul.f32 %v2393, %v2357
      %v2410 = vmul.f32 %v2394, %v2359
      %v2411 = vmul.f32 %v2395, %v2274
      %v2412 = vmul.f32 %v2396, %v2276
      %v2413 = vmul.f32 %v2397, %v2363
      %v2414 = vmul.f32 %v2398, %v2365
      %v2415 = vmul.f32 %v2399, %v2256
      %v2416 = vmul.f32 %v2400, %v2258
      %v2417 = vmul.f32 %v2401, %v2345
      %v2418 = vmul.f32 %v2402, %v2347
      %v2419 = vmul.f32 %v2403, %v2262
      %v2420 = vmul.f32 %v2404, %v2264
      %v2421 = vmul.f32 %v2405, %v2351
      %v2422 = vmul.f32 %v2406, %v2353
      %v2423 = vmul.f32 %v2407, %v2268
      %v2424 = vmul.f32 %v2408, %v2270
      %v2425 = vmul.f32 %v2409, %v2357
      %v2426 = vmul.f32 %v2410, %v2359
      %v2427 = vmul.f32 %v2411, %v2274
      %v2428 = vmul.f32 %v2412, %v2276
      %v2429 = vmul.f32 %v2413, %v2363
      %v2430 = vmul.f32 %v2414, %v2365
      %v2431 = vadd.f32 %v2256, %v2415
      %v2432 = vadd.f32 %v2258, %v2416
      %v2433 = vadd.f32 %v2345, %v2417
      %v2434 = vadd.f32 %v2347, %v2418
      %v2435 = vadd.f32 %v2262, %v2419
      %v2436 = vadd.f32 %v2264, %v2420
      %v2437 = vadd.f32 %v2351, %v2421
      %v2438 = vadd.f32 %v2353, %v2422
      %v2439 = vadd.f32 %v2268, %v2423
      %v2440 = vadd.f32 %v2270, %v2424
      %v2441 = vadd.f32 %v2357, %v2425
      %v2442 = vadd.f32 %v2359, %v2426
      %v2443 = vadd.f32 %v2274, %v2427
      %v2444 = vadd.f32 %v2276, %v2428
      %v2445 = vadd.f32 %v2363, %v2429
      %v2446 = vadd.f32 %v2365, %v2430
      %v2447 = vmul.f32 %v2431, 0.7978846
      %v2448 = vmul.f32 %v2432, 0.7978846
      %v2449 = vmul.f32 %v2433, 0.7978846
      %v2450 = vmul.f32 %v2434, 0.7978846
      %v2451 = vmul.f32 %v2435, 0.7978846
      %v2452 = vmul.f32 %v2436, 0.7978846
      %v2453 = vmul.f32 %v2437, 0.7978846
      %v2454 = vmul.f32 %v2438, 0.7978846
      %v2455 = vmul.f32 %v2439, 0.7978846
      %v2456 = vmul.f32 %v2440, 0.7978846
      %v2457 = vmul.f32 %v2441, 0.7978846
      %v2458 = vmul.f32 %v2442, 0.7978846
      %v2459 = vmul.f32 %v2443, 0.7978846
      %v2460 = vmul.f32 %v2444, 0.7978846
      %v2461 = vmul.f32 %v2445, 0.7978846
      %v2462 = vmul.f32 %v2446, 0.7978846
      %v2463 = vtanh.pop %v2447
      %v2464 = vtanh.pop %v2448
      %v2465 = vtanh.pop %v2449
      %v2466 = vtanh.pop %v2450
      %v2467 = vtanh.pop %v2451
      %v2468 = vtanh.pop %v2452
      %v2469 = vtanh.pop %v2453
      %v2470 = vtanh.pop %v2454
      %v2471 = vtanh.pop %v2455
      %v2472 = vtanh.pop %v2456
      %v2473 = vtanh.pop %v2457
      %v2474 = vtanh.pop %v2458
      %v2475 = vtanh.pop %v2459
      %v2476 = vtanh.pop %v2460
      %v2477 = vtanh.pop %v2461
      %v2478 = vtanh.pop %v2462
      %v2479 = vadd.f32 %v2463, 1.0
      %v2480 = vadd.f32 %v2464, 1.0
      %v2481 = vadd.f32 %v2465, 1.0
      %v2482 = vadd.f32 %v2466, 1.0
      %v2483 = vadd.f32 %v2467, 1.0
      %v2484 = vadd.f32 %v2468, 1.0
      %v2485 = vadd.f32 %v2469, 1.0
      %v2486 = vadd.f32 %v2470, 1.0
      %v2487 = vadd.f32 %v2471, 1.0
      %v2488 = vadd.f32 %v2472, 1.0
      %v2489 = vadd.f32 %v2473, 1.0
      %v2490 = vadd.f32 %v2474, 1.0
      %v2491 = vadd.f32 %v2475, 1.0
      %v2492 = vadd.f32 %v2476, 1.0
      %v2493 = vadd.f32 %v2477, 1.0
      %v2494 = vadd.f32 %v2478, 1.0
      %v2495 = vmul.f32 %v2367, %v2479
      %v2496 = vmul.f32 %v2368, %v2480
      %v2497 = vmul.f32 %v2369, %v2481
      %v2498 = vmul.f32 %v2370, %v2482
      %v2499 = vmul.f32 %v2371, %v2483
      %v2500 = vmul.f32 %v2372, %v2484
      %v2501 = vmul.f32 %v2373, %v2485
      %v2502 = vmul.f32 %v2374, %v2486
      %v2503 = vmul.f32 %v2375, %v2487
      %v2504 = vmul.f32 %v2376, %v2488
      %v2505 = vmul.f32 %v2377, %v2489
      %v2506 = vmul.f32 %v2378, %v2490
      %v2507 = vmul.f32 %v2379, %v2491
      %v2508 = vmul.f32 %v2380, %v2492
      %v2509 = vmul.f32 %v2381, %v2493
      %v2510 = vmul.f32 %v2382, %v2494
      %v2511 = vld [vmem:[%s11] sm:$0xff]
      %v2512 = vld [vmem:[%s11 + $0x8] sm:$0xff]
      %v2513 = vld [vmem:[%s11 + $0x10] sm:$0xff]
      %v2514 = vld [vmem:[%s11 + $0x18] sm:$0xff]
      %v2515 = vld [vmem:[%s11 + $0x20] sm:$0xff]
      %v2516 = vld [vmem:[%s11 + $0x28] sm:$0xff]
      %v2517 = vld [vmem:[%s11 + $0x30] sm:$0xff]
      %v2518 = vld [vmem:[%s11 + $0x38] sm:$0xff]
      %v2519 = vld [vmem:[%s11 + $0x40] sm:$0xff]
      %v2520 = vld [vmem:[%s11 + $0x48] sm:$0xff]
      %v2521 = vld [vmem:[%s11 + $0x50] sm:$0xff]
      %v2522 = vld [vmem:[%s11 + $0x58] sm:$0xff]
      %v2523 = vld [vmem:[%s11 + $0x60] sm:$0xff]
      %v2524 = vld [vmem:[%s11 + $0x68] sm:$0xff]
      %v2525 = vld [vmem:[%s11 + $0x70] sm:$0xff]
      %v2526 = vld [vmem:[%s11 + $0x78] sm:$0xff]
      %v2527 = vld [vmem:[%s11 + $0x80] sm:$0xff]
      %v2528 = vld [vmem:[%s11 + $0x88] sm:$0xff]
      %v2529 = vld [vmem:[%s11 + $0x90] sm:$0xff]
      %v2530 = vld [vmem:[%s11 + $0x98] sm:$0xff]
      %v2531 = vld [vmem:[%s11 + $0xa0] sm:$0xff]
      %v2532 = vld [vmem:[%s11 + $0xa8] sm:$0xff]
      %v2533 = vld [vmem:[%s11 + $0xb0] sm:$0xff]
      %v2534 = vld [vmem:[%s11 + $0xb8] sm:$0xff]
      %v2535 = vld [vmem:[%s11 + $0xc0] sm:$0xff]
      %v2536 = vld [vmem:[%s11 + $0xc8] sm:$0xff]
      %v2537 = vld [vmem:[%s11 + $0xd0] sm:$0xff]
      %v2538 = vld [vmem:[%s11 + $0xd8] sm:$0xff]
      %v2539 = vld [vmem:[%s11 + $0xe0] sm:$0xff]
      %v2540 = vld [vmem:[%s11 + $0xe8] sm:$0xff]
      %v2541 = vld [vmem:[%s11 + $0xf0] sm:$0xff]
      %v2542 = vld [vmem:[%s11 + $0xf8] sm:$0xff]
      %v2543 = vld [vmem:[%s11 + $0x100] sm:$0xff]
      %v2544 = vld [vmem:[%s11 + $0x108] sm:$0xff]
      %v2545 = vld [vmem:[%s11 + $0x110] sm:$0xff]
      %v2546 = vld [vmem:[%s11 + $0x118] sm:$0xff]
      %v2547 = vld [vmem:[%s11 + $0x120] sm:$0xff]
      %v2548 = vld [vmem:[%s11 + $0x128] sm:$0xff]
      %v2549 = vld [vmem:[%s11 + $0x130] sm:$0xff]
      %v2550 = vld [vmem:[%s11 + $0x138] sm:$0xff]
      %v2551 = vld [vmem:[%s11 + $0x140] sm:$0xff]
      %v2552 = vld [vmem:[%s11 + $0x148] sm:$0xff]
      %v2553 = vld [vmem:[%s11 + $0x150] sm:$0xff]
      %v2554 = vld [vmem:[%s11 + $0x158] sm:$0xff]
      %v2555 = vld [vmem:[%s11 + $0x160] sm:$0xff]
      %v2556 = vld [vmem:[%s11 + $0x168] sm:$0xff]
      %v2557 = vld [vmem:[%s11 + $0x170] sm:$0xff]
      %v2558 = vld [vmem:[%s11 + $0x178] sm:$0xff]
      %v2559 = vld [vmem:[%s11 + $0x180] sm:$0xff]
      %v2560 = vld [vmem:[%s11 + $0x188] sm:$0xff]
      %v2561 = vld [vmem:[%s11 + $0x190] sm:$0xff]
      %v2562 = vld [vmem:[%s11 + $0x198] sm:$0xff]
      %v2563 = vld [vmem:[%s11 + $0x1a0] sm:$0xff]
      %v2564 = vld [vmem:[%s11 + $0x1a8] sm:$0xff]
      %v2565 = vld [vmem:[%s11 + $0x1b0] sm:$0xff]
      %v2566 = vld [vmem:[%s11 + $0x1b8] sm:$0xff]
      %v2567 = vld [vmem:[%s11 + $0x1c0] sm:$0xff]
      %v2568 = vld [vmem:[%s11 + $0x1c8] sm:$0xff]
      %v2569 = vld [vmem:[%s11 + $0x1d0] sm:$0xff]
      %v2570 = vld [vmem:[%s11 + $0x1d8] sm:$0xff]
      %v2571 = vld [vmem:[%s11 + $0x1e0] sm:$0xff]
      %v2572 = vld [vmem:[%s11 + $0x1e8] sm:$0xff]
      %v2573 = vld [vmem:[%s11 + $0x1f0] sm:$0xff]
      %v2574 = vld [vmem:[%s11 + $0x1f8] sm:$0xff]
      %2575 = vmatprep.subr.mxu0 0.0
      %2576 = vmatpush1.msra.mxu0 %v2511
      %2577 = vmatprep.subr.mxu0 0.0
      %2578 = vmatpush1.msra.mxu0 %v2512
      %2579 = vmatprep.subr.mxu0 0.0
      %2580 = vmatpush1.msra.mxu0 %v2513
      %2581 = vmatprep.subr.mxu0 0.0
      %2582 = vmatpush1.msra.mxu0 %v2514
      %2583 = vmatprep.subr.mxu0 0.0
      %2584 = vmatpush1.msra.mxu0 %v2515
      %2585 = vmatprep.subr.mxu0 0.0
      %2586 = vmatpush1.msra.mxu0 %v2516
      %2587 = vmatprep.subr.mxu0 0.0
      %2588 = vmatpush1.msra.mxu0 %v2517
      %2589 = vmatprep.subr.mxu0 0.0
      %2590 = vmatpush1.msra.mxu0 %v2518
      %2591 = vmatprep.subr.mxu0 0.0
      %2592 = vmatpush1.msra.mxu0 %v2519
      %2593 = vmatprep.subr.mxu0 0.0
      %2594 = vmatpush1.msra.mxu0 %v2520
      %2595 = vmatprep.subr.mxu0 0.0
      %2596 = vmatpush1.msra.mxu0 %v2521
      %2597 = vmatprep.subr.mxu0 0.0
      %2598 = vmatpush1.msra.mxu0 %v2522
      %2599 = vmatprep.subr.mxu0 0.0
      %2600 = vmatpush1.msra.mxu0 %v2523
      %2601 = vmatprep.subr.mxu0 0.0
      %2602 = vmatpush1.msra.mxu0 %v2524
      %2603 = vmatprep.subr.mxu0 0.0
      %2604 = vmatpush1.msra.mxu0 %v2525
      %2605 = vmatprep.subr.mxu0 0.0
      %2606 = vmatpush1.msra.mxu0 %v2526
      %2607 = vmatprep.subr.mxu0 0.0
      %2608 = vmatpush1.msra.mxu0 %v2527
      %2609 = vmatprep.subr.mxu0 0.0
      %2610 = vmatpush1.msra.mxu0 %v2528
      %2611 = vmatprep.subr.mxu0 0.0
      %2612 = vmatpush1.msra.mxu0 %v2529
      %2613 = vmatprep.subr.mxu0 0.0
      %2614 = vmatpush1.msra.mxu0 %v2530
      %2615 = vmatprep.subr.mxu0 0.0
      %2616 = vmatpush1.msra.mxu0 %v2531
      %2617 = vmatprep.subr.mxu0 0.0
      %2618 = vmatpush1.msra.mxu0 %v2532
      %2619 = vmatprep.subr.mxu0 0.0
      %2620 = vmatpush1.msra.mxu0 %v2533
      %2621 = vmatprep.subr.mxu0 0.0
      %2622 = vmatpush1.msra.mxu0 %v2534
      %2623 = vmatprep.subr.mxu0 0.0
      %2624 = vmatpush1.msra.mxu0 %v2535
      %2625 = vmatprep.subr.mxu0 0.0
      %2626 = vmatpush1.msra.mxu0 %v2536
      %2627 = vmatprep.subr.mxu0 0.0
      %2628 = vmatpush1.msra.mxu0 %v2537
      %2629 = vmatprep.subr.mxu0 0.0
      %2630 = vmatpush1.msra.mxu0 %v2538
      %2631 = vmatprep.subr.mxu0 0.0
      %2632 = vmatpush1.msra.mxu0 %v2539
      %2633 = vmatprep.subr.mxu0 0.0
      %2634 = vmatpush1.msra.mxu0 %v2540
      %2635 = vmatprep.subr.mxu0 0.0
      %2636 = vmatpush1.msra.mxu0 %v2541
      %2637 = vmatprep.subr.mxu0 0.0
      %2638 = vmatpush1.msra.mxu0 %v2542
      %2639 = vmatprep.mubr.f32.mxu0 %v2496
      %2640 = vmatmul.mubr.f32.gmra.mrb[0].mxu0 %v2495
      %v2641 = vpop.f32.mrb[0].mxu0
      %v2642 = vadd.f32 0.0, %v2641
      %v2643 = vpop.f32.mrb[0].mxu0
      %2644 = vmatprep.mubr.f32.mxu0 %v2500
      %2645 = vmatmul.mubr.f32.gmra.mrb[0].mxu0 %v2499
      %v2646 = vpop.f32.mrb[0].mxu0
      %v2647 = vadd.f32 0.0, %v2646
      %v2648 = vpop.f32.mrb[0].mxu0
      %2649 = vmatprep.mubr.f32.mxu0 %v2504
      %2650 = vmatmul.mubr.f32.gmra.mrb[0].mxu0 %v2503
      %v2651 = vpop.f32.mrb[0].mxu0
      %v2652 = vadd.f32 0.0, %v2651
      %v2653 = vpop.f32.mrb[0].mxu0
      %2654 = vmatprep.mubr.f32.mxu0 %v2508
      %2655 = vmatmul.mubr.f32.gmra.mrb[0].mxu0 %v2507
      %v2656 = vpop.f32.mrb[0].mxu0
      %v2657 = vadd.f32 0.0, %v2656
      %v2658 = vpop.f32.mrb[0].mxu0
      %2659 = vdwg.mxu0
      %2660 = vmatprep.subr.mxu0 0.0
      %2661 = vmatpush1.msra.mxu0 %v2543
      %2662 = vmatprep.subr.mxu0 0.0
      %2663 = vmatpush1.msra.mxu0 %v2544
      %2664 = vmatprep.subr.mxu0 0.0
      %2665 = vmatpush1.msra.mxu0 %v2545
      %2666 = vmatprep.subr.mxu0 0.0
      %2667 = vmatpush1.msra.mxu0 %v2546
      %2668 = vmatprep.subr.mxu0 0.0
      %2669 = vmatpush1.msra.mxu0 %v2547
      %2670 = vmatprep.subr.mxu0 0.0
      %2671 = vmatpush1.msra.mxu0 %v2548
      %2672 = vmatprep.subr.mxu0 0.0
      %2673 = vmatpush1.msra.mxu0 %v2549
      %2674 = vmatprep.subr.mxu0 0.0
      %2675 = vmatpush1.msra.mxu0 %v2550
      %2676 = vmatprep.subr.mxu0 0.0
      %2677 = vmatpush1.msra.mxu0 %v2551
      %2678 = vmatprep.subr.mxu0 0.0
      %2679 = vmatpush1.msra.mxu0 %v2552
      %2680 = vmatprep.subr.mxu0 0.0
      %2681 = vmatpush1.msra.mxu0 %v2553
      %2682 = vmatprep.subr.mxu0 0.0
      %2683 = vmatpush1.msra.mxu0 %v2554
      %2684 = vmatprep.subr.mxu0 0.0
      %2685 = vmatpush1.msra.mxu0 %v2555
      %2686 = vmatprep.subr.mxu0 0.0
      %2687 = vmatpush1.msra.mxu0 %v2556
      %2688 = vmatprep.subr.mxu0 0.0
      %2689 = vmatpush1.msra.mxu0 %v2557
      %2690 = vmatprep.subr.mxu0 0.0
      %2691 = vmatpush1.msra.mxu0 %v2558
      %2692 = vmatprep.subr.mxu0 0.0
      %2693 = vmatpush1.msra.mxu0 %v2559
      %2694 = vmatprep.subr.mxu0 0.0
      %2695 = vmatpush1.msra.mxu0 %v2560
      %2696 = vmatprep.subr.mxu0 0.0
      %2697 = vmatpush1.msra.mxu0 %v2561
      %2698 = vmatprep.subr.mxu0 0.0
      %2699 = vmatpush1.msra.mxu0 %v2562
      %2700 = vmatprep.subr.mxu0 0.0
      %2701 = vmatpush1.msra.mxu0 %v2563
      %2702 = vmatprep.subr.mxu0 0.0
      %2703 = vmatpush1.msra.mxu0 %v2564
      %2704 = vmatprep.subr.mxu0 0.0
      %2705 = vmatpush1.msra.mxu0 %v2565
      %2706 = vmatprep.subr.mxu0 0.0
      %2707 = vmatpush1.msra.mxu0 %v2566
      %2708 = vmatprep.subr.mxu0 0.0
      %2709 = vmatpush1.msra.mxu0 %v2567
      %2710 = vmatprep.subr.mxu0 0.0
      %2711 = vmatpush1.msra.mxu0 %v2568
      %2712 = vmatprep.subr.mxu0 0.0
      %2713 = vmatpush1.msra.mxu0 %v2569
      %2714 = vmatprep.subr.mxu0 0.0
      %2715 = vmatpush1.msra.mxu0 %v2570
      %2716 = vmatprep.subr.mxu0 0.0
      %2717 = vmatpush1.msra.mxu0 %v2571
      %2718 = vmatprep.subr.mxu0 0.0
      %2719 = vmatpush1.msra.mxu0 %v2572
      %2720 = vmatprep.subr.mxu0 0.0
      %2721 = vmatpush1.msra.mxu0 %v2573
      %2722 = vmatprep.subr.mxu0 0.0
      %2723 = vmatpush1.msra.mxu0 %v2574
      %2724 = vmatprep.mubr.f32.mxu0 %v2498
      %2725 = vmatmul.mubr.f32.gmra.mrb[0].mxu0 %v2497
      %v2726 = vpop.f32.mrb[0].mxu0
      %v2727 = vadd.f32 %v2642, %v2726
      %v2728 = vpop.f32.mrb[0].mxu0
      %2729 = vmatprep.mubr.f32.mxu0 %v2502
      %2730 = vmatmul.mubr.f32.gmra.mrb[0].mxu0 %v2501
      %v2731 = vpop.f32.mrb[0].mxu0
      %v2732 = vadd.f32 %v2647, %v2731
      %v2733 = vpop.f32.mrb[0].mxu0
      %2734 = vmatprep.mubr.f32.mxu0 %v2506
      %2735 = vmatmul.mubr.f32.gmra.mrb[0].mxu0 %v2505
      %v2736 = vpop.f32.mrb[0].mxu0
      %v2737 = vadd.f32 %v2652, %v2736
      %v2738 = vpop.f32.mrb[0].mxu0
      %2739 = vmatprep.mubr.f32.mxu0 %v2510
      %2740 = vmatmul.mubr.f32.gmra.mrb[0].mxu0 %v2509
      %v2741 = vpop.f32.mrb[0].mxu0
      %v2742 = vadd.f32 %v2657, %v2741
      %v2743 = vpop.f32.mrb[0].mxu0
      %2744 = vdwg.mxu0
      %v2745 = vadd.f32 %v2033, %v2727
      %v2746 = vadd.f32 %v2034, %v2732
      %v2747 = vadd.f32 %v2035, %v2737
      %v2748 = vadd.f32 %v2036, %v2742
      %v2749 = vld [vmem:[%s12] sm:$0x1]
      %v2751 = vlaneseq
      %v2752 = vshrl.u32 %v2751, 7
      %v2753 = vsub.s32 0, %v2752
      %v2754 = vrot.slane %v2749, %v2753
      %v2756 = vadd.f32 %v2745, %v2754
      %v2757 = vadd.f32 %v2746, %v2754
      %v2758 = vadd.f32 %v2747, %v2754
      %v2759 = vadd.f32 %v2748, %v2754
      %2760 = vst [vmem:[%s440] sm:$0xff] %v2756
      %2761 = vst [vmem:[%s440 + $0x8] sm:$0xff] %v2757
      %2762 = vst [vmem:[%s440 + $0x10] sm:$0xff] %v2758
      %2763 = vst [vmem:[%s440 + $0x18] sm:$0xff] %v2759
      %p2764 = scmp.lt.s32.totalorder %s24, 1
      %s2765 = scalar_select %p2764, %s24, 1
      %s2766 = smul.addr %s2765, 4
      %s2767 = smul.addr %s2766, 8
      %s2768 = scalar_lea.vmem %s13, %s2767
      // Predicated region
      $region73: #{_lambda_.5} parent=71 // pred_check
        %p2769 = pneg %p320
      $region74: #{_lambda_.5} parent=71 // pred_check_branch
        %2771 = sbr.rel (%p2769) target = $region76
      $region75: #{_lambda_.5} parent=71 // pred_region
        _
      $region76: #{_lambda_.5} parent=71 // pred_fallthru
        _
    $region72: #{_lambda_.5} parent=5 // pred_fallthru
      _
    %p2772 = scmp.le.s32.totalorder 2, %s19
    // Predicated region
    $region77: #{_lambda_.5} parent=5 // pred_check
      %p2773 = pneg %p2772
    $region78: #{_lambda_.5} parent=5 // pred_check_branch
      %2775 = sbr.rel (%p2773) target = $region80
    $region79: #{_lambda_.5} parent=5 // pred_region
      %s2776 = ssub.s32 %s19, 2
      // Predicated region
      $region81: #{_lambda_.5} parent=79 // pred_check
        %p2777 = pneg %p326
      $region82: #{_lambda_.5} parent=79 // pred_check_branch
        %2779 = sbr.rel (%p2777) target = $region84
      $region83: #{_lambda_.5} parent=79 // pred_region
        %p2780 = scmp.lt.s32.totalorder %s25, 1
        %s2781 = scalar_select %p2780, %s25, 1
        %s2782 = smul.addr %s2781, 4
        %s2783 = smul.addr %s2782, 8
        %s2784 = scalar_lea.vmem %s13, %s2783
      $region84: #{_lambda_.5} parent=79 // pred_fallthru
        _
    $region80: #{_lambda_.5} parent=5 // pred_fallthru
      _
  $region6: #{_lambda_.5} parent=0 // loop_footer
    %s23 = sadd.s32 1, %s19
  $region7: #{_lambda_.5} parent=0 // loop_footer_branch
    %18 = sbr.rel target = $region3
  $region8: #{_lambda_.5} parent=0 // loop_exit
    _

</llo_original>
